<compile_context>
chip_gen: v5e
topology: v5e:2x2
jax: 0.10.0
libtpu: 0.0.40
codegen_flags: <defaults>
</compile_context>

<pallas_src>
import functools
import math

import numpy as np
import jax
import jax.numpy as jnp
from jax.experimental import pallas as pl
from jax.experimental.pallas import tpu as pltpu

# ----------------------------- config (small, consistent with module) ------------------
B = 2           # batch
L_DEC = 8       # decoder sequence length
L_ENC = 8       # encoder sequence length
D_MODEL = 32    # config.embedding_size
N_HEAD = 2      # config.n_head
D_K = 16        # config.d_k
D_V = 16        # config.d_v
D_HIDDEN = 64   # config.d_hidden
N_LAYERS = 2    # config.n_layers
VOC_SIZE = 50
MAX_LENGTH = 500
LN_EPS = 1e-5   # PyTorch nn.LayerNorm default

SLAB_COLS = 128  # lane-aligned packed-weight slab width


# ----------------------------- Pallas kernel: whole decoder stack ----------------------
def fused_decoder_kernel(act_ref, bias_ref, w_ref, o_ref, *,
                         n_layers, n_head, d_k, d_v, d_model, d_hidden,
                         b_sz, l_dec, l_enc):
    hdk = n_head * d_k
    hdv = n_head * d_v
    c_k, c_v, c_o = hdk, 2 * hdk, 2 * hdk + hdv       # column offsets inside slab
    r_w1 = 2 * d_model                                 # FFN W1 row offset
    r_w2 = 3 * d_model                                 # FFN W2 row offset
    r_vec = 3 * d_model + d_hidden                     # first vector row
    n_dec = b_sz * l_dec
    n_enc = b_sz * l_enc

    def layer_norm(v, g, b):
        mu = jnp.mean(v, axis=-1, keepdims=True)
        var = jnp.mean((v - mu) ** 2, axis=-1, keepdims=True)
        return (v - mu) * jax.lax.rsqrt(var + LN_EPS) * g + b

    def softmax(s):
        m = jnp.max(s, axis=-1, keepdims=True)
        e = jnp.exp(s - m)
        return e * pl.reciprocal(jnp.sum(e, axis=-1, keepdims=True), approx=True)

    def mha(l, a, xq, xkv, n_q, n_k, bias):
        # a = 0 -> masked self-attention, a = 1 -> encoder-decoder attention.
        r0 = a * d_model            # weight-matrix row block for this attention
        rb = r_vec + a              # bias row for this attention
        ctx_heads = []
        for h in range(n_head):
            cq, ck, cv = h * d_k, c_k + h * d_k, c_v + h * d_v
            # per-head q/k/v from static ref slices of the slab (no value lane slicing).
            q = (jnp.dot(xq, w_ref[l, r0:r0 + d_model, cq:cq + d_k],
                         preferred_element_type=jnp.float32)
                 + w_ref[l, rb:rb + 1, cq:cq + d_k])
            k = (jnp.dot(xkv, w_ref[l, r0:r0 + d_model, ck:ck + d_k],
                         preferred_element_type=jnp.float32)
                 + w_ref[l, rb:rb + 1, ck:ck + d_k])
            v = (jnp.dot(xkv, w_ref[l, r0:r0 + d_model, cv:cv + d_v],
                         preferred_element_type=jnp.float32)
                 + w_ref[l, rb:rb + 1, cv:cv + d_v])
            s = jnp.einsum('bqd,bkd->bqk',
                           q.reshape(b_sz, n_q, d_k), k.reshape(b_sz, n_k, d_k),
                           preferred_element_type=jnp.float32) + bias
            p = softmax(s)
            ctx = jnp.einsum('bqk,bkv->bqv', p, v.reshape(b_sz, n_k, d_v),
                             preferred_element_type=jnp.float32)   # (B, n_q, d_v)
            ctx_heads.append(ctx.reshape(b_sz * n_q, d_v))
        # single output projection against the original (hdv, d_model) Wo.
        ctx_all = jnp.concatenate(ctx_heads, axis=-1)               # (B*n_q, hdv)
        return (jnp.dot(ctx_all, w_ref[l, r0:r0 + hdv, c_o:c_o + d_model],
                        preferred_element_type=jnp.float32)
                + w_ref[l, rb:rb + 1, c_o:c_o + d_model])

    # activations resident across all layers
    x = act_ref[0:n_dec, :]                        # (B*L, D)
    enc = act_ref[n_dec:n_dec + n_enc, :]          # (B*S, D)

    # mask biases, hoisted out of the layer loop (additive -1e9 / 0.0)
    lk = bias_ref.shape[-1]
    slf_full = bias_ref[0]                          # (B, L, LK)
    ed_full = bias_ref[1]
    slf_bias = slf_full if l_dec == lk else slf_full[:, :, :l_dec]
    ed_bias = ed_full if l_enc == lk else ed_full[:, :, :l_enc]

    for l in range(n_layers):
        r_ffb, r_ln12, r_ln3 = r_vec + 2, r_vec + 3, r_vec + 4
        # masked self-attention sub-layer (post-norm residual)
        y = mha(l, 0, x, x, l_dec, l_dec, slf_bias)
        x = layer_norm(y + x,
                       w_ref[l, r_ln12:r_ln12 + 1, 0:d_model],
                       w_ref[l, r_ln12:r_ln12 + 1, d_model:2 * d_model])
        # encoder-decoder attention sub-layer
        z = mha(l, 1, x, enc, l_dec, l_enc, ed_bias)
        x = layer_norm(z + x,
                       w_ref[l, r_ln12:r_ln12 + 1, 2 * d_model:3 * d_model],
                       w_ref[l, r_ln12:r_ln12 + 1, 3 * d_model:4 * d_model])
        # position-wise feed-forward sub-layer
        h1 = jnp.maximum(
            jnp.dot(x, w_ref[l, r_w1:r_w1 + d_model, 0:d_hidden],
                    preferred_element_type=jnp.float32)
            + w_ref[l, r_ffb:r_ffb + 1, 0:d_hidden], 0.0)
        f = (jnp.dot(h1, w_ref[l, r_w2:r_w2 + d_hidden, 0:d_model],
                     preferred_element_type=jnp.float32)
             + w_ref[l, r_ffb:r_ffb + 1, d_hidden:d_hidden + d_model])
        x = layer_norm(f + x,
                       w_ref[l, r_ln3:r_ln3 + 1, 0:d_model],
                       w_ref[l, r_ln3:r_ln3 + 1, d_model:2 * d_model])

    o_ref[...] = x.astype(o_ref.dtype)


# ----------------------------- jitted wrapper (glue fused with the kernel) -------------
def _build_bias_slab(dec_input, enc_input):
    """Masks as additive biases stacked into one slab: (2, B, L, max(L, S))."""
    b_sz, l_dec = dec_input.shape
    l_enc = enc_input.shape[1]
    lk = max(l_dec, l_enc)
    neg = jnp.float32(-1e9)
    pad = (dec_input == 0)                                           # (B, L)
    slf = jnp.logical_or(
        jnp.broadcast_to(pad[:, None, :], (b_sz, l_dec, l_dec)),
        jnp.triu(jnp.ones((l_dec, l_dec), bool), k=1)[None, :, :])
    ed = jnp.broadcast_to((enc_input == 0)[:, None, :], (b_sz, l_dec, l_enc))
    slf_bias = jnp.where(slf, neg, jnp.float32(0.0)).astype(jnp.float32)
    ed_bias = jnp.where(ed, neg, jnp.float32(0.0)).astype(jnp.float32)

    def padk(bias):
        w = lk - bias.shape[-1]
        return bias if w == 0 else jnp.pad(bias, ((0, 0), (0, 0), (0, w)))

    return jnp.stack([padk(slf_bias), padk(ed_bias)], axis=0)


@jax.jit
def transformer_decoder_forward(dec_input, enc_output, enc_input,
                                embedding_table, pos_table, w_slab):
    b_sz, l_dec = dec_input.shape
    l_enc = enc_input.shape[1]
    d_model = embedding_table.shape[1]
    n_layers = w_slab.shape[0]

    bias_slab = _build_bias_slab(dec_input, enc_input)               # (2, B, L, LK)
    # char_embedding + positional encoding (fused with the kernel under this jit)
    x = jnp.take(embedding_table, dec_input, axis=0) + pos_table[:l_dec][None, :, :]
    act_slab = jnp.concatenate(
        [x.reshape(b_sz * l_dec, d_model),
         enc_output.reshape(b_sz * l_enc, d_model)], axis=0).astype(jnp.float32)

    kernel = functools.partial(
        fused_decoder_kernel,
        n_layers=n_layers, n_head=N_HEAD, d_k=D_K, d_v=D_V,
        d_model=d_model, d_hidden=D_HIDDEN,
        b_sz=b_sz, l_dec=l_dec, l_enc=l_enc)

    out2d = pl.pallas_call(
        kernel,
        out_shape=jax.ShapeDtypeStruct((b_sz * l_dec, d_model), jnp.float32),
        grid=(1,),
        in_specs=[
            pl.BlockSpec(act_slab.shape, lambda i: (0, 0)),
            pl.BlockSpec(bias_slab.shape, lambda i: (0, 0, 0, 0)),
            pl.BlockSpec(w_slab.shape, lambda i: (0, 0, 0)),
        ],
        out_specs=pl.BlockSpec((b_sz * l_dec, d_model), lambda i: (0, 0)),
        compiler_params=pltpu.CompilerParams(dimension_semantics=("arbitrary",)),
    )(act_slab, bias_slab, w_slab)
    return out2d.reshape(b_sz, l_dec, d_model)


# ----------------------------- plain-JAX glue / parameter packing ----------------------
def sinusoid_table(n_position, d_hid):
    pos = np.arange(n_position, dtype=np.float64)[:, None]
    i = np.arange(d_hid, dtype=np.float64)[None, :]
    angle = pos / np.power(10000.0, 2.0 * (i // 2) / d_hid)
    table = np.zeros((n_position, d_hid), dtype=np.float64)
    table[:, 0::2] = np.sin(angle[:, 0::2])
    table[:, 1::2] = np.cos(angle[:, 1::2])
    return jnp.asarray(table, jnp.float32)


def init_layer_params(key, d_model, n_head, d_k, d_v, d_hidden):
    ks = jax.random.split(key, 10)

    def lin(k, fi, fo):
        return (jax.random.normal(k, (fi, fo), jnp.float32) * 0.02).astype(jnp.float32)

    zeros = lambda n: jnp.zeros((1, n), jnp.float32)
    ones = lambda n: jnp.ones((1, n), jnp.float32)

    wq, wk, wv = (lin(ks[0], d_model, n_head * d_k), lin(ks[1], d_model, n_head * d_k),
                  lin(ks[2], d_model, n_head * d_v))
    wo = lin(ks[3], n_head * d_v, d_model)
    wq2, wk2, wv2 = (lin(ks[4], d_model, n_head * d_k), lin(ks[5], d_model, n_head * d_k),
                     lin(ks[6], d_model, n_head * d_v))
    wo2 = lin(ks[7], n_head * d_v, d_model)
    fw1, fw2 = lin(ks[8], d_model, d_hidden), lin(ks[9], d_hidden, d_model)

    return [
        wq, zeros(n_head * d_k), wk, zeros(n_head * d_k), wv, zeros(n_head * d_v),
        wo, zeros(d_model), ones(d_model), zeros(d_model),
        wq2, zeros(n_head * d_k), wk2, zeros(n_head * d_k), wv2, zeros(n_head * d_v),
        wo2, zeros(d_model), ones(d_model), zeros(d_model),
        fw1, zeros(d_hidden), fw2, zeros(d_model), ones(d_model), zeros(d_model),
    ]


def pack_params(layer_params, *, n_head, d_k, d_v, d_model, d_hidden):
    """Pack every per-layer weight/bias/LayerNorm vector into ONE lane-aligned slab.

    Per-layer layout (rows, 128 cols): rows [0:D) self-attn [Wq*s|Wk|Wv|Wo],
    rows [D:2D) cross-attn, rows [2D:3D) FFN W1, rows [3D:3D+H) FFN W2, then 5
    vector rows: self biases, cross biases, ffn biases, ln1|ln2, ln3.
    1/sqrt(d_k) is folded into Wq / bq.
    """
    hdk, hdv = n_head * d_k, n_head * d_v
    c_k, c_v, c_o = hdk, 2 * hdk, 2 * hdk + hdv
    r_vec = 3 * d_model + d_hidden
    rows = ((r_vec + 5 + 7) // 8) * 8
    assert hdv <= d_model                      # Wo fits in the attention row block
    assert c_o + d_model <= SLAB_COLS
    assert 4 * d_model <= SLAB_COLS and d_hidden + d_model <= SLAB_COLS
    scale = jnp.float32(1.0 / math.sqrt(d_k))

    def put(s, r, c, m):
        m = jnp.asarray(m, jnp.float32)
        return s.at[r:r + m.shape[0], c:c + m.shape[1]].set(m)

    slabs = []
    for lp in layer_params:
        (wq, bq, wk, bk, wv, bv, wo, bo, g1, be1,
         wq2, bq2, wk2, bk2, wv2, bv2, wo2, bo2, g2, be2,
         fw1, fb1, fw2, fb2, g3, be3) = lp
        s = jnp.zeros((rows, SLAB_COLS), jnp.float32)
        # self-attention matrices
        s = put(s, 0, 0, wq * scale); s = put(s, 0, c_k, wk)
        s = put(s, 0, c_v, wv);       s = put(s, 0, c_o, wo)
        # cross-attention matrices
        s = put(s, d_model, 0, wq2 * scale); s = put(s, d_model, c_k, wk2)
        s = put(s, d_model, c_v, wv2);       s = put(s, d_model, c_o, wo2)
        # FFN matrices
        s = put(s, 2 * d_model, 0, fw1)
        s = put(s, 3 * d_model, 0, fw2)
        # vector rows
        s = put(s, r_vec + 0, 0, bq * scale); s = put(s, r_vec + 0, c_k, bk)
        s = put(s, r_vec + 0, c_v, bv);       s = put(s, r_vec + 0, c_o, bo)
        s = put(s, r_vec + 1, 0, bq2 * scale); s = put(s, r_vec + 1, c_k, bk2)
        s = put(s, r_vec + 1, c_v, bv2);       s = put(s, r_vec + 1, c_o, bo2)
        s = put(s, r_vec + 2, 0, fb1); s = put(s, r_vec + 2, d_hidden, fb2)
        s = put(s, r_vec + 3, 0, g1); s = put(s, r_vec + 3, d_model, be1)
        s = put(s, r_vec + 3, 2 * d_model, g2); s = put(s, r_vec + 3, 3 * d_model, be2)
        s = put(s, r_vec + 4, 0, g3); s = put(s, r_vec + 4, d_model, be3)
        slabs.append(s)
    return jnp.stack(slabs)                     # (n_layers, rows, 128)


# ----------------------------- main ----------------------------------------------------
if __name__ == "__main__":
    root = jax.random.PRNGKey(0)
    k_emb, k_enc, k_dec_tok, k_enc_tok, k_layers = jax.random.split(root, 5)

    embedding_table = jax.random.normal(k_emb, (VOC_SIZE, D_MODEL), jnp.float32) * 0.02
    pos_table = sinusoid_table(MAX_LENGTH, D_MODEL)

    layer_keys = jax.random.split(k_layers, N_LAYERS)
    layer_params = [init_layer_params(k, D_MODEL, N_HEAD, D_K, D_V, D_HIDDEN)
                    for k in layer_keys]
    w_slab = pack_params(layer_params, n_head=N_HEAD, d_k=D_K, d_v=D_V,
                         d_model=D_MODEL, d_hidden=D_HIDDEN)

    dec_input = jax.random.randint(k_dec_tok, (B, L_DEC), 1, VOC_SIZE)
    dec_input = dec_input.at[:, -2:].set(0)          # trailing padding tokens
    enc_input = jax.random.randint(k_enc_tok, (B, L_ENC), 1, VOC_SIZE)
    enc_input = enc_input.at[1, -3:].set(0)          # trailing padding tokens
    enc_output = jax.random.normal(k_enc, (B, L_ENC, D_MODEL), jnp.float32)

    out = transformer_decoder_forward(dec_input, enc_output, enc_input,
                                      embedding_table, pos_table, w_slab)
    out = jax.block_until_ready(out)
    assert out.shape == (B, L_DEC, D_MODEL)
    assert bool(jnp.all(jnp.isfinite(out)))
    print("KERNEL_OK")
</pallas_src>

<mosaic_0001>
module attributes {stable_mosaic.version = 11 : i64} {
  func.func @fused_decoder_kernel(%arg0: i32, %arg1: memref<32x32xf32, #tpu.memory_space<vmem>>, %arg2: memref<2x2x8x8xf32, #tpu.memory_space<vmem>>, %arg3: memref<2x168x128xf32, #tpu.memory_space<vmem>>, %arg4: memref<16x32xf32, #tpu.memory_space<vmem>>) attributes {dimension_semantics = [#tpu.dimension_semantics<arbitrary>], iteration_bounds = array<i64: 1>, scalar_prefetch = 0 : i64, scratch_operands = 0 : i64, tpu.core_type = #tpu.core_type<tc>, window_params = [{pipeline_mode = #tpu.pipeline_mode<synchronous>, transform_indices = @transform_0, window_bounds = array<i64: 32, 32>}, {pipeline_mode = #tpu.pipeline_mode<synchronous>, transform_indices = @transform_1, window_bounds = array<i64: 2, 2, 8, 8>}, {pipeline_mode = #tpu.pipeline_mode<synchronous>, transform_indices = @transform_2, window_bounds = array<i64: 2, 168, 128>}, {pipeline_mode = #tpu.pipeline_mode<synchronous>, transform_indices = @transform_3, window_bounds = array<i64: 16, 32>}]} {
    %c0 = arith.constant 0 : index
    %c0_0 = arith.constant 0 : index
    %0 = vector.load %arg1[%c0, %c0_0] : memref<32x32xf32, #tpu.memory_space<vmem>>, vector<16x32xf32>
    %c16 = arith.constant 16 : index
    %c0_1 = arith.constant 0 : index
    %1 = vector.load %arg1[%c16, %c0_1] : memref<32x32xf32, #tpu.memory_space<vmem>>, vector<16x32xf32>
    %c0_2 = arith.constant 0 : index
    %c0_3 = arith.constant 0 : index
    %c0_4 = arith.constant 0 : index
    %c0_5 = arith.constant 0 : index
    %2 = vector.load %arg2[%c0_2, %c0_3, %c0_4, %c0_5] : memref<2x2x8x8xf32, #tpu.memory_space<vmem>>, vector<1x2x8x8xf32>
    %3 = vector.shape_cast %2 : vector<1x2x8x8xf32> to vector<2x8x8xf32>
    %c1 = arith.constant 1 : index
    %c0_6 = arith.constant 0 : index
    %c0_7 = arith.constant 0 : index
    %c0_8 = arith.constant 0 : index
    %4 = vector.load %arg2[%c1, %c0_6, %c0_7, %c0_8] : memref<2x2x8x8xf32, #tpu.memory_space<vmem>>, vector<1x2x8x8xf32>
    %5 = vector.shape_cast %4 : vector<1x2x8x8xf32> to vector<2x8x8xf32>
    %c0_9 = arith.constant 0 : index
    %c0_10 = arith.constant 0 : index
    %c0_11 = arith.constant 0 : index
    %6 = vector.load %arg3[%c0_9, %c0_10, %c0_11] : memref<2x168x128xf32, #tpu.memory_space<vmem>>, vector<1x32x16xf32>
    %7 = vector.shape_cast %6 : vector<1x32x16xf32> to vector<32x16xf32>
    %cst = arith.constant dense<0.000000e+00> : vector<16x16xf32>
    %8 = tpu.matmul %0, %7, %cst {dimension_numbers = #tpu.dot_dimension_numbers<[1], [0], [0], [1], [0, 0, 1, 1], [], []>} : vector<16x32xf32>, vector<32x16xf32>, vector<16x16xf32> -> vector<16x16xf32>
    %c0_12 = arith.constant 0 : index
    %c160 = arith.constant 160 : index
    %c0_13 = arith.constant 0 : index
    %9 = vector.load %arg3[%c0_12, %c160, %c0_13] : memref<2x168x128xf32, #tpu.memory_space<vmem>>, vector<1x1x16xf32>
    %10 = vector.shape_cast %9 : vector<1x1x16xf32> to vector<1x16xf32>
    %11 = vector.broadcast %10 : vector<1x16xf32> to vector<16x16xf32>
    %12 = arith.addf %8, %11 : vector<16x16xf32>
    %c0_14 = arith.constant 0 : index
    %c0_15 = arith.constant 0 : index
    %c32 = arith.constant 32 : index
    %13 = vector.load %arg3[%c0_14, %c0_15, %c32] : memref<2x168x128xf32, #tpu.memory_space<vmem>>, vector<1x32x16xf32>
    %14 = vector.shape_cast %13 : vector<1x32x16xf32> to vector<32x16xf32>
    %cst_16 = arith.constant dense<0.000000e+00> : vector<16x16xf32>
    %15 = tpu.matmul %0, %14, %cst_16 {dimension_numbers = #tpu.dot_dimension_numbers<[1], [0], [0], [1], [0, 0, 1, 1], [], []>} : vector<16x32xf32>, vector<32x16xf32>, vector<16x16xf32> -> vector<16x16xf32>
    %c0_17 = arith.constant 0 : index
    %c160_18 = arith.constant 160 : index
    %c32_19 = arith.constant 32 : index
    %16 = vector.load %arg3[%c0_17, %c160_18, %c32_19] : memref<2x168x128xf32, #tpu.memory_space<vmem>>, vector<1x1x16xf32>
    %17 = vector.shape_cast %16 : vector<1x1x16xf32> to vector<1x16xf32>
    %18 = vector.broadcast %17 : vector<1x16xf32> to vector<16x16xf32>
    %19 = arith.addf %15, %18 : vector<16x16xf32>
    %c0_20 = arith.constant 0 : index
    %c0_21 = arith.constant 0 : index
    %c64 = arith.constant 64 : index
    %20 = vector.load %arg3[%c0_20, %c0_21, %c64] : memref<2x168x128xf32, #tpu.memory_space<vmem>>, vector<1x32x16xf32>
    %21 = vector.shape_cast %20 : vector<1x32x16xf32> to vector<32x16xf32>
    %cst_22 = arith.constant dense<0.000000e+00> : vector<16x16xf32>
    %22 = tpu.matmul %0, %21, %cst_22 {dimension_numbers = #tpu.dot_dimension_numbers<[1], [0], [0], [1], [0, 0, 1, 1], [], []>} : vector<16x32xf32>, vector<32x16xf32>, vector<16x16xf32> -> vector<16x16xf32>
    %c0_23 = arith.constant 0 : index
    %c160_24 = arith.constant 160 : index
    %c64_25 = arith.constant 64 : index
    %23 = vector.load %arg3[%c0_23, %c160_24, %c64_25] : memref<2x168x128xf32, #tpu.memory_space<vmem>>, vector<1x1x16xf32>
    %24 = vector.shape_cast %23 : vector<1x1x16xf32> to vector<1x16xf32>
    %25 = vector.broadcast %24 : vector<1x16xf32> to vector<16x16xf32>
    %26 = arith.addf %22, %25 : vector<16x16xf32>
    %27 = vector.shape_cast %12 : vector<16x16xf32> to vector<2x8x16xf32>
    %28 = vector.shape_cast %19 : vector<16x16xf32> to vector<2x8x16xf32>
    "tpu.trace_start"() <{level = 10 : i32, message = "bqd,bkd->bqk"}> : () -> ()
    %cst_26 = arith.constant dense<0.000000e+00> : vector<2x8x8xf32>
    %29 = tpu.matmul %27, %28, %cst_26 {dimension_numbers = #tpu.dot_dimension_numbers<[2], [2], [1], [1], [0, 0, 0, 1, 1, 1], [0], [0]>} : vector<2x8x16xf32>, vector<2x8x16xf32>, vector<2x8x8xf32> -> vector<2x8x8xf32>
    "tpu.trace_stop"() : () -> ()
    %30 = arith.addf %29, %3 : vector<2x8x8xf32>
    %cst_27 = arith.constant dense<0xFF800000> : vector<2x8xf32>
    %31 = vector.multi_reduction <maximumf>, %30, %cst_27 [2] : vector<2x8x8xf32> to vector<2x8xf32>
    %32 = vector.shape_cast %31 : vector<2x8xf32> to vector<2x8x1xf32>
    %33 = vector.broadcast %32 : vector<2x8x1xf32> to vector<2x8x8xf32>
    %34 = arith.subf %30, %33 : vector<2x8x8xf32>
    %35 = math.exp %34 : vector<2x8x8xf32>
    %cst_28 = arith.constant dense<0.000000e+00> : vector<2x8xf32>
    %36 = vector.multi_reduction <add>, %35, %cst_28 [2] : vector<2x8x8xf32> to vector<2x8xf32>
    %37 = vector.shape_cast %36 : vector<2x8xf32> to vector<2x8x1xf32>
    %38 = tpu.reciprocal %37 {approx = true} : vector<2x8x1xf32> -> vector<2x8x1xf32>
    %39 = vector.broadcast %38 : vector<2x8x1xf32> to vector<2x8x8xf32>
    %40 = arith.mulf %35, %39 : vector<2x8x8xf32>
    %41 = vector.shape_cast %26 : vector<16x16xf32> to vector<2x8x16xf32>
    "tpu.trace_start"() <{level = 10 : i32, message = "bqk,bkv->bqv"}> : () -> ()
    %cst_29 = arith.constant dense<0.000000e+00> : vector<2x8x16xf32>
    %42 = tpu.matmul %40, %41, %cst_29 {dimension_numbers = #tpu.dot_dimension_numbers<[2], [1], [1], [2], [0, 0, 0, 1, 1, 2], [0], [0]>} : vector<2x8x8xf32>, vector<2x8x16xf32>, vector<2x8x16xf32> -> vector<2x8x16xf32>
    "tpu.trace_stop"() : () -> ()
    %43 = vector.shape_cast %42 : vector<2x8x16xf32> to vector<16x16xf32>
    %c0_30 = arith.constant 0 : index
    %c0_31 = arith.constant 0 : index
    %c16_32 = arith.constant 16 : index
    %44 = vector.load %arg3[%c0_30, %c0_31, %c16_32] : memref<2x168x128xf32, #tpu.memory_space<vmem>>, vector<1x32x16xf32>
    %45 = vector.shape_cast %44 : vector<1x32x16xf32> to vector<32x16xf32>
    %cst_33 = arith.constant dense<0.000000e+00> : vector<16x16xf32>
    %46 = tpu.matmul %0, %45, %cst_33 {dimension_numbers = #tpu.dot_dimension_numbers<[1], [0], [0], [1], [0, 0, 1, 1], [], []>} : vector<16x32xf32>, vector<32x16xf32>, vector<16x16xf32> -> vector<16x16xf32>
    %c0_34 = arith.constant 0 : index
    %c160_35 = arith.constant 160 : index
    %c16_36 = arith.constant 16 : index
    %47 = vector.load %arg3[%c0_34, %c160_35, %c16_36] : memref<2x168x128xf32, #tpu.memory_space<vmem>>, vector<1x1x16xf32>
    %48 = vector.shape_cast %47 : vector<1x1x16xf32> to vector<1x16xf32>
    %49 = vector.broadcast %48 : vector<1x16xf32> to vector<16x16xf32>
    %50 = arith.addf %46, %49 : vector<16x16xf32>
    %c0_37 = arith.constant 0 : index
    %c0_38 = arith.constant 0 : index
    %c48 = arith.constant 48 : index
    %51 = vector.load %arg3[%c0_37, %c0_38, %c48] : memref<2x168x128xf32, #tpu.memory_space<vmem>>, vector<1x32x16xf32>
    %52 = vector.shape_cast %51 : vector<1x32x16xf32> to vector<32x16xf32>
    %cst_39 = arith.constant dense<0.000000e+00> : vector<16x16xf32>
    %53 = tpu.matmul %0, %52, %cst_39 {dimension_numbers = #tpu.dot_dimension_numbers<[1], [0], [0], [1], [0, 0, 1, 1], [], []>} : vector<16x32xf32>, vector<32x16xf32>, vector<16x16xf32> -> vector<16x16xf32>
    %c0_40 = arith.constant 0 : index
    %c160_41 = arith.constant 160 : index
    %c48_42 = arith.constant 48 : index
    %54 = vector.load %arg3[%c0_40, %c160_41, %c48_42] : memref<2x168x128xf32, #tpu.memory_space<vmem>>, vector<1x1x16xf32>
    %55 = vector.shape_cast %54 : vector<1x1x16xf32> to vector<1x16xf32>
    %56 = vector.broadcast %55 : vector<1x16xf32> to vector<16x16xf32>
    %57 = arith.addf %53, %56 : vector<16x16xf32>
    %c0_43 = arith.constant 0 : index
    %c0_44 = arith.constant 0 : index
    %c80 = arith.constant 80 : index
    %58 = vector.load %arg3[%c0_43, %c0_44, %c80] : memref<2x168x128xf32, #tpu.memory_space<vmem>>, vector<1x32x16xf32>
    %59 = vector.shape_cast %58 : vector<1x32x16xf32> to vector<32x16xf32>
    %cst_45 = arith.constant dense<0.000000e+00> : vector<16x16xf32>
    %60 = tpu.matmul %0, %59, %cst_45 {dimension_numbers = #tpu.dot_dimension_numbers<[1], [0], [0], [1], [0, 0, 1, 1], [], []>} : vector<16x32xf32>, vector<32x16xf32>, vector<16x16xf32> -> vector<16x16xf32>
    %c0_46 = arith.constant 0 : index
    %c160_47 = arith.constant 160 : index
    %c80_48 = arith.constant 80 : index
    %61 = vector.load %arg3[%c0_46, %c160_47, %c80_48] : memref<2x168x128xf32, #tpu.memory_space<vmem>>, vector<1x1x16xf32>
    %62 = vector.shape_cast %61 : vector<1x1x16xf32> to vector<1x16xf32>
    %63 = vector.broadcast %62 : vector<1x16xf32> to vector<16x16xf32>
    %64 = arith.addf %60, %63 : vector<16x16xf32>
    %65 = vector.shape_cast %50 : vector<16x16xf32> to vector<2x8x16xf32>
    %66 = vector.shape_cast %57 : vector<16x16xf32> to vector<2x8x16xf32>
    "tpu.trace_start"() <{level = 10 : i32, message = "bqd,bkd->bqk"}> : () -> ()
    %cst_49 = arith.constant dense<0.000000e+00> : vector<2x8x8xf32>
    %67 = tpu.matmul %65, %66, %cst_49 {dimension_numbers = #tpu.dot_dimension_numbers<[2], [2], [1], [1], [0, 0, 0, 1, 1, 1], [0], [0]>} : vector<2x8x16xf32>, vector<2x8x16xf32>, vector<2x8x8xf32> -> vector<2x8x8xf32>
    "tpu.trace_stop"() : () -> ()
    %68 = arith.addf %67, %3 : vector<2x8x8xf32>
    %cst_50 = arith.constant dense<0xFF800000> : vector<2x8xf32>
    %69 = vector.multi_reduction <maximumf>, %68, %cst_50 [2] : vector<2x8x8xf32> to vector<2x8xf32>
    %70 = vector.shape_cast %69 : vector<2x8xf32> to vector<2x8x1xf32>
    %71 = vector.broadcast %70 : vector<2x8x1xf32> to vector<2x8x8xf32>
    %72 = arith.subf %68, %71 : vector<2x8x8xf32>
    %73 = math.exp %72 : vector<2x8x8xf32>
    %cst_51 = arith.constant dense<0.000000e+00> : vector<2x8xf32>
    %74 = vector.multi_reduction <add>, %73, %cst_51 [2] : vector<2x8x8xf32> to vector<2x8xf32>
    %75 = vector.shape_cast %74 : vector<2x8xf32> to vector<2x8x1xf32>
    %76 = tpu.reciprocal %75 {approx = true} : vector<2x8x1xf32> -> vector<2x8x1xf32>
    %77 = vector.broadcast %76 : vector<2x8x1xf32> to vector<2x8x8xf32>
    %78 = arith.mulf %73, %77 : vector<2x8x8xf32>
    %79 = vector.shape_cast %64 : vector<16x16xf32> to vector<2x8x16xf32>
    "tpu.trace_start"() <{level = 10 : i32, message = "bqk,bkv->bqv"}> : () -> ()
    %cst_52 = arith.constant dense<0.000000e+00> : vector<2x8x16xf32>
    %80 = tpu.matmul %78, %79, %cst_52 {dimension_numbers = #tpu.dot_dimension_numbers<[2], [1], [1], [2], [0, 0, 0, 1, 1, 2], [0], [0]>} : vector<2x8x8xf32>, vector<2x8x16xf32>, vector<2x8x16xf32> -> vector<2x8x16xf32>
    "tpu.trace_stop"() : () -> ()
    %81 = vector.shape_cast %80 : vector<2x8x16xf32> to vector<16x16xf32>
    %82 = tpu.concatenate %43, %81 in 1 : vector<16x16xf32>, vector<16x16xf32> -> vector<16x32xf32>
    %c0_53 = arith.constant 0 : index
    %c0_54 = arith.constant 0 : index
    %c96 = arith.constant 96 : index
    %83 = vector.load %arg3[%c0_53, %c0_54, %c96] : memref<2x168x128xf32, #tpu.memory_space<vmem>>, vector<1x32x32xf32>
    %84 = vector.shape_cast %83 : vector<1x32x32xf32> to vector<32x32xf32>
    %cst_55 = arith.constant dense<0.000000e+00> : vector<16x32xf32>
    %85 = tpu.matmul %82, %84, %cst_55 {dimension_numbers = #tpu.dot_dimension_numbers<[1], [0], [0], [1], [0, 0, 1, 1], [], []>} : vector<16x32xf32>, vector<32x32xf32>, vector<16x32xf32> -> vector<16x32xf32>
    %c0_56 = arith.constant 0 : index
    %c160_57 = arith.constant 160 : index
    %c96_58 = arith.constant 96 : index
    %86 = vector.load %arg3[%c0_56, %c160_57, %c96_58] : memref<2x168x128xf32, #tpu.memory_space<vmem>>, vector<1x1x32xf32>
    %87 = vector.shape_cast %86 : vector<1x1x32xf32> to vector<1x32xf32>
    %88 = vector.broadcast %87 : vector<1x32xf32> to vector<16x32xf32>
    %89 = arith.addf %85, %88 : vector<16x32xf32>
    %90 = arith.addf %89, %0 : vector<16x32xf32>
    %c0_59 = arith.constant 0 : index
    %c163 = arith.constant 163 : index
    %c0_60 = arith.constant 0 : index
    %91 = vector.load %arg3[%c0_59, %c163, %c0_60] : memref<2x168x128xf32, #tpu.memory_space<vmem>>, vector<1x1x32xf32>
    %92 = vector.shape_cast %91 : vector<1x1x32xf32> to vector<1x32xf32>
    %c0_61 = arith.constant 0 : index
    %c163_62 = arith.constant 163 : index
    %c32_63 = arith.constant 32 : index
    %93 = vector.load %arg3[%c0_61, %c163_62, %c32_63] : memref<2x168x128xf32, #tpu.memory_space<vmem>>, vector<1x1x32xf32>
    %94 = vector.shape_cast %93 : vector<1x1x32xf32> to vector<1x32xf32>
    %cst_64 = arith.constant dense<0.000000e+00> : vector<16xf32>
    %95 = vector.multi_reduction <add>, %90, %cst_64 [1] : vector<16x32xf32> to vector<16xf32>
    %96 = vector.shape_cast %95 : vector<16xf32> to vector<16x1xf32>
    %cst_65 = arith.constant 3.200000e+01 : f32
    %97 = vector.broadcast %cst_65 : f32 to vector<16x1xf32>
    %98 = arith.divf %96, %97 : vector<16x1xf32>
    %99 = vector.broadcast %98 : vector<16x1xf32> to vector<16x32xf32>
    %100 = arith.subf %90, %99 : vector<16x32xf32>
    %101 = arith.mulf %100, %100 : vector<16x32xf32>
    %cst_66 = arith.constant dense<0.000000e+00> : vector<16xf32>
    %102 = vector.multi_reduction <add>, %101, %cst_66 [1] : vector<16x32xf32> to vector<16xf32>
    %103 = vector.shape_cast %102 : vector<16xf32> to vector<16x1xf32>
    %cst_67 = arith.constant 3.200000e+01 : f32
    %104 = vector.broadcast %cst_67 : f32 to vector<16x1xf32>
    %105 = arith.divf %103, %104 : vector<16x1xf32>
    %106 = vector.broadcast %98 : vector<16x1xf32> to vector<16x32xf32>
    %107 = arith.subf %90, %106 : vector<16x32xf32>
    %cst_68 = arith.constant 9.99999974E-6 : f32
    %108 = vector.broadcast %cst_68 : f32 to vector<16x1xf32>
    %109 = arith.addf %105, %108 : vector<16x1xf32>
    %110 = math.rsqrt %109 : vector<16x1xf32>
    %111 = vector.broadcast %110 : vector<16x1xf32> to vector<16x32xf32>
    %112 = arith.mulf %107, %111 : vector<16x32xf32>
    %113 = vector.broadcast %92 : vector<1x32xf32> to vector<16x32xf32>
    %114 = arith.mulf %112, %113 : vector<16x32xf32>
    %115 = vector.broadcast %94 : vector<1x32xf32> to vector<16x32xf32>
    %116 = arith.addf %114, %115 : vector<16x32xf32>
    %c0_69 = arith.constant 0 : index
    %c32_70 = arith.constant 32 : index
    %c0_71 = arith.constant 0 : index
    %117 = vector.load %arg3[%c0_69, %c32_70, %c0_71] : memref<2x168x128xf32, #tpu.memory_space<vmem>>, vector<1x32x16xf32>
    %118 = vector.shape_cast %117 : vector<1x32x16xf32> to vector<32x16xf32>
    %cst_72 = arith.constant dense<0.000000e+00> : vector<16x16xf32>
    %119 = tpu.matmul %116, %118, %cst_72 {dimension_numbers = #tpu.dot_dimension_numbers<[1], [0], [0], [1], [0, 0, 1, 1], [], []>} : vector<16x32xf32>, vector<32x16xf32>, vector<16x16xf32> -> vector<16x16xf32>
    %c0_73 = arith.constant 0 : index
    %c161 = arith.constant 161 : index
    %c0_74 = arith.constant 0 : index
    %120 = vector.load %arg3[%c0_73, %c161, %c0_74] : memref<2x168x128xf32, #tpu.memory_space<vmem>>, vector<1x1x16xf32>
    %121 = vector.shape_cast %120 : vector<1x1x16xf32> to vector<1x16xf32>
    %122 = vector.broadcast %121 : vector<1x16xf32> to vector<16x16xf32>
    %123 = arith.addf %119, %122 : vector<16x16xf32>
    %c0_75 = arith.constant 0 : index
    %c32_76 = arith.constant 32 : index
    %c32_77 = arith.constant 32 : index
    %124 = vector.load %arg3[%c0_75, %c32_76, %c32_77] : memref<2x168x128xf32, #tpu.memory_space<vmem>>, vector<1x32x16xf32>
    %125 = vector.shape_cast %124 : vector<1x32x16xf32> to vector<32x16xf32>
    %cst_78 = arith.constant dense<0.000000e+00> : vector<16x16xf32>
    %126 = tpu.matmul %1, %125, %cst_78 {dimension_numbers = #tpu.dot_dimension_numbers<[1], [0], [0], [1], [0, 0, 1, 1], [], []>} : vector<16x32xf32>, vector<32x16xf32>, vector<16x16xf32> -> vector<16x16xf32>
    %c0_79 = arith.constant 0 : index
    %c161_80 = arith.constant 161 : index
    %c32_81 = arith.constant 32 : index
    %127 = vector.load %arg3[%c0_79, %c161_80, %c32_81] : memref<2x168x128xf32, #tpu.memory_space<vmem>>, vector<1x1x16xf32>
    %128 = vector.shape_cast %127 : vector<1x1x16xf32> to vector<1x16xf32>
    %129 = vector.broadcast %128 : vector<1x16xf32> to vector<16x16xf32>
    %130 = arith.addf %126, %129 : vector<16x16xf32>
    %c0_82 = arith.constant 0 : index
    %c32_83 = arith.constant 32 : index
    %c64_84 = arith.constant 64 : index
    %131 = vector.load %arg3[%c0_82, %c32_83, %c64_84] : memref<2x168x128xf32, #tpu.memory_space<vmem>>, vector<1x32x16xf32>
    %132 = vector.shape_cast %131 : vector<1x32x16xf32> to vector<32x16xf32>
    %cst_85 = arith.constant dense<0.000000e+00> : vector<16x16xf32>
    %133 = tpu.matmul %1, %132, %cst_85 {dimension_numbers = #tpu.dot_dimension_numbers<[1], [0], [0], [1], [0, 0, 1, 1], [], []>} : vector<16x32xf32>, vector<32x16xf32>, vector<16x16xf32> -> vector<16x16xf32>
    %c0_86 = arith.constant 0 : index
    %c161_87 = arith.constant 161 : index
    %c64_88 = arith.constant 64 : index
    %134 = vector.load %arg3[%c0_86, %c161_87, %c64_88] : memref<2x168x128xf32, #tpu.memory_space<vmem>>, vector<1x1x16xf32>
    %135 = vector.shape_cast %134 : vector<1x1x16xf32> to vector<1x16xf32>
    %136 = vector.broadcast %135 : vector<1x16xf32> to vector<16x16xf32>
    %137 = arith.addf %133, %136 : vector<16x16xf32>
    %138 = vector.shape_cast %123 : vector<16x16xf32> to vector<2x8x16xf32>
    %139 = vector.shape_cast %130 : vector<16x16xf32> to vector<2x8x16xf32>
    "tpu.trace_start"() <{level = 10 : i32, message = "bqd,bkd->bqk"}> : () -> ()
    %cst_89 = arith.constant dense<0.000000e+00> : vector<2x8x8xf32>
    %140 = tpu.matmul %138, %139, %cst_89 {dimension_numbers = #tpu.dot_dimension_numbers<[2], [2], [1], [1], [0, 0, 0, 1, 1, 1], [0], [0]>} : vector<2x8x16xf32>, vector<2x8x16xf32>, vector<2x8x8xf32> -> vector<2x8x8xf32>
    "tpu.trace_stop"() : () -> ()
    %141 = arith.addf %140, %5 : vector<2x8x8xf32>
    %cst_90 = arith.constant dense<0xFF800000> : vector<2x8xf32>
    %142 = vector.multi_reduction <maximumf>, %141, %cst_90 [2] : vector<2x8x8xf32> to vector<2x8xf32>
    %143 = vector.shape_cast %142 : vector<2x8xf32> to vector<2x8x1xf32>
    %144 = vector.broadcast %143 : vector<2x8x1xf32> to vector<2x8x8xf32>
    %145 = arith.subf %141, %144 : vector<2x8x8xf32>
    %146 = math.exp %145 : vector<2x8x8xf32>
    %cst_91 = arith.constant dense<0.000000e+00> : vector<2x8xf32>
    %147 = vector.multi_reduction <add>, %146, %cst_91 [2] : vector<2x8x8xf32> to vector<2x8xf32>
    %148 = vector.shape_cast %147 : vector<2x8xf32> to vector<2x8x1xf32>
    %149 = tpu.reciprocal %148 {approx = true} : vector<2x8x1xf32> -> vector<2x8x1xf32>
    %150 = vector.broadcast %149 : vector<2x8x1xf32> to vector<2x8x8xf32>
    %151 = arith.mulf %146, %150 : vector<2x8x8xf32>
    %152 = vector.shape_cast %137 : vector<16x16xf32> to vector<2x8x16xf32>
    "tpu.trace_start"() <{level = 10 : i32, message = "bqk,bkv->bqv"}> : () -> ()
    %cst_92 = arith.constant dense<0.000000e+00> : vector<2x8x16xf32>
    %153 = tpu.matmul %151, %152, %cst_92 {dimension_numbers = #tpu.dot_dimension_numbers<[2], [1], [1], [2], [0, 0, 0, 1, 1, 2], [0], [0]>} : vector<2x8x8xf32>, vector<2x8x16xf32>, vector<2x8x16xf32> -> vector<2x8x16xf32>
    "tpu.trace_stop"() : () -> ()
    %154 = vector.shape_cast %153 : vector<2x8x16xf32> to vector<16x16xf32>
    %c0_93 = arith.constant 0 : index
    %c32_94 = arith.constant 32 : index
    %c16_95 = arith.constant 16 : index
    %155 = vector.load %arg3[%c0_93, %c32_94, %c16_95] : memref<2x168x128xf32, #tpu.memory_space<vmem>>, vector<1x32x16xf32>
    %156 = vector.shape_cast %155 : vector<1x32x16xf32> to vector<32x16xf32>
    %cst_96 = arith.constant dense<0.000000e+00> : vector<16x16xf32>
    %157 = tpu.matmul %116, %156, %cst_96 {dimension_numbers = #tpu.dot_dimension_numbers<[1], [0], [0], [1], [0, 0, 1, 1], [], []>} : vector<16x32xf32>, vector<32x16xf32>, vector<16x16xf32> -> vector<16x16xf32>
    %c0_97 = arith.constant 0 : index
    %c161_98 = arith.constant 161 : index
    %c16_99 = arith.constant 16 : index
    %158 = vector.load %arg3[%c0_97, %c161_98, %c16_99] : memref<2x168x128xf32, #tpu.memory_space<vmem>>, vector<1x1x16xf32>
    %159 = vector.shape_cast %158 : vector<1x1x16xf32> to vector<1x16xf32>
    %160 = vector.broadcast %159 : vector<1x16xf32> to vector<16x16xf32>
    %161 = arith.addf %157, %160 : vector<16x16xf32>
    %c0_100 = arith.constant 0 : index
    %c32_101 = arith.constant 32 : index
    %c48_102 = arith.constant 48 : index
    %162 = vector.load %arg3[%c0_100, %c32_101, %c48_102] : memref<2x168x128xf32, #tpu.memory_space<vmem>>, vector<1x32x16xf32>
    %163 = vector.shape_cast %162 : vector<1x32x16xf32> to vector<32x16xf32>
    %cst_103 = arith.constant dense<0.000000e+00> : vector<16x16xf32>
    %164 = tpu.matmul %1, %163, %cst_103 {dimension_numbers = #tpu.dot_dimension_numbers<[1], [0], [0], [1], [0, 0, 1, 1], [], []>} : vector<16x32xf32>, vector<32x16xf32>, vector<16x16xf32> -> vector<16x16xf32>
    %c0_104 = arith.constant 0 : index
    %c161_105 = arith.constant 161 : index
    %c48_106 = arith.constant 48 : index
    %165 = vector.load %arg3[%c0_104, %c161_105, %c48_106] : memref<2x168x128xf32, #tpu.memory_space<vmem>>, vector<1x1x16xf32>
    %166 = vector.shape_cast %165 : vector<1x1x16xf32> to vector<1x16xf32>
    %167 = vector.broadcast %166 : vector<1x16xf32> to vector<16x16xf32>
    %168 = arith.addf %164, %167 : vector<16x16xf32>
    %c0_107 = arith.constant 0 : index
    %c32_108 = arith.constant 32 : index
    %c80_109 = arith.constant 80 : index
    %169 = vector.load %arg3[%c0_107, %c32_108, %c80_109] : memref<2x168x128xf32, #tpu.memory_space<vmem>>, vector<1x32x16xf32>
    %170 = vector.shape_cast %169 : vector<1x32x16xf32> to vector<32x16xf32>
    %cst_110 = arith.constant dense<0.000000e+00> : vector<16x16xf32>
    %171 = tpu.matmul %1, %170, %cst_110 {dimension_numbers = #tpu.dot_dimension_numbers<[1], [0], [0], [1], [0, 0, 1, 1], [], []>} : vector<16x32xf32>, vector<32x16xf32>, vector<16x16xf32> -> vector<16x16xf32>
    %c0_111 = arith.constant 0 : index
    %c161_112 = arith.constant 161 : index
    %c80_113 = arith.constant 80 : index
    %172 = vector.load %arg3[%c0_111, %c161_112, %c80_113] : memref<2x168x128xf32, #tpu.memory_space<vmem>>, vector<1x1x16xf32>
    %173 = vector.shape_cast %172 : vector<1x1x16xf32> to vector<1x16xf32>
    %174 = vector.broadcast %173 : vector<1x16xf32> to vector<16x16xf32>
    %175 = arith.addf %171, %174 : vector<16x16xf32>
    %176 = vector.shape_cast %161 : vector<16x16xf32> to vector<2x8x16xf32>
    %177 = vector.shape_cast %168 : vector<16x16xf32> to vector<2x8x16xf32>
    "tpu.trace_start"() <{level = 10 : i32, message = "bqd,bkd->bqk"}> : () -> ()
    %cst_114 = arith.constant dense<0.000000e+00> : vector<2x8x8xf32>
    %178 = tpu.matmul %176, %177, %cst_114 {dimension_numbers = #tpu.dot_dimension_numbers<[2], [2], [1], [1], [0, 0, 0, 1, 1, 1], [0], [0]>} : vector<2x8x16xf32>, vector<2x8x16xf32>, vector<2x8x8xf32> -> vector<2x8x8xf32>
    "tpu.trace_stop"() : () -> ()
    %179 = arith.addf %178, %5 : vector<2x8x8xf32>
    %cst_115 = arith.constant dense<0xFF800000> : vector<2x8xf32>
    %180 = vector.multi_reduction <maximumf>, %179, %cst_115 [2] : vector<2x8x8xf32> to vector<2x8xf32>
    %181 = vector.shape_cast %180 : vector<2x8xf32> to vector<2x8x1xf32>
    %182 = vector.broadcast %181 : vector<2x8x1xf32> to vector<2x8x8xf32>
    %183 = arith.subf %179, %182 : vector<2x8x8xf32>
    %184 = math.exp %183 : vector<2x8x8xf32>
    %cst_116 = arith.constant dense<0.000000e+00> : vector<2x8xf32>
    %185 = vector.multi_reduction <add>, %184, %cst_116 [2] : vector<2x8x8xf32> to vector<2x8xf32>
    %186 = vector.shape_cast %185 : vector<2x8xf32> to vector<2x8x1xf32>
    %187 = tpu.reciprocal %186 {approx = true} : vector<2x8x1xf32> -> vector<2x8x1xf32>
    %188 = vector.broadcast %187 : vector<2x8x1xf32> to vector<2x8x8xf32>
    %189 = arith.mulf %184, %188 : vector<2x8x8xf32>
    %190 = vector.shape_cast %175 : vector<16x16xf32> to vector<2x8x16xf32>
    "tpu.trace_start"() <{level = 10 : i32, message = "bqk,bkv->bqv"}> : () -> ()
    %cst_117 = arith.constant dense<0.000000e+00> : vector<2x8x16xf32>
    %191 = tpu.matmul %189, %190, %cst_117 {dimension_numbers = #tpu.dot_dimension_numbers<[2], [1], [1], [2], [0, 0, 0, 1, 1, 2], [0], [0]>} : vector<2x8x8xf32>, vector<2x8x16xf32>, vector<2x8x16xf32> -> vector<2x8x16xf32>
    "tpu.trace_stop"() : () -> ()
    %192 = vector.shape_cast %191 : vector<2x8x16xf32> to vector<16x16xf32>
    %193 = tpu.concatenate %154, %192 in 1 : vector<16x16xf32>, vector<16x16xf32> -> vector<16x32xf32>
    %c0_118 = arith.constant 0 : index
    %c32_119 = arith.constant 32 : index
    %c96_120 = arith.constant 96 : index
    %194 = vector.load %arg3[%c0_118, %c32_119, %c96_120] : memref<2x168x128xf32, #tpu.memory_space<vmem>>, vector<1x32x32xf32>
    %195 = vector.shape_cast %194 : vector<1x32x32xf32> to vector<32x32xf32>
    %cst_121 = arith.constant dense<0.000000e+00> : vector<16x32xf32>
    %196 = tpu.matmul %193, %195, %cst_121 {dimension_numbers = #tpu.dot_dimension_numbers<[1], [0], [0], [1], [0, 0, 1, 1], [], []>} : vector<16x32xf32>, vector<32x32xf32>, vector<16x32xf32> -> vector<16x32xf32>
    %c0_122 = arith.constant 0 : index
    %c161_123 = arith.constant 161 : index
    %c96_124 = arith.constant 96 : index
    %197 = vector.load %arg3[%c0_122, %c161_123, %c96_124] : memref<2x168x128xf32, #tpu.memory_space<vmem>>, vector<1x1x32xf32>
    %198 = vector.shape_cast %197 : vector<1x1x32xf32> to vector<1x32xf32>
    %199 = vector.broadcast %198 : vector<1x32xf32> to vector<16x32xf32>
    %200 = arith.addf %196, %199 : vector<16x32xf32>
    %201 = arith.addf %200, %116 : vector<16x32xf32>
    %c0_125 = arith.constant 0 : index
    %c163_126 = arith.constant 163 : index
    %c64_127 = arith.constant 64 : index
    %202 = vector.load %arg3[%c0_125, %c163_126, %c64_127] : memref<2x168x128xf32, #tpu.memory_space<vmem>>, vector<1x1x32xf32>
    %203 = vector.shape_cast %202 : vector<1x1x32xf32> to vector<1x32xf32>
    %c0_128 = arith.constant 0 : index
    %c163_129 = arith.constant 163 : index
    %c96_130 = arith.constant 96 : index
    %204 = vector.load %arg3[%c0_128, %c163_129, %c96_130] : memref<2x168x128xf32, #tpu.memory_space<vmem>>, vector<1x1x32xf32>
    %205 = vector.shape_cast %204 : vector<1x1x32xf32> to vector<1x32xf32>
    %cst_131 = arith.constant dense<0.000000e+00> : vector<16xf32>
    %206 = vector.multi_reduction <add>, %201, %cst_131 [1] : vector<16x32xf32> to vector<16xf32>
    %207 = vector.shape_cast %206 : vector<16xf32> to vector<16x1xf32>
    %cst_132 = arith.constant 3.200000e+01 : f32
    %208 = vector.broadcast %cst_132 : f32 to vector<16x1xf32>
    %209 = arith.divf %207, %208 : vector<16x1xf32>
    %210 = vector.broadcast %209 : vector<16x1xf32> to vector<16x32xf32>
    %211 = arith.subf %201, %210 : vector<16x32xf32>
    %212 = arith.mulf %211, %211 : vector<16x32xf32>
    %cst_133 = arith.constant dense<0.000000e+00> : vector<16xf32>
    %213 = vector.multi_reduction <add>, %212, %cst_133 [1] : vector<16x32xf32> to vector<16xf32>
    %214 = vector.shape_cast %213 : vector<16xf32> to vector<16x1xf32>
    %cst_134 = arith.constant 3.200000e+01 : f32
    %215 = vector.broadcast %cst_134 : f32 to vector<16x1xf32>
    %216 = arith.divf %214, %215 : vector<16x1xf32>
    %217 = vector.broadcast %209 : vector<16x1xf32> to vector<16x32xf32>
    %218 = arith.subf %201, %217 : vector<16x32xf32>
    %cst_135 = arith.constant 9.99999974E-6 : f32
    %219 = vector.broadcast %cst_135 : f32 to vector<16x1xf32>
    %220 = arith.addf %216, %219 : vector<16x1xf32>
    %221 = math.rsqrt %220 : vector<16x1xf32>
    %222 = vector.broadcast %221 : vector<16x1xf32> to vector<16x32xf32>
    %223 = arith.mulf %218, %222 : vector<16x32xf32>
    %224 = vector.broadcast %203 : vector<1x32xf32> to vector<16x32xf32>
    %225 = arith.mulf %223, %224 : vector<16x32xf32>
    %226 = vector.broadcast %205 : vector<1x32xf32> to vector<16x32xf32>
    %227 = arith.addf %225, %226 : vector<16x32xf32>
    %c0_136 = arith.constant 0 : index
    %c64_137 = arith.constant 64 : index
    %c0_138 = arith.constant 0 : index
    %228 = vector.load %arg3[%c0_136, %c64_137, %c0_138] : memref<2x168x128xf32, #tpu.memory_space<vmem>>, vector<1x32x64xf32>
    %229 = vector.shape_cast %228 : vector<1x32x64xf32> to vector<32x64xf32>
    %cst_139 = arith.constant dense<0.000000e+00> : vector<16x64xf32>
    %230 = tpu.matmul %227, %229, %cst_139 {dimension_numbers = #tpu.dot_dimension_numbers<[1], [0], [0], [1], [0, 0, 1, 1], [], []>} : vector<16x32xf32>, vector<32x64xf32>, vector<16x64xf32> -> vector<16x64xf32>
    %c0_140 = arith.constant 0 : index
    %c162 = arith.constant 162 : index
    %c0_141 = arith.constant 0 : index
    %231 = vector.load %arg3[%c0_140, %c162, %c0_141] : memref<2x168x128xf32, #tpu.memory_space<vmem>>, vector<1x1x64xf32>
    %232 = vector.shape_cast %231 : vector<1x1x64xf32> to vector<1x64xf32>
    %233 = vector.broadcast %232 : vector<1x64xf32> to vector<16x64xf32>
    %234 = arith.addf %230, %233 : vector<16x64xf32>
    %cst_142 = arith.constant 0.000000e+00 : f32
    %235 = vector.broadcast %cst_142 : f32 to vector<16x64xf32>
    %236 = arith.maximumf %234, %235 : vector<16x64xf32>
    %c0_143 = arith.constant 0 : index
    %c96_144 = arith.constant 96 : index
    %c0_145 = arith.constant 0 : index
    %237 = vector.load %arg3[%c0_143, %c96_144, %c0_145] : memref<2x168x128xf32, #tpu.memory_space<vmem>>, vector<1x64x32xf32>
    %238 = vector.shape_cast %237 : vector<1x64x32xf32> to vector<64x32xf32>
    %cst_146 = arith.constant dense<0.000000e+00> : vector<16x32xf32>
    %239 = tpu.matmul %236, %238, %cst_146 {dimension_numbers = #tpu.dot_dimension_numbers<[1], [0], [0], [1], [0, 0, 1, 1], [], []>} : vector<16x64xf32>, vector<64x32xf32>, vector<16x32xf32> -> vector<16x32xf32>
    %c0_147 = arith.constant 0 : index
    %c162_148 = arith.constant 162 : index
    %c64_149 = arith.constant 64 : index
    %240 = vector.load %arg3[%c0_147, %c162_148, %c64_149] : memref<2x168x128xf32, #tpu.memory_space<vmem>>, vector<1x1x32xf32>
    %241 = vector.shape_cast %240 : vector<1x1x32xf32> to vector<1x32xf32>
    %242 = vector.broadcast %241 : vector<1x32xf32> to vector<16x32xf32>
    %243 = arith.addf %239, %242 : vector<16x32xf32>
    %244 = arith.addf %243, %227 : vector<16x32xf32>
    %c0_150 = arith.constant 0 : index
    %c164 = arith.constant 164 : index
    %c0_151 = arith.constant 0 : index
    %245 = vector.load %arg3[%c0_150, %c164, %c0_151] : memref<2x168x128xf32, #tpu.memory_space<vmem>>, vector<1x1x32xf32>
    %246 = vector.shape_cast %245 : vector<1x1x32xf32> to vector<1x32xf32>
    %c0_152 = arith.constant 0 : index
    %c164_153 = arith.constant 164 : index
    %c32_154 = arith.constant 32 : index
    %247 = vector.load %arg3[%c0_152, %c164_153, %c32_154] : memref<2x168x128xf32, #tpu.memory_space<vmem>>, vector<1x1x32xf32>
    %248 = vector.shape_cast %247 : vector<1x1x32xf32> to vector<1x32xf32>
    %cst_155 = arith.constant dense<0.000000e+00> : vector<16xf32>
    %249 = vector.multi_reduction <add>, %244, %cst_155 [1] : vector<16x32xf32> to vector<16xf32>
    %250 = vector.shape_cast %249 : vector<16xf32> to vector<16x1xf32>
    %cst_156 = arith.constant 3.200000e+01 : f32
    %251 = vector.broadcast %cst_156 : f32 to vector<16x1xf32>
    %252 = arith.divf %250, %251 : vector<16x1xf32>
    %253 = vector.broadcast %252 : vector<16x1xf32> to vector<16x32xf32>
    %254 = arith.subf %244, %253 : vector<16x32xf32>
    %255 = arith.mulf %254, %254 : vector<16x32xf32>
    %cst_157 = arith.constant dense<0.000000e+00> : vector<16xf32>
    %256 = vector.multi_reduction <add>, %255, %cst_157 [1] : vector<16x32xf32> to vector<16xf32>
    %257 = vector.shape_cast %256 : vector<16xf32> to vector<16x1xf32>
    %cst_158 = arith.constant 3.200000e+01 : f32
    %258 = vector.broadcast %cst_158 : f32 to vector<16x1xf32>
    %259 = arith.divf %257, %258 : vector<16x1xf32>
    %260 = vector.broadcast %252 : vector<16x1xf32> to vector<16x32xf32>
    %261 = arith.subf %244, %260 : vector<16x32xf32>
    %cst_159 = arith.constant 9.99999974E-6 : f32
    %262 = vector.broadcast %cst_159 : f32 to vector<16x1xf32>
    %263 = arith.addf %259, %262 : vector<16x1xf32>
    %264 = math.rsqrt %263 : vector<16x1xf32>
    %265 = vector.broadcast %264 : vector<16x1xf32> to vector<16x32xf32>
    %266 = arith.mulf %261, %265 : vector<16x32xf32>
    %267 = vector.broadcast %246 : vector<1x32xf32> to vector<16x32xf32>
    %268 = arith.mulf %266, %267 : vector<16x32xf32>
    %269 = vector.broadcast %248 : vector<1x32xf32> to vector<16x32xf32>
    %270 = arith.addf %268, %269 : vector<16x32xf32>
    %c1_160 = arith.constant 1 : index
    %c0_161 = arith.constant 0 : index
    %c0_162 = arith.constant 0 : index
    %271 = vector.load %arg3[%c1_160, %c0_161, %c0_162] : memref<2x168x128xf32, #tpu.memory_space<vmem>>, vector<1x32x16xf32>
    %272 = vector.shape_cast %271 : vector<1x32x16xf32> to vector<32x16xf32>
    %cst_163 = arith.constant dense<0.000000e+00> : vector<16x16xf32>
    %273 = tpu.matmul %270, %272, %cst_163 {dimension_numbers = #tpu.dot_dimension_numbers<[1], [0], [0], [1], [0, 0, 1, 1], [], []>} : vector<16x32xf32>, vector<32x16xf32>, vector<16x16xf32> -> vector<16x16xf32>
    %c1_164 = arith.constant 1 : index
    %c160_165 = arith.constant 160 : index
    %c0_166 = arith.constant 0 : index
    %274 = vector.load %arg3[%c1_164, %c160_165, %c0_166] : memref<2x168x128xf32, #tpu.memory_space<vmem>>, vector<1x1x16xf32>
    %275 = vector.shape_cast %274 : vector<1x1x16xf32> to vector<1x16xf32>
    %276 = vector.broadcast %275 : vector<1x16xf32> to vector<16x16xf32>
    %277 = arith.addf %273, %276 : vector<16x16xf32>
    %c1_167 = arith.constant 1 : index
    %c0_168 = arith.constant 0 : index
    %c32_169 = arith.constant 32 : index
    %278 = vector.load %arg3[%c1_167, %c0_168, %c32_169] : memref<2x168x128xf32, #tpu.memory_space<vmem>>, vector<1x32x16xf32>
    %279 = vector.shape_cast %278 : vector<1x32x16xf32> to vector<32x16xf32>
    %cst_170 = arith.constant dense<0.000000e+00> : vector<16x16xf32>
    %280 = tpu.matmul %270, %279, %cst_170 {dimension_numbers = #tpu.dot_dimension_numbers<[1], [0], [0], [1], [0, 0, 1, 1], [], []>} : vector<16x32xf32>, vector<32x16xf32>, vector<16x16xf32> -> vector<16x16xf32>
    %c1_171 = arith.constant 1 : index
    %c160_172 = arith.constant 160 : index
    %c32_173 = arith.constant 32 : index
    %281 = vector.load %arg3[%c1_171, %c160_172, %c32_173] : memref<2x168x128xf32, #tpu.memory_space<vmem>>, vector<1x1x16xf32>
    %282 = vector.shape_cast %281 : vector<1x1x16xf32> to vector<1x16xf32>
    %283 = vector.broadcast %282 : vector<1x16xf32> to vector<16x16xf32>
    %284 = arith.addf %280, %283 : vector<16x16xf32>
    %c1_174 = arith.constant 1 : index
    %c0_175 = arith.constant 0 : index
    %c64_176 = arith.constant 64 : index
    %285 = vector.load %arg3[%c1_174, %c0_175, %c64_176] : memref<2x168x128xf32, #tpu.memory_space<vmem>>, vector<1x32x16xf32>
    %286 = vector.shape_cast %285 : vector<1x32x16xf32> to vector<32x16xf32>
    %cst_177 = arith.constant dense<0.000000e+00> : vector<16x16xf32>
    %287 = tpu.matmul %270, %286, %cst_177 {dimension_numbers = #tpu.dot_dimension_numbers<[1], [0], [0], [1], [0, 0, 1, 1], [], []>} : vector<16x32xf32>, vector<32x16xf32>, vector<16x16xf32> -> vector<16x16xf32>
    %c1_178 = arith.constant 1 : index
    %c160_179 = arith.constant 160 : index
    %c64_180 = arith.constant 64 : index
    %288 = vector.load %arg3[%c1_178, %c160_179, %c64_180] : memref<2x168x128xf32, #tpu.memory_space<vmem>>, vector<1x1x16xf32>
    %289 = vector.shape_cast %288 : vector<1x1x16xf32> to vector<1x16xf32>
    %290 = vector.broadcast %289 : vector<1x16xf32> to vector<16x16xf32>
    %291 = arith.addf %287, %290 : vector<16x16xf32>
    %292 = vector.shape_cast %277 : vector<16x16xf32> to vector<2x8x16xf32>
    %293 = vector.shape_cast %284 : vector<16x16xf32> to vector<2x8x16xf32>
    "tpu.trace_start"() <{level = 10 : i32, message = "bqd,bkd->bqk"}> : () -> ()
    %cst_181 = arith.constant dense<0.000000e+00> : vector<2x8x8xf32>
    %294 = tpu.matmul %292, %293, %cst_181 {dimension_numbers = #tpu.dot_dimension_numbers<[2], [2], [1], [1], [0, 0, 0, 1, 1, 1], [0], [0]>} : vector<2x8x16xf32>, vector<2x8x16xf32>, vector<2x8x8xf32> -> vector<2x8x8xf32>
    "tpu.trace_stop"() : () -> ()
    %295 = arith.addf %294, %3 : vector<2x8x8xf32>
    %cst_182 = arith.constant dense<0xFF800000> : vector<2x8xf32>
    %296 = vector.multi_reduction <maximumf>, %295, %cst_182 [2] : vector<2x8x8xf32> to vector<2x8xf32>
    %297 = vector.shape_cast %296 : vector<2x8xf32> to vector<2x8x1xf32>
    %298 = vector.broadcast %297 : vector<2x8x1xf32> to vector<2x8x8xf32>
    %299 = arith.subf %295, %298 : vector<2x8x8xf32>
    %300 = math.exp %299 : vector<2x8x8xf32>
    %cst_183 = arith.constant dense<0.000000e+00> : vector<2x8xf32>
    %301 = vector.multi_reduction <add>, %300, %cst_183 [2] : vector<2x8x8xf32> to vector<2x8xf32>
    %302 = vector.shape_cast %301 : vector<2x8xf32> to vector<2x8x1xf32>
    %303 = tpu.reciprocal %302 {approx = true} : vector<2x8x1xf32> -> vector<2x8x1xf32>
    %304 = vector.broadcast %303 : vector<2x8x1xf32> to vector<2x8x8xf32>
    %305 = arith.mulf %300, %304 : vector<2x8x8xf32>
    %306 = vector.shape_cast %291 : vector<16x16xf32> to vector<2x8x16xf32>
    "tpu.trace_start"() <{level = 10 : i32, message = "bqk,bkv->bqv"}> : () -> ()
    %cst_184 = arith.constant dense<0.000000e+00> : vector<2x8x16xf32>
    %307 = tpu.matmul %305, %306, %cst_184 {dimension_numbers = #tpu.dot_dimension_numbers<[2], [1], [1], [2], [0, 0, 0, 1, 1, 2], [0], [0]>} : vector<2x8x8xf32>, vector<2x8x16xf32>, vector<2x8x16xf32> -> vector<2x8x16xf32>
    "tpu.trace_stop"() : () -> ()
    %308 = vector.shape_cast %307 : vector<2x8x16xf32> to vector<16x16xf32>
    %c1_185 = arith.constant 1 : index
    %c0_186 = arith.constant 0 : index
    %c16_187 = arith.constant 16 : index
    %309 = vector.load %arg3[%c1_185, %c0_186, %c16_187] : memref<2x168x128xf32, #tpu.memory_space<vmem>>, vector<1x32x16xf32>
    %310 = vector.shape_cast %309 : vector<1x32x16xf32> to vector<32x16xf32>
    %cst_188 = arith.constant dense<0.000000e+00> : vector<16x16xf32>
    %311 = tpu.matmul %270, %310, %cst_188 {dimension_numbers = #tpu.dot_dimension_numbers<[1], [0], [0], [1], [0, 0, 1, 1], [], []>} : vector<16x32xf32>, vector<32x16xf32>, vector<16x16xf32> -> vector<16x16xf32>
    %c1_189 = arith.constant 1 : index
    %c160_190 = arith.constant 160 : index
    %c16_191 = arith.constant 16 : index
    %312 = vector.load %arg3[%c1_189, %c160_190, %c16_191] : memref<2x168x128xf32, #tpu.memory_space<vmem>>, vector<1x1x16xf32>
    %313 = vector.shape_cast %312 : vector<1x1x16xf32> to vector<1x16xf32>
    %314 = vector.broadcast %313 : vector<1x16xf32> to vector<16x16xf32>
    %315 = arith.addf %311, %314 : vector<16x16xf32>
    %c1_192 = arith.constant 1 : index
    %c0_193 = arith.constant 0 : index
    %c48_194 = arith.constant 48 : index
    %316 = vector.load %arg3[%c1_192, %c0_193, %c48_194] : memref<2x168x128xf32, #tpu.memory_space<vmem>>, vector<1x32x16xf32>
    %317 = vector.shape_cast %316 : vector<1x32x16xf32> to vector<32x16xf32>
    %cst_195 = arith.constant dense<0.000000e+00> : vector<16x16xf32>
    %318 = tpu.matmul %270, %317, %cst_195 {dimension_numbers = #tpu.dot_dimension_numbers<[1], [0], [0], [1], [0, 0, 1, 1], [], []>} : vector<16x32xf32>, vector<32x16xf32>, vector<16x16xf32> -> vector<16x16xf32>
    %c1_196 = arith.constant 1 : index
    %c160_197 = arith.constant 160 : index
    %c48_198 = arith.constant 48 : index
    %319 = vector.load %arg3[%c1_196, %c160_197, %c48_198] : memref<2x168x128xf32, #tpu.memory_space<vmem>>, vector<1x1x16xf32>
    %320 = vector.shape_cast %319 : vector<1x1x16xf32> to vector<1x16xf32>
    %321 = vector.broadcast %320 : vector<1x16xf32> to vector<16x16xf32>
    %322 = arith.addf %318, %321 : vector<16x16xf32>
    %c1_199 = arith.constant 1 : index
    %c0_200 = arith.constant 0 : index
    %c80_201 = arith.constant 80 : index
    %323 = vector.load %arg3[%c1_199, %c0_200, %c80_201] : memref<2x168x128xf32, #tpu.memory_space<vmem>>, vector<1x32x16xf32>
    %324 = vector.shape_cast %323 : vector<1x32x16xf32> to vector<32x16xf32>
    %cst_202 = arith.constant dense<0.000000e+00> : vector<16x16xf32>
    %325 = tpu.matmul %270, %324, %cst_202 {dimension_numbers = #tpu.dot_dimension_numbers<[1], [0], [0], [1], [0, 0, 1, 1], [], []>} : vector<16x32xf32>, vector<32x16xf32>, vector<16x16xf32> -> vector<16x16xf32>
    %c1_203 = arith.constant 1 : index
    %c160_204 = arith.constant 160 : index
    %c80_205 = arith.constant 80 : index
    %326 = vector.load %arg3[%c1_203, %c160_204, %c80_205] : memref<2x168x128xf32, #tpu.memory_space<vmem>>, vector<1x1x16xf32>
    %327 = vector.shape_cast %326 : vector<1x1x16xf32> to vector<1x16xf32>
    %328 = vector.broadcast %327 : vector<1x16xf32> to vector<16x16xf32>
    %329 = arith.addf %325, %328 : vector<16x16xf32>
    %330 = vector.shape_cast %315 : vector<16x16xf32> to vector<2x8x16xf32>
    %331 = vector.shape_cast %322 : vector<16x16xf32> to vector<2x8x16xf32>
    "tpu.trace_start"() <{level = 10 : i32, message = "bqd,bkd->bqk"}> : () -> ()
    %cst_206 = arith.constant dense<0.000000e+00> : vector<2x8x8xf32>
    %332 = tpu.matmul %330, %331, %cst_206 {dimension_numbers = #tpu.dot_dimension_numbers<[2], [2], [1], [1], [0, 0, 0, 1, 1, 1], [0], [0]>} : vector<2x8x16xf32>, vector<2x8x16xf32>, vector<2x8x8xf32> -> vector<2x8x8xf32>
    "tpu.trace_stop"() : () -> ()
    %333 = arith.addf %332, %3 : vector<2x8x8xf32>
    %cst_207 = arith.constant dense<0xFF800000> : vector<2x8xf32>
    %334 = vector.multi_reduction <maximumf>, %333, %cst_207 [2] : vector<2x8x8xf32> to vector<2x8xf32>
    %335 = vector.shape_cast %334 : vector<2x8xf32> to vector<2x8x1xf32>
    %336 = vector.broadcast %335 : vector<2x8x1xf32> to vector<2x8x8xf32>
    %337 = arith.subf %333, %336 : vector<2x8x8xf32>
    %338 = math.exp %337 : vector<2x8x8xf32>
    %cst_208 = arith.constant dense<0.000000e+00> : vector<2x8xf32>
    %339 = vector.multi_reduction <add>, %338, %cst_208 [2] : vector<2x8x8xf32> to vector<2x8xf32>
    %340 = vector.shape_cast %339 : vector<2x8xf32> to vector<2x8x1xf32>
    %341 = tpu.reciprocal %340 {approx = true} : vector<2x8x1xf32> -> vector<2x8x1xf32>
    %342 = vector.broadcast %341 : vector<2x8x1xf32> to vector<2x8x8xf32>
    %343 = arith.mulf %338, %342 : vector<2x8x8xf32>
    %344 = vector.shape_cast %329 : vector<16x16xf32> to vector<2x8x16xf32>
    "tpu.trace_start"() <{level = 10 : i32, message = "bqk,bkv->bqv"}> : () -> ()
    %cst_209 = arith.constant dense<0.000000e+00> : vector<2x8x16xf32>
    %345 = tpu.matmul %343, %344, %cst_209 {dimension_numbers = #tpu.dot_dimension_numbers<[2], [1], [1], [2], [0, 0, 0, 1, 1, 2], [0], [0]>} : vector<2x8x8xf32>, vector<2x8x16xf32>, vector<2x8x16xf32> -> vector<2x8x16xf32>
    "tpu.trace_stop"() : () -> ()
    %346 = vector.shape_cast %345 : vector<2x8x16xf32> to vector<16x16xf32>
    %347 = tpu.concatenate %308, %346 in 1 : vector<16x16xf32>, vector<16x16xf32> -> vector<16x32xf32>
    %c1_210 = arith.constant 1 : index
    %c0_211 = arith.constant 0 : index
    %c96_212 = arith.constant 96 : index
    %348 = vector.load %arg3[%c1_210, %c0_211, %c96_212] : memref<2x168x128xf32, #tpu.memory_space<vmem>>, vector<1x32x32xf32>
    %349 = vector.shape_cast %348 : vector<1x32x32xf32> to vector<32x32xf32>
    %cst_213 = arith.constant dense<0.000000e+00> : vector<16x32xf32>
    %350 = tpu.matmul %347, %349, %cst_213 {dimension_numbers = #tpu.dot_dimension_numbers<[1], [0], [0], [1], [0, 0, 1, 1], [], []>} : vector<16x32xf32>, vector<32x32xf32>, vector<16x32xf32> -> vector<16x32xf32>
    %c1_214 = arith.constant 1 : index
    %c160_215 = arith.constant 160 : index
    %c96_216 = arith.constant 96 : index
    %351 = vector.load %arg3[%c1_214, %c160_215, %c96_216] : memref<2x168x128xf32, #tpu.memory_space<vmem>>, vector<1x1x32xf32>
    %352 = vector.shape_cast %351 : vector<1x1x32xf32> to vector<1x32xf32>
    %353 = vector.broadcast %352 : vector<1x32xf32> to vector<16x32xf32>
    %354 = arith.addf %350, %353 : vector<16x32xf32>
    %355 = arith.addf %354, %270 : vector<16x32xf32>
    %c1_217 = arith.constant 1 : index
    %c163_218 = arith.constant 163 : index
    %c0_219 = arith.constant 0 : index
    %356 = vector.load %arg3[%c1_217, %c163_218, %c0_219] : memref<2x168x128xf32, #tpu.memory_space<vmem>>, vector<1x1x32xf32>
    %357 = vector.shape_cast %356 : vector<1x1x32xf32> to vector<1x32xf32>
    %c1_220 = arith.constant 1 : index
    %c163_221 = arith.constant 163 : index
    %c32_222 = arith.constant 32 : index
    %358 = vector.load %arg3[%c1_220, %c163_221, %c32_222] : memref<2x168x128xf32, #tpu.memory_space<vmem>>, vector<1x1x32xf32>
    %359 = vector.shape_cast %358 : vector<1x1x32xf32> to vector<1x32xf32>
    %cst_223 = arith.constant dense<0.000000e+00> : vector<16xf32>
    %360 = vector.multi_reduction <add>, %355, %cst_223 [1] : vector<16x32xf32> to vector<16xf32>
    %361 = vector.shape_cast %360 : vector<16xf32> to vector<16x1xf32>
    %cst_224 = arith.constant 3.200000e+01 : f32
    %362 = vector.broadcast %cst_224 : f32 to vector<16x1xf32>
    %363 = arith.divf %361, %362 : vector<16x1xf32>
    %364 = vector.broadcast %363 : vector<16x1xf32> to vector<16x32xf32>
    %365 = arith.subf %355, %364 : vector<16x32xf32>
    %366 = arith.mulf %365, %365 : vector<16x32xf32>
    %cst_225 = arith.constant dense<0.000000e+00> : vector<16xf32>
    %367 = vector.multi_reduction <add>, %366, %cst_225 [1] : vector<16x32xf32> to vector<16xf32>
    %368 = vector.shape_cast %367 : vector<16xf32> to vector<16x1xf32>
    %cst_226 = arith.constant 3.200000e+01 : f32
    %369 = vector.broadcast %cst_226 : f32 to vector<16x1xf32>
    %370 = arith.divf %368, %369 : vector<16x1xf32>
    %371 = vector.broadcast %363 : vector<16x1xf32> to vector<16x32xf32>
    %372 = arith.subf %355, %371 : vector<16x32xf32>
    %cst_227 = arith.constant 9.99999974E-6 : f32
    %373 = vector.broadcast %cst_227 : f32 to vector<16x1xf32>
    %374 = arith.addf %370, %373 : vector<16x1xf32>
    %375 = math.rsqrt %374 : vector<16x1xf32>
    %376 = vector.broadcast %375 : vector<16x1xf32> to vector<16x32xf32>
    %377 = arith.mulf %372, %376 : vector<16x32xf32>
    %378 = vector.broadcast %357 : vector<1x32xf32> to vector<16x32xf32>
    %379 = arith.mulf %377, %378 : vector<16x32xf32>
    %380 = vector.broadcast %359 : vector<1x32xf32> to vector<16x32xf32>
    %381 = arith.addf %379, %380 : vector<16x32xf32>
    %c1_228 = arith.constant 1 : index
    %c32_229 = arith.constant 32 : index
    %c0_230 = arith.constant 0 : index
    %382 = vector.load %arg3[%c1_228, %c32_229, %c0_230] : memref<2x168x128xf32, #tpu.memory_space<vmem>>, vector<1x32x16xf32>
    %383 = vector.shape_cast %382 : vector<1x32x16xf32> to vector<32x16xf32>
    %cst_231 = arith.constant dense<0.000000e+00> : vector<16x16xf32>
    %384 = tpu.matmul %381, %383, %cst_231 {dimension_numbers = #tpu.dot_dimension_numbers<[1], [0], [0], [1], [0, 0, 1, 1], [], []>} : vector<16x32xf32>, vector<32x16xf32>, vector<16x16xf32> -> vector<16x16xf32>
    %c1_232 = arith.constant 1 : index
    %c161_233 = arith.constant 161 : index
    %c0_234 = arith.constant 0 : index
    %385 = vector.load %arg3[%c1_232, %c161_233, %c0_234] : memref<2x168x128xf32, #tpu.memory_space<vmem>>, vector<1x1x16xf32>
    %386 = vector.shape_cast %385 : vector<1x1x16xf32> to vector<1x16xf32>
    %387 = vector.broadcast %386 : vector<1x16xf32> to vector<16x16xf32>
    %388 = arith.addf %384, %387 : vector<16x16xf32>
    %c1_235 = arith.constant 1 : index
    %c32_236 = arith.constant 32 : index
    %c32_237 = arith.constant 32 : index
    %389 = vector.load %arg3[%c1_235, %c32_236, %c32_237] : memref<2x168x128xf32, #tpu.memory_space<vmem>>, vector<1x32x16xf32>
    %390 = vector.shape_cast %389 : vector<1x32x16xf32> to vector<32x16xf32>
    %cst_238 = arith.constant dense<0.000000e+00> : vector<16x16xf32>
    %391 = tpu.matmul %1, %390, %cst_238 {dimension_numbers = #tpu.dot_dimension_numbers<[1], [0], [0], [1], [0, 0, 1, 1], [], []>} : vector<16x32xf32>, vector<32x16xf32>, vector<16x16xf32> -> vector<16x16xf32>
    %c1_239 = arith.constant 1 : index
    %c161_240 = arith.constant 161 : index
    %c32_241 = arith.constant 32 : index
    %392 = vector.load %arg3[%c1_239, %c161_240, %c32_241] : memref<2x168x128xf32, #tpu.memory_space<vmem>>, vector<1x1x16xf32>
    %393 = vector.shape_cast %392 : vector<1x1x16xf32> to vector<1x16xf32>
    %394 = vector.broadcast %393 : vector<1x16xf32> to vector<16x16xf32>
    %395 = arith.addf %391, %394 : vector<16x16xf32>
    %c1_242 = arith.constant 1 : index
    %c32_243 = arith.constant 32 : index
    %c64_244 = arith.constant 64 : index
    %396 = vector.load %arg3[%c1_242, %c32_243, %c64_244] : memref<2x168x128xf32, #tpu.memory_space<vmem>>, vector<1x32x16xf32>
    %397 = vector.shape_cast %396 : vector<1x32x16xf32> to vector<32x16xf32>
    %cst_245 = arith.constant dense<0.000000e+00> : vector<16x16xf32>
    %398 = tpu.matmul %1, %397, %cst_245 {dimension_numbers = #tpu.dot_dimension_numbers<[1], [0], [0], [1], [0, 0, 1, 1], [], []>} : vector<16x32xf32>, vector<32x16xf32>, vector<16x16xf32> -> vector<16x16xf32>
    %c1_246 = arith.constant 1 : index
    %c161_247 = arith.constant 161 : index
    %c64_248 = arith.constant 64 : index
    %399 = vector.load %arg3[%c1_246, %c161_247, %c64_248] : memref<2x168x128xf32, #tpu.memory_space<vmem>>, vector<1x1x16xf32>
    %400 = vector.shape_cast %399 : vector<1x1x16xf32> to vector<1x16xf32>
    %401 = vector.broadcast %400 : vector<1x16xf32> to vector<16x16xf32>
    %402 = arith.addf %398, %401 : vector<16x16xf32>
    %403 = vector.shape_cast %388 : vector<16x16xf32> to vector<2x8x16xf32>
    %404 = vector.shape_cast %395 : vector<16x16xf32> to vector<2x8x16xf32>
    "tpu.trace_start"() <{level = 10 : i32, message = "bqd,bkd->bqk"}> : () -> ()
    %cst_249 = arith.constant dense<0.000000e+00> : vector<2x8x8xf32>
    %405 = tpu.matmul %403, %404, %cst_249 {dimension_numbers = #tpu.dot_dimension_numbers<[2], [2], [1], [1], [0, 0, 0, 1, 1, 1], [0], [0]>} : vector<2x8x16xf32>, vector<2x8x16xf32>, vector<2x8x8xf32> -> vector<2x8x8xf32>
    "tpu.trace_stop"() : () -> ()
    %406 = arith.addf %405, %5 : vector<2x8x8xf32>
    %cst_250 = arith.constant dense<0xFF800000> : vector<2x8xf32>
    %407 = vector.multi_reduction <maximumf>, %406, %cst_250 [2] : vector<2x8x8xf32> to vector<2x8xf32>
    %408 = vector.shape_cast %407 : vector<2x8xf32> to vector<2x8x1xf32>
    %409 = vector.broadcast %408 : vector<2x8x1xf32> to vector<2x8x8xf32>
    %410 = arith.subf %406, %409 : vector<2x8x8xf32>
    %411 = math.exp %410 : vector<2x8x8xf32>
    %cst_251 = arith.constant dense<0.000000e+00> : vector<2x8xf32>
    %412 = vector.multi_reduction <add>, %411, %cst_251 [2] : vector<2x8x8xf32> to vector<2x8xf32>
    %413 = vector.shape_cast %412 : vector<2x8xf32> to vector<2x8x1xf32>
    %414 = tpu.reciprocal %413 {approx = true} : vector<2x8x1xf32> -> vector<2x8x1xf32>
    %415 = vector.broadcast %414 : vector<2x8x1xf32> to vector<2x8x8xf32>
    %416 = arith.mulf %411, %415 : vector<2x8x8xf32>
    %417 = vector.shape_cast %402 : vector<16x16xf32> to vector<2x8x16xf32>
    "tpu.trace_start"() <{level = 10 : i32, message = "bqk,bkv->bqv"}> : () -> ()
    %cst_252 = arith.constant dense<0.000000e+00> : vector<2x8x16xf32>
    %418 = tpu.matmul %416, %417, %cst_252 {dimension_numbers = #tpu.dot_dimension_numbers<[2], [1], [1], [2], [0, 0, 0, 1, 1, 2], [0], [0]>} : vector<2x8x8xf32>, vector<2x8x16xf32>, vector<2x8x16xf32> -> vector<2x8x16xf32>
    "tpu.trace_stop"() : () -> ()
    %419 = vector.shape_cast %418 : vector<2x8x16xf32> to vector<16x16xf32>
    %c1_253 = arith.constant 1 : index
    %c32_254 = arith.constant 32 : index
    %c16_255 = arith.constant 16 : index
    %420 = vector.load %arg3[%c1_253, %c32_254, %c16_255] : memref<2x168x128xf32, #tpu.memory_space<vmem>>, vector<1x32x16xf32>
    %421 = vector.shape_cast %420 : vector<1x32x16xf32> to vector<32x16xf32>
    %cst_256 = arith.constant dense<0.000000e+00> : vector<16x16xf32>
    %422 = tpu.matmul %381, %421, %cst_256 {dimension_numbers = #tpu.dot_dimension_numbers<[1], [0], [0], [1], [0, 0, 1, 1], [], []>} : vector<16x32xf32>, vector<32x16xf32>, vector<16x16xf32> -> vector<16x16xf32>
    %c1_257 = arith.constant 1 : index
    %c161_258 = arith.constant 161 : index
    %c16_259 = arith.constant 16 : index
    %423 = vector.load %arg3[%c1_257, %c161_258, %c16_259] : memref<2x168x128xf32, #tpu.memory_space<vmem>>, vector<1x1x16xf32>
    %424 = vector.shape_cast %423 : vector<1x1x16xf32> to vector<1x16xf32>
    %425 = vector.broadcast %424 : vector<1x16xf32> to vector<16x16xf32>
    %426 = arith.addf %422, %425 : vector<16x16xf32>
    %c1_260 = arith.constant 1 : index
    %c32_261 = arith.constant 32 : index
    %c48_262 = arith.constant 48 : index
    %427 = vector.load %arg3[%c1_260, %c32_261, %c48_262] : memref<2x168x128xf32, #tpu.memory_space<vmem>>, vector<1x32x16xf32>
    %428 = vector.shape_cast %427 : vector<1x32x16xf32> to vector<32x16xf32>
    %cst_263 = arith.constant dense<0.000000e+00> : vector<16x16xf32>
    %429 = tpu.matmul %1, %428, %cst_263 {dimension_numbers = #tpu.dot_dimension_numbers<[1], [0], [0], [1], [0, 0, 1, 1], [], []>} : vector<16x32xf32>, vector<32x16xf32>, vector<16x16xf32> -> vector<16x16xf32>
    %c1_264 = arith.constant 1 : index
    %c161_265 = arith.constant 161 : index
    %c48_266 = arith.constant 48 : index
    %430 = vector.load %arg3[%c1_264, %c161_265, %c48_266] : memref<2x168x128xf32, #tpu.memory_space<vmem>>, vector<1x1x16xf32>
    %431 = vector.shape_cast %430 : vector<1x1x16xf32> to vector<1x16xf32>
    %432 = vector.broadcast %431 : vector<1x16xf32> to vector<16x16xf32>
    %433 = arith.addf %429, %432 : vector<16x16xf32>
    %c1_267 = arith.constant 1 : index
    %c32_268 = arith.constant 32 : index
    %c80_269 = arith.constant 80 : index
    %434 = vector.load %arg3[%c1_267, %c32_268, %c80_269] : memref<2x168x128xf32, #tpu.memory_space<vmem>>, vector<1x32x16xf32>
    %435 = vector.shape_cast %434 : vector<1x32x16xf32> to vector<32x16xf32>
    %cst_270 = arith.constant dense<0.000000e+00> : vector<16x16xf32>
    %436 = tpu.matmul %1, %435, %cst_270 {dimension_numbers = #tpu.dot_dimension_numbers<[1], [0], [0], [1], [0, 0, 1, 1], [], []>} : vector<16x32xf32>, vector<32x16xf32>, vector<16x16xf32> -> vector<16x16xf32>
    %c1_271 = arith.constant 1 : index
    %c161_272 = arith.constant 161 : index
    %c80_273 = arith.constant 80 : index
    %437 = vector.load %arg3[%c1_271, %c161_272, %c80_273] : memref<2x168x128xf32, #tpu.memory_space<vmem>>, vector<1x1x16xf32>
    %438 = vector.shape_cast %437 : vector<1x1x16xf32> to vector<1x16xf32>
    %439 = vector.broadcast %438 : vector<1x16xf32> to vector<16x16xf32>
    %440 = arith.addf %436, %439 : vector<16x16xf32>
    %441 = vector.shape_cast %426 : vector<16x16xf32> to vector<2x8x16xf32>
    %442 = vector.shape_cast %433 : vector<16x16xf32> to vector<2x8x16xf32>
    "tpu.trace_start"() <{level = 10 : i32, message = "bqd,bkd->bqk"}> : () -> ()
    %cst_274 = arith.constant dense<0.000000e+00> : vector<2x8x8xf32>
    %443 = tpu.matmul %441, %442, %cst_274 {dimension_numbers = #tpu.dot_dimension_numbers<[2], [2], [1], [1], [0, 0, 0, 1, 1, 1], [0], [0]>} : vector<2x8x16xf32>, vector<2x8x16xf32>, vector<2x8x8xf32> -> vector<2x8x8xf32>
    "tpu.trace_stop"() : () -> ()
    %444 = arith.addf %443, %5 : vector<2x8x8xf32>
    %cst_275 = arith.constant dense<0xFF800000> : vector<2x8xf32>
    %445 = vector.multi_reduction <maximumf>, %444, %cst_275 [2] : vector<2x8x8xf32> to vector<2x8xf32>
    %446 = vector.shape_cast %445 : vector<2x8xf32> to vector<2x8x1xf32>
    %447 = vector.broadcast %446 : vector<2x8x1xf32> to vector<2x8x8xf32>
    %448 = arith.subf %444, %447 : vector<2x8x8xf32>
    %449 = math.exp %448 : vector<2x8x8xf32>
    %cst_276 = arith.constant dense<0.000000e+00> : vector<2x8xf32>
    %450 = vector.multi_reduction <add>, %449, %cst_276 [2] : vector<2x8x8xf32> to vector<2x8xf32>
    %451 = vector.shape_cast %450 : vector<2x8xf32> to vector<2x8x1xf32>
    %452 = tpu.reciprocal %451 {approx = true} : vector<2x8x1xf32> -> vector<2x8x1xf32>
    %453 = vector.broadcast %452 : vector<2x8x1xf32> to vector<2x8x8xf32>
    %454 = arith.mulf %449, %453 : vector<2x8x8xf32>
    %455 = vector.shape_cast %440 : vector<16x16xf32> to vector<2x8x16xf32>
    "tpu.trace_start"() <{level = 10 : i32, message = "bqk,bkv->bqv"}> : () -> ()
    %cst_277 = arith.constant dense<0.000000e+00> : vector<2x8x16xf32>
    %456 = tpu.matmul %454, %455, %cst_277 {dimension_numbers = #tpu.dot_dimension_numbers<[2], [1], [1], [2], [0, 0, 0, 1, 1, 2], [0], [0]>} : vector<2x8x8xf32>, vector<2x8x16xf32>, vector<2x8x16xf32> -> vector<2x8x16xf32>
    "tpu.trace_stop"() : () -> ()
    %457 = vector.shape_cast %456 : vector<2x8x16xf32> to vector<16x16xf32>
    %458 = tpu.concatenate %419, %457 in 1 : vector<16x16xf32>, vector<16x16xf32> -> vector<16x32xf32>
    %c1_278 = arith.constant 1 : index
    %c32_279 = arith.constant 32 : index
    %c96_280 = arith.constant 96 : index
    %459 = vector.load %arg3[%c1_278, %c32_279, %c96_280] : memref<2x168x128xf32, #tpu.memory_space<vmem>>, vector<1x32x32xf32>
    %460 = vector.shape_cast %459 : vector<1x32x32xf32> to vector<32x32xf32>
    %cst_281 = arith.constant dense<0.000000e+00> : vector<16x32xf32>
    %461 = tpu.matmul %458, %460, %cst_281 {dimension_numbers = #tpu.dot_dimension_numbers<[1], [0], [0], [1], [0, 0, 1, 1], [], []>} : vector<16x32xf32>, vector<32x32xf32>, vector<16x32xf32> -> vector<16x32xf32>
    %c1_282 = arith.constant 1 : index
    %c161_283 = arith.constant 161 : index
    %c96_284 = arith.constant 96 : index
    %462 = vector.load %arg3[%c1_282, %c161_283, %c96_284] : memref<2x168x128xf32, #tpu.memory_space<vmem>>, vector<1x1x32xf32>
    %463 = vector.shape_cast %462 : vector<1x1x32xf32> to vector<1x32xf32>
    %464 = vector.broadcast %463 : vector<1x32xf32> to vector<16x32xf32>
    %465 = arith.addf %461, %464 : vector<16x32xf32>
    %466 = arith.addf %465, %381 : vector<16x32xf32>
    %c1_285 = arith.constant 1 : index
    %c163_286 = arith.constant 163 : index
    %c64_287 = arith.constant 64 : index
    %467 = vector.load %arg3[%c1_285, %c163_286, %c64_287] : memref<2x168x128xf32, #tpu.memory_space<vmem>>, vector<1x1x32xf32>
    %468 = vector.shape_cast %467 : vector<1x1x32xf32> to vector<1x32xf32>
    %c1_288 = arith.constant 1 : index
    %c163_289 = arith.constant 163 : index
    %c96_290 = arith.constant 96 : index
    %469 = vector.load %arg3[%c1_288, %c163_289, %c96_290] : memref<2x168x128xf32, #tpu.memory_space<vmem>>, vector<1x1x32xf32>
    %470 = vector.shape_cast %469 : vector<1x1x32xf32> to vector<1x32xf32>
    %cst_291 = arith.constant dense<0.000000e+00> : vector<16xf32>
    %471 = vector.multi_reduction <add>, %466, %cst_291 [1] : vector<16x32xf32> to vector<16xf32>
    %472 = vector.shape_cast %471 : vector<16xf32> to vector<16x1xf32>
    %cst_292 = arith.constant 3.200000e+01 : f32
    %473 = vector.broadcast %cst_292 : f32 to vector<16x1xf32>
    %474 = arith.divf %472, %473 : vector<16x1xf32>
    %475 = vector.broadcast %474 : vector<16x1xf32> to vector<16x32xf32>
    %476 = arith.subf %466, %475 : vector<16x32xf32>
    %477 = arith.mulf %476, %476 : vector<16x32xf32>
    %cst_293 = arith.constant dense<0.000000e+00> : vector<16xf32>
    %478 = vector.multi_reduction <add>, %477, %cst_293 [1] : vector<16x32xf32> to vector<16xf32>
    %479 = vector.shape_cast %478 : vector<16xf32> to vector<16x1xf32>
    %cst_294 = arith.constant 3.200000e+01 : f32
    %480 = vector.broadcast %cst_294 : f32 to vector<16x1xf32>
    %481 = arith.divf %479, %480 : vector<16x1xf32>
    %482 = vector.broadcast %474 : vector<16x1xf32> to vector<16x32xf32>
    %483 = arith.subf %466, %482 : vector<16x32xf32>
    %cst_295 = arith.constant 9.99999974E-6 : f32
    %484 = vector.broadcast %cst_295 : f32 to vector<16x1xf32>
    %485 = arith.addf %481, %484 : vector<16x1xf32>
    %486 = math.rsqrt %485 : vector<16x1xf32>
    %487 = vector.broadcast %486 : vector<16x1xf32> to vector<16x32xf32>
    %488 = arith.mulf %483, %487 : vector<16x32xf32>
    %489 = vector.broadcast %468 : vector<1x32xf32> to vector<16x32xf32>
    %490 = arith.mulf %488, %489 : vector<16x32xf32>
    %491 = vector.broadcast %470 : vector<1x32xf32> to vector<16x32xf32>
    %492 = arith.addf %490, %491 : vector<16x32xf32>
    %c1_296 = arith.constant 1 : index
    %c64_297 = arith.constant 64 : index
    %c0_298 = arith.constant 0 : index
    %493 = vector.load %arg3[%c1_296, %c64_297, %c0_298] : memref<2x168x128xf32, #tpu.memory_space<vmem>>, vector<1x32x64xf32>
    %494 = vector.shape_cast %493 : vector<1x32x64xf32> to vector<32x64xf32>
    %cst_299 = arith.constant dense<0.000000e+00> : vector<16x64xf32>
    %495 = tpu.matmul %492, %494, %cst_299 {dimension_numbers = #tpu.dot_dimension_numbers<[1], [0], [0], [1], [0, 0, 1, 1], [], []>} : vector<16x32xf32>, vector<32x64xf32>, vector<16x64xf32> -> vector<16x64xf32>
    %c1_300 = arith.constant 1 : index
    %c162_301 = arith.constant 162 : index
    %c0_302 = arith.constant 0 : index
    %496 = vector.load %arg3[%c1_300, %c162_301, %c0_302] : memref<2x168x128xf32, #tpu.memory_space<vmem>>, vector<1x1x64xf32>
    %497 = vector.shape_cast %496 : vector<1x1x64xf32> to vector<1x64xf32>
    %498 = vector.broadcast %497 : vector<1x64xf32> to vector<16x64xf32>
    %499 = arith.addf %495, %498 : vector<16x64xf32>
    %cst_303 = arith.constant 0.000000e+00 : f32
    %500 = vector.broadcast %cst_303 : f32 to vector<16x64xf32>
    %501 = arith.maximumf %499, %500 : vector<16x64xf32>
    %c1_304 = arith.constant 1 : index
    %c96_305 = arith.constant 96 : index
    %c0_306 = arith.constant 0 : index
    %502 = vector.load %arg3[%c1_304, %c96_305, %c0_306] : memref<2x168x128xf32, #tpu.memory_space<vmem>>, vector<1x64x32xf32>
    %503 = vector.shape_cast %502 : vector<1x64x32xf32> to vector<64x32xf32>
    %cst_307 = arith.constant dense<0.000000e+00> : vector<16x32xf32>
    %504 = tpu.matmul %501, %503, %cst_307 {dimension_numbers = #tpu.dot_dimension_numbers<[1], [0], [0], [1], [0, 0, 1, 1], [], []>} : vector<16x64xf32>, vector<64x32xf32>, vector<16x32xf32> -> vector<16x32xf32>
    %c1_308 = arith.constant 1 : index
    %c162_309 = arith.constant 162 : index
    %c64_310 = arith.constant 64 : index
    %505 = vector.load %arg3[%c1_308, %c162_309, %c64_310] : memref<2x168x128xf32, #tpu.memory_space<vmem>>, vector<1x1x32xf32>
    %506 = vector.shape_cast %505 : vector<1x1x32xf32> to vector<1x32xf32>
    %507 = vector.broadcast %506 : vector<1x32xf32> to vector<16x32xf32>
    %508 = arith.addf %504, %507 : vector<16x32xf32>
    %509 = arith.addf %508, %492 : vector<16x32xf32>
    %c1_311 = arith.constant 1 : index
    %c164_312 = arith.constant 164 : index
    %c0_313 = arith.constant 0 : index
    %510 = vector.load %arg3[%c1_311, %c164_312, %c0_313] : memref<2x168x128xf32, #tpu.memory_space<vmem>>, vector<1x1x32xf32>
    %511 = vector.shape_cast %510 : vector<1x1x32xf32> to vector<1x32xf32>
    %c1_314 = arith.constant 1 : index
    %c164_315 = arith.constant 164 : index
    %c32_316 = arith.constant 32 : index
    %512 = vector.load %arg3[%c1_314, %c164_315, %c32_316] : memref<2x168x128xf32, #tpu.memory_space<vmem>>, vector<1x1x32xf32>
    %513 = vector.shape_cast %512 : vector<1x1x32xf32> to vector<1x32xf32>
    %cst_317 = arith.constant dense<0.000000e+00> : vector<16xf32>
    %514 = vector.multi_reduction <add>, %509, %cst_317 [1] : vector<16x32xf32> to vector<16xf32>
    %515 = vector.shape_cast %514 : vector<16xf32> to vector<16x1xf32>
    %cst_318 = arith.constant 3.200000e+01 : f32
    %516 = vector.broadcast %cst_318 : f32 to vector<16x1xf32>
    %517 = arith.divf %515, %516 : vector<16x1xf32>
    %518 = vector.broadcast %517 : vector<16x1xf32> to vector<16x32xf32>
    %519 = arith.subf %509, %518 : vector<16x32xf32>
    %520 = arith.mulf %519, %519 : vector<16x32xf32>
    %cst_319 = arith.constant dense<0.000000e+00> : vector<16xf32>
    %521 = vector.multi_reduction <add>, %520, %cst_319 [1] : vector<16x32xf32> to vector<16xf32>
    %522 = vector.shape_cast %521 : vector<16xf32> to vector<16x1xf32>
    %cst_320 = arith.constant 3.200000e+01 : f32
    %523 = vector.broadcast %cst_320 : f32 to vector<16x1xf32>
    %524 = arith.divf %522, %523 : vector<16x1xf32>
    %525 = vector.broadcast %517 : vector<16x1xf32> to vector<16x32xf32>
    %526 = arith.subf %509, %525 : vector<16x32xf32>
    %cst_321 = arith.constant 9.99999974E-6 : f32
    %527 = vector.broadcast %cst_321 : f32 to vector<16x1xf32>
    %528 = arith.addf %524, %527 : vector<16x1xf32>
    %529 = math.rsqrt %528 : vector<16x1xf32>
    %530 = vector.broadcast %529 : vector<16x1xf32> to vector<16x32xf32>
    %531 = arith.mulf %526, %530 : vector<16x32xf32>
    %532 = vector.broadcast %511 : vector<1x32xf32> to vector<16x32xf32>
    %533 = arith.mulf %531, %532 : vector<16x32xf32>
    %534 = vector.broadcast %513 : vector<1x32xf32> to vector<16x32xf32>
    %535 = arith.addf %533, %534 : vector<16x32xf32>
    %c0_322 = arith.constant 0 : index
    %c0_323 = arith.constant 0 : index
    %536 = vector.load %arg4[%c0_322, %c0_323] : memref<16x32xf32, #tpu.memory_space<vmem>>, vector<16x32xf32>
    tpu.vector_store %arg4[%c0_322, %c0_323], %535 {strides = array<i32>} : memref<16x32xf32, #tpu.memory_space<vmem>>, vector<16x32xf32>,
    return
  }
  func.func @transform_0(%arg0: i32) -> (i32, i32) {
    %c0_i32 = arith.constant 0 : i32
    %c0_i32_0 = arith.constant 0 : i32
    %c0_i32_1 = arith.constant 0 : i32
    return %c0_i32, %c0_i32_0 : i32, i32
  }
  func.func @transform_1(%arg0: i32) -> (i32, i32, i32, i32) {
    %c0_i32 = arith.constant 0 : i32
    %c0_i32_0 = arith.constant 0 : i32
    %c0_i32_1 = arith.constant 0 : i32
    %c0_i32_2 = arith.constant 0 : i32
    %c0_i32_3 = arith.constant 0 : i32
    return %c0_i32, %c0_i32_0, %c0_i32_1, %c0_i32_2 : i32, i32, i32, i32
  }
  func.func @transform_2(%arg0: i32) -> (i32, i32, i32) {
    %c0_i32 = arith.constant 0 : i32
    %c0_i32_0 = arith.constant 0 : i32
    %c0_i32_1 = arith.constant 0 : i32
    %c0_i32_2 = arith.constant 0 : i32
    return %c0_i32, %c0_i32_0, %c0_i32_1 : i32, i32, i32
  }
  func.func @transform_3(%arg0: i32) -> (i32, i32) {
    %c0_i32 = arith.constant 0 : i32
    %c0_i32_0 = arith.constant 0 : i32
    %c0_i32_1 = arith.constant 0 : i32
    return %c0_i32, %c0_i32_0 : i32, i32
  }
}

</mosaic_0001>

<llo_original>
// kernel: transformer_decoder_forward.1
$region0: #{transformer_decoder_forward.1}
  #allocation0 [shape = 'u32[]', space=smem, size = 0x4, offset = 0x4, fixed_abs, tag = 'smem constant byte address 0x4 - core index']
  #allocation1 [shape = 'u32[72,128]{1,0:T(1,128)}', space=vmem, size = 0x9000, scoped, tag = 'internal scratch']
  %s0 = inlined_call_operand.vmem [shape: f32[32,32], index: 0, kind: input, shape index: {}]
  %s1 = inlined_call_operand.vmem [shape: f32[2,2,8,8], index: 1, kind: input, shape index: {}]
  %s2 = inlined_call_operand.hbm [shape: f32[2,168,128], index: 2, kind: input, shape index: {}]
  %s3 = inlined_call_operand.hbm [shape: f32[16,32], index: 3, kind: output, shape index: {}]
  %s4 = sld [smem:[#allocation0]]
  $region26: #{transformer_decoder_forward.1} parent=0
    _
  %s6 = ssub.s32 1, %s4
  %s7 = scalar_select 0, %s6, %s4
  $region1: #{transformer_decoder_forward.1} parent=0
    #allocation2 [shape = 'u8[172032]{0}', space=vmem, size = 0x2a000, scoped, tag = 'input window, operand 2, single buffered']
    #allocation3 [shape = 's32[1]{0}', space=sflag, size = 0x4, scoped, tag = 'scoped memory for transformer_decoder_forward.1']
    #allocation4 [shape = 's32[1]{0}', space=sflag, size = 0x4, scoped, tag = 'scoped memory for transformer_decoder_forward.1']
    #allocation5 [shape = 'u8[8192]{0}', space=vmem, size = 0x2000, scoped, tag = 'output window, operand 0, single buffered']
    %8 = vsyncpa [#allocation3], 0
    %9 = vsyncpa [#allocation4], 0
    // Predicated region
    $region2: #{transformer_decoder_forward.1} parent=1 // pred_check
      _
    $region3: #{transformer_decoder_forward.1} parent=1 // pred_check_branch
      %11 = sbr.rel (0) target = $region5
    $region4: #{transformer_decoder_forward.1} parent=1 // pred_region
      _
    $region5: #{transformer_decoder_forward.1} parent=1 // pred_fallthru
      _
    // Predicated region
    $region6: #{transformer_decoder_forward.1} parent=1 // pred_check
      _
    $region7: #{transformer_decoder_forward.1} parent=1 // pred_check_branch
      %13 = sbr.rel (0) target = $region9
    $region8: #{transformer_decoder_forward.1} parent=1 // pred_region
      _
    $region9: #{transformer_decoder_forward.1} parent=1 // pred_fallthru
      _
    // Predicated region
    $region10: #{transformer_decoder_forward.1} parent=1 // pred_check
      _
    $region11: #{transformer_decoder_forward.1} parent=1 // pred_check_branch
      %15 = sbr.rel (0) target = $region13
    $region12: #{transformer_decoder_forward.1} parent=1 // pred_region
      %17 = vsyncadd [#allocation3], 0
      %s18 = sshll.u32 %s2, 4
      %s19 = int_to_ptr.hbm [resolvable:$true] %s18
      %s20 = sshll.u32 [#allocation2], 4
      %s21 = int_to_ptr.vmem [resolvable:$true] %s20
      %26 = dma.hbm_to_vmem [thread:$0]  %s19, 5376, %s21, [#allocation3], 128, 128, 8
    $region13: #{transformer_decoder_forward.1} parent=1 // pred_fallthru
      _
    // Predicated region
    $region14: #{transformer_decoder_forward.1} parent=1 // pred_check
      _
    $region15: #{transformer_decoder_forward.1} parent=1 // pred_check_branch
      %28 = sbr.rel (0) target = $region17
    $region16: #{transformer_decoder_forward.1} parent=1 // pred_region
      %30 = dma.done [#allocation3], 5376
    $region17: #{transformer_decoder_forward.1} parent=1 // pred_fallthru
      _
    %v31 = vld [vmem:[%s0] sm:$0xff]
    %v32 = vld [vmem:[%s0 + $0x8] sm:$0xff]
    %v33 = vld [vmem:[%s0 + $0x10] sm:$0xff]
    %v34 = vld [vmem:[%s0 + $0x18] sm:$0xff]
    %v35 = vld [vmem:[%s1] sm:$0xff]
    %v36 = vld [vmem:[%s1 + $0x8] sm:$0xff]
    %s37 = scalar_lea.vmem %s1, 16
    %v38 = vld [vmem:[%s37] sm:$0xff]
    %v39 = vld [vmem:[%s37 + $0x8] sm:$0xff]
    %v40 = vld [vmem:[#allocation2] sm:$0xff]
    %v41 = vld [vmem:[#allocation2 + $0x8] sm:$0xff]
    %v42 = vld [vmem:[#allocation2 + $0x10] sm:$0xff]
    %v43 = vld [vmem:[#allocation2 + $0x18] sm:$0xff]
    %v44 = vld [vmem:[#allocation2 + $0xa0] sm:$0x1]
    %v45 = vperm.slane %v44, 0
    %vm46 = vcmask 261120
    %v48 = vsel %vm46, %v31, 0
    %v51 = vsel %vm46, %v32, 0
    %53 = vmatpush.msra.mxu0 0.0
    %54 = vmatpush.msra.mxu0 0.0
    %55 = vmatpush.msra.mxu0 0.0
    %56 = vmatpush.msra.mxu0 0.0
    %57 = vmatpush.msra.mxu0 0.0
    %58 = vmatpush.msra.mxu0 0.0
    %59 = vmatpush.msra.mxu0 0.0
    %60 = vmatpush.msra.mxu0 0.0
    %61 = vmatpush.msra.mxu0 0.0
    %62 = vmatpush.msra.mxu0 0.0
    %63 = vmatpush.msra.mxu0 0.0
    %64 = vmatpush.msra.mxu0 0.0
    %65 = vmatpush.msra.mxu0 %v43
    %66 = vmatpush.msra.mxu0 %v42
    %67 = vmatpush.msra.mxu0 %v41
    %68 = vmatpush.msra.mxu0 %v40
    %69 = vmatmul.f32.gmra.mxu0 %v48
    %v70 = vpop.f32.mrf.mxu0
    %v71 = vadd.f32 %v45, %v70
    %72 = vmatmul.f32.gmra.mxu0 %v51
    %v73 = vpop.f32.mrf.mxu0
    %v74 = vadd.f32 %v45, %v73
    %75 = vdwg.mxu0
    %80 = vrot.lane.b32.xlu0 %v40, 96
    %v81 = vpop.permute.xlu0 %80
    %82 = vrot.lane.b32.xlu0 %v41, 96
    %v83 = vpop.permute.xlu0 %82
    %84 = vrot.lane.b32.xlu0 %v42, 96
    %v85 = vpop.permute.xlu0 %84
    %86 = vrot.lane.b32.xlu0 %v43, 96
    %v87 = vpop.permute.xlu0 %86
    %93 = vrot.lane.b32.xlu0 %v45, 96
    %v94 = vpop.permute.xlu0 %93
    %96 = vmatpush.msra.mxu0 0.0
    %97 = vmatpush.msra.mxu0 0.0
    %98 = vmatpush.msra.mxu0 0.0
    %99 = vmatpush.msra.mxu0 0.0
    %100 = vmatpush.msra.mxu0 0.0
    %101 = vmatpush.msra.mxu0 0.0
    %102 = vmatpush.msra.mxu0 0.0
    %103 = vmatpush.msra.mxu0 0.0
    %104 = vmatpush.msra.mxu0 0.0
    %105 = vmatpush.msra.mxu0 0.0
    %106 = vmatpush.msra.mxu0 0.0
    %107 = vmatpush.msra.mxu0 0.0
    %108 = vmatpush.msra.mxu0 %v87
    %109 = vmatpush.msra.mxu0 %v85
    %110 = vmatpush.msra.mxu0 %v83
    %111 = vmatpush.msra.mxu0 %v81
    %112 = vmatmul.f32.gmra.mxu0 %v48
    %v113 = vpop.f32.mrf.mxu0
    %v114 = vadd.f32 %v94, %v113
    %115 = vmatmul.f32.gmra.mxu0 %v51
    %v116 = vpop.f32.mrf.mxu0
    %v117 = vadd.f32 %v94, %v116
    %118 = vdwg.mxu0
    %119 = vrot.lane.b32.xlu0 %v40, 64
    %v120 = vpop.permute.xlu0 %119
    %121 = vrot.lane.b32.xlu0 %v41, 64
    %v122 = vpop.permute.xlu0 %121
    %123 = vrot.lane.b32.xlu0 %v42, 64
    %v124 = vpop.permute.xlu0 %123
    %125 = vrot.lane.b32.xlu0 %v43, 64
    %v126 = vpop.permute.xlu0 %125
    %131 = vrot.lane.b32.xlu0 %v45, 64
    %v132 = vpop.permute.xlu0 %131
    %134 = vmatpush.msra.mxu0 0.0
    %135 = vmatpush.msra.mxu0 0.0
    %136 = vmatpush.msra.mxu0 0.0
    %137 = vmatpush.msra.mxu0 0.0
    %138 = vmatpush.msra.mxu0 0.0
    %139 = vmatpush.msra.mxu0 0.0
    %140 = vmatpush.msra.mxu0 0.0
    %141 = vmatpush.msra.mxu0 0.0
    %142 = vmatpush.msra.mxu0 0.0
    %143 = vmatpush.msra.mxu0 0.0
    %144 = vmatpush.msra.mxu0 0.0
    %145 = vmatpush.msra.mxu0 0.0
    %146 = vmatpush.msra.mxu0 %v126
    %147 = vmatpush.msra.mxu0 %v124
    %148 = vmatpush.msra.mxu0 %v122
    %149 = vmatpush.msra.mxu0 %v120
    %150 = vmatmul.f32.gmra.mxu0 %v48
    %v151 = vpop.f32.mrf.mxu0
    %v152 = vadd.f32 %v132, %v151
    %153 = vmatmul.f32.gmra.mxu0 %v51
    %v154 = vpop.f32.mrf.mxu0
    %v155 = vadd.f32 %v132, %v154
    %156 = vdwg.mxu0
    %vm157 = vcmask 130048
    %v159 = vsel %vm157, %v71, 0
    %v162 = vsel %vm157, %v114, 0
    %164 = vmatpush.xpose.msra.mxu0 0.0
    %165 = vmatpush.xpose.msra.mxu0 0.0
    %166 = vmatpush.xpose.msra.mxu0 0.0
    %167 = vmatpush.xpose.msra.mxu0 0.0
    %168 = vmatpush.xpose.msra.mxu0 0.0
    %169 = vmatpush.xpose.msra.mxu0 0.0
    %170 = vmatpush.xpose.msra.mxu0 0.0
    %171 = vmatpush.xpose.msra.mxu0 0.0
    %172 = vmatpush.xpose.msra.mxu0 0.0
    %173 = vmatpush.xpose.msra.mxu0 0.0
    %174 = vmatpush.xpose.msra.mxu0 0.0
    %175 = vmatpush.xpose.msra.mxu0 0.0
    %176 = vmatpush.xpose.msra.mxu0 0.0
    %177 = vmatpush.xpose.msra.mxu0 0.0
    %178 = vmatpush.xpose.msra.mxu0 0.0
    %179 = vmatpush.xpose.msra.mxu0 %v162
    %180 = vmatmul.f32.gmra.mxu0 %v159
    %v181 = vpop.f32.mrf.mxu0
    %v182 = vadd.f32 %v35, %v181
    %183 = vdwg.mxu0
    %v185 = vsel %vm157, %v74, 0
    %v188 = vsel %vm157, %v117, 0
    %190 = vmatpush.xpose.msra.mxu0 0.0
    %191 = vmatpush.xpose.msra.mxu0 0.0
    %192 = vmatpush.xpose.msra.mxu0 0.0
    %193 = vmatpush.xpose.msra.mxu0 0.0
    %194 = vmatpush.xpose.msra.mxu0 0.0
    %195 = vmatpush.xpose.msra.mxu0 0.0
    %196 = vmatpush.xpose.msra.mxu0 0.0
    %197 = vmatpush.xpose.msra.mxu0 0.0
    %198 = vmatpush.xpose.msra.mxu0 0.0
    %199 = vmatpush.xpose.msra.mxu0 0.0
    %200 = vmatpush.xpose.msra.mxu0 0.0
    %201 = vmatpush.xpose.msra.mxu0 0.0
    %202 = vmatpush.xpose.msra.mxu0 0.0
    %203 = vmatpush.xpose.msra.mxu0 0.0
    %204 = vmatpush.xpose.msra.mxu0 0.0
    %205 = vmatpush.xpose.msra.mxu0 %v188
    %206 = vmatmul.f32.gmra.mxu0 %v185
    %v207 = vpop.f32.mrf.mxu0
    %v208 = vadd.f32 %v36, %v207
    %209 = vdwg.mxu0
    %vm210 = vcmask 64512
    %v211 = vsel %vm210, %v182, -inf
    %212 = vmax.xlane.f32.xlu0 %v211
    %v213 = vpop.xlane.xlu0 %212
    %v214 = vsel %vm210, %v208, -inf
    %215 = vmax.xlane.f32.xlu0 %v214
    %v216 = vpop.xlane.xlu0 %215
    %v217 = vsub.f32 %v182, %v213
    %v218 = vsub.f32 %v208, %v216
    %v219 = vmul.f32 %v217, 1.442695
    %v220 = vpow.pop %v219
    %v221 = vmul.f32 %v218, 1.442695
    %v222 = vpow.pop %v221
    %v223 = vsel %vm210, %v220, 0.0
    %224 = vadd.xlane.f32.xlu0 %v223
    %v225 = vpop.xlane.xlu0 %224
    %v226 = vsel %vm210, %v222, 0.0
    %227 = vadd.xlane.f32.xlu0 %v226
    %v228 = vpop.xlane.xlu0 %227
    %v229 = vrcp.pop %v225
    %v230 = vrcp.pop %v228
    %v231 = vmul.f32 %v220, %v229
    %v232 = vmul.f32 %v222, %v230
    %v234 = vsel %vm210, %v231, 0
    %236 = vmatpush.msra.mxu0 0.0
    %237 = vmatpush.msra.mxu0 0.0
    %238 = vmatpush.msra.mxu0 0.0
    %239 = vmatpush.msra.mxu0 0.0
    %240 = vmatpush.msra.mxu0 0.0
    %241 = vmatpush.msra.mxu0 0.0
    %242 = vmatpush.msra.mxu0 0.0
    %243 = vmatpush.msra.mxu0 0.0
    %244 = vmatpush.msra.mxu0 0.0
    %245 = vmatpush.msra.mxu0 0.0
    %246 = vmatpush.msra.mxu0 0.0
    %247 = vmatpush.msra.mxu0 0.0
    %248 = vmatpush.msra.mxu0 0.0
    %249 = vmatpush.msra.mxu0 0.0
    %250 = vmatpush.msra.mxu0 0.0
    %251 = vmatpush.msra.mxu0 %v152
    %252 = vmatmul.f32.gmra.mxu0 %v234
    %v253 = vpop.f32.mrf.mxu0
    %v254 = vadd.f32 0.0, %v253
    %255 = vdwg.mxu0
    %v257 = vsel %vm210, %v232, 0
    %259 = vmatpush.msra.mxu0 0.0
    %260 = vmatpush.msra.mxu0 0.0
    %261 = vmatpush.msra.mxu0 0.0
    %262 = vmatpush.msra.mxu0 0.0
    %263 = vmatpush.msra.mxu0 0.0
    %264 = vmatpush.msra.mxu0 0.0
    %265 = vmatpush.msra.mxu0 0.0
    %266 = vmatpush.msra.mxu0 0.0
    %267 = vmatpush.msra.mxu0 0.0
    %268 = vmatpush.msra.mxu0 0.0
    %269 = vmatpush.msra.mxu0 0.0
    %270 = vmatpush.msra.mxu0 0.0
    %271 = vmatpush.msra.mxu0 0.0
    %272 = vmatpush.msra.mxu0 0.0
    %273 = vmatpush.msra.mxu0 0.0
    %274 = vmatpush.msra.mxu0 %v155
    %275 = vmatmul.f32.gmra.mxu0 %v257
    %v276 = vpop.f32.mrf.mxu0
    %v277 = vadd.f32 0.0, %v276
    %278 = vdwg.mxu0
    %v279 = vld [vmem:[#allocation2] sm:$0xff]
    %v280 = vld [vmem:[#allocation2 + $0x8] sm:$0xff]
    %v281 = vld [vmem:[#allocation2 + $0x10] sm:$0xff]
    %v282 = vld [vmem:[#allocation2 + $0x18] sm:$0xff]
    %v283 = vld [vmem:[#allocation2 + $0xa0] sm:$0x1]
    %v284 = vperm.slane %v283, 0
    %289 = vrot.lane.b32.xlu0 %v279, 112
    %v290 = vpop.permute.xlu0 %289
    %291 = vrot.lane.b32.xlu0 %v280, 112
    %v292 = vpop.permute.xlu0 %291
    %293 = vrot.lane.b32.xlu0 %v281, 112
    %v294 = vpop.permute.xlu0 %293
    %295 = vrot.lane.b32.xlu0 %v282, 112
    %v296 = vpop.permute.xlu0 %295
    %302 = vrot.lane.b32.xlu0 %v284, 112
    %v303 = vpop.permute.xlu0 %302
    %305 = vmatpush.msra.mxu0 0.0
    %306 = vmatpush.msra.mxu0 0.0
    %307 = vmatpush.msra.mxu0 0.0
    %308 = vmatpush.msra.mxu0 0.0
    %309 = vmatpush.msra.mxu0 0.0
    %310 = vmatpush.msra.mxu0 0.0
    %311 = vmatpush.msra.mxu0 0.0
    %312 = vmatpush.msra.mxu0 0.0
    %313 = vmatpush.msra.mxu0 0.0
    %314 = vmatpush.msra.mxu0 0.0
    %315 = vmatpush.msra.mxu0 0.0
    %316 = vmatpush.msra.mxu0 0.0
    %317 = vmatpush.msra.mxu0 %v296
    %318 = vmatpush.msra.mxu0 %v294
    %319 = vmatpush.msra.mxu0 %v292
    %320 = vmatpush.msra.mxu0 %v290
    %321 = vmatmul.f32.gmra.mxu0 %v48
    %v322 = vpop.f32.mrf.mxu0
    %v323 = vadd.f32 %v303, %v322
    %324 = vmatmul.f32.gmra.mxu0 %v51
    %v325 = vpop.f32.mrf.mxu0
    %v326 = vadd.f32 %v303, %v325
    %327 = vdwg.mxu0
    %328 = vrot.lane.b32.xlu0 %v279, 80
    %v329 = vpop.permute.xlu0 %328
    %330 = vrot.lane.b32.xlu0 %v280, 80
    %v331 = vpop.permute.xlu0 %330
    %332 = vrot.lane.b32.xlu0 %v281, 80
    %v333 = vpop.permute.xlu0 %332
    %334 = vrot.lane.b32.xlu0 %v282, 80
    %v335 = vpop.permute.xlu0 %334
    %340 = vrot.lane.b32.xlu0 %v284, 80
    %v341 = vpop.permute.xlu0 %340
    %343 = vmatpush.msra.mxu0 0.0
    %344 = vmatpush.msra.mxu0 0.0
    %345 = vmatpush.msra.mxu0 0.0
    %346 = vmatpush.msra.mxu0 0.0
    %347 = vmatpush.msra.mxu0 0.0
    %348 = vmatpush.msra.mxu0 0.0
    %349 = vmatpush.msra.mxu0 0.0
    %350 = vmatpush.msra.mxu0 0.0
    %351 = vmatpush.msra.mxu0 0.0
    %352 = vmatpush.msra.mxu0 0.0
    %353 = vmatpush.msra.mxu0 0.0
    %354 = vmatpush.msra.mxu0 0.0
    %355 = vmatpush.msra.mxu0 %v335
    %356 = vmatpush.msra.mxu0 %v333
    %357 = vmatpush.msra.mxu0 %v331
    %358 = vmatpush.msra.mxu0 %v329
    %359 = vmatmul.f32.gmra.mxu0 %v48
    %v360 = vpop.f32.mrf.mxu0
    %v361 = vadd.f32 %v341, %v360
    %362 = vmatmul.f32.gmra.mxu0 %v51
    %v363 = vpop.f32.mrf.mxu0
    %v364 = vadd.f32 %v341, %v363
    %365 = vdwg.mxu0
    %366 = vrot.lane.b32.xlu0 %v279, 48
    %v367 = vpop.permute.xlu0 %366
    %368 = vrot.lane.b32.xlu0 %v280, 48
    %v369 = vpop.permute.xlu0 %368
    %370 = vrot.lane.b32.xlu0 %v281, 48
    %v371 = vpop.permute.xlu0 %370
    %372 = vrot.lane.b32.xlu0 %v282, 48
    %v373 = vpop.permute.xlu0 %372
    %378 = vrot.lane.b32.xlu0 %v284, 48
    %v379 = vpop.permute.xlu0 %378
    %381 = vmatpush.msra.mxu0 0.0
    %382 = vmatpush.msra.mxu0 0.0
    %383 = vmatpush.msra.mxu0 0.0
    %384 = vmatpush.msra.mxu0 0.0
    %385 = vmatpush.msra.mxu0 0.0
    %386 = vmatpush.msra.mxu0 0.0
    %387 = vmatpush.msra.mxu0 0.0
    %388 = vmatpush.msra.mxu0 0.0
    %389 = vmatpush.msra.mxu0 0.0
    %390 = vmatpush.msra.mxu0 0.0
    %391 = vmatpush.msra.mxu0 0.0
    %392 = vmatpush.msra.mxu0 0.0
    %393 = vmatpush.msra.mxu0 %v373
    %394 = vmatpush.msra.mxu0 %v371
    %395 = vmatpush.msra.mxu0 %v369
    %396 = vmatpush.msra.mxu0 %v367
    %397 = vmatmul.f32.gmra.mxu0 %v48
    %v398 = vpop.f32.mrf.mxu0
    %v399 = vadd.f32 %v379, %v398
    %400 = vmatmul.f32.gmra.mxu0 %v51
    %v401 = vpop.f32.mrf.mxu0
    %v402 = vadd.f32 %v379, %v401
    %403 = vdwg.mxu0
    %v405 = vsel %vm157, %v323, 0
    %v408 = vsel %vm157, %v361, 0
    %410 = vmatpush.xpose.msra.mxu0 0.0
    %411 = vmatpush.xpose.msra.mxu0 0.0
    %412 = vmatpush.xpose.msra.mxu0 0.0
    %413 = vmatpush.xpose.msra.mxu0 0.0
    %414 = vmatpush.xpose.msra.mxu0 0.0
    %415 = vmatpush.xpose.msra.mxu0 0.0
    %416 = vmatpush.xpose.msra.mxu0 0.0
    %417 = vmatpush.xpose.msra.mxu0 0.0
    %418 = vmatpush.xpose.msra.mxu0 0.0
    %419 = vmatpush.xpose.msra.mxu0 0.0
    %420 = vmatpush.xpose.msra.mxu0 0.0
    %421 = vmatpush.xpose.msra.mxu0 0.0
    %422 = vmatpush.xpose.msra.mxu0 0.0
    %423 = vmatpush.xpose.msra.mxu0 0.0
    %424 = vmatpush.xpose.msra.mxu0 0.0
    %425 = vmatpush.xpose.msra.mxu0 %v408
    %426 = vmatmul.f32.gmra.mxu0 %v405
    %v427 = vpop.f32.mrf.mxu0
    %v428 = vadd.f32 %v35, %v427
    %429 = vdwg.mxu0
    %v431 = vsel %vm157, %v326, 0
    %v434 = vsel %vm157, %v364, 0
    %436 = vmatpush.xpose.msra.mxu0 0.0
    %437 = vmatpush.xpose.msra.mxu0 0.0
    %438 = vmatpush.xpose.msra.mxu0 0.0
    %439 = vmatpush.xpose.msra.mxu0 0.0
    %440 = vmatpush.xpose.msra.mxu0 0.0
    %441 = vmatpush.xpose.msra.mxu0 0.0
    %442 = vmatpush.xpose.msra.mxu0 0.0
    %443 = vmatpush.xpose.msra.mxu0 0.0
    %444 = vmatpush.xpose.msra.mxu0 0.0
    %445 = vmatpush.xpose.msra.mxu0 0.0
    %446 = vmatpush.xpose.msra.mxu0 0.0
    %447 = vmatpush.xpose.msra.mxu0 0.0
    %448 = vmatpush.xpose.msra.mxu0 0.0
    %449 = vmatpush.xpose.msra.mxu0 0.0
    %450 = vmatpush.xpose.msra.mxu0 0.0
    %451 = vmatpush.xpose.msra.mxu0 %v434
    %452 = vmatmul.f32.gmra.mxu0 %v431
    %v453 = vpop.f32.mrf.mxu0
    %v454 = vadd.f32 %v36, %v453
    %455 = vdwg.mxu0
    %v456 = vsel %vm210, %v428, -inf
    %457 = vmax.xlane.f32.xlu0 %v456
    %v458 = vpop.xlane.xlu0 %457
    %v459 = vsel %vm210, %v454, -inf
    %460 = vmax.xlane.f32.xlu0 %v459
    %v461 = vpop.xlane.xlu0 %460
    %v462 = vsub.f32 %v428, %v458
    %v463 = vsub.f32 %v454, %v461
    %v464 = vmul.f32 %v462, 1.442695
    %v465 = vpow.pop %v464
    %v466 = vmul.f32 %v463, 1.442695
    %v467 = vpow.pop %v466
    %v468 = vsel %vm210, %v465, 0.0
    %469 = vadd.xlane.f32.xlu0 %v468
    %v470 = vpop.xlane.xlu0 %469
    %v471 = vsel %vm210, %v467, 0.0
    %472 = vadd.xlane.f32.xlu0 %v471
    %v473 = vpop.xlane.xlu0 %472
    %v474 = vrcp.pop %v470
    %v475 = vrcp.pop %v473
    %v476 = vmul.f32 %v465, %v474
    %v477 = vmul.f32 %v467, %v475
    %v479 = vsel %vm210, %v476, 0
    %481 = vmatpush.msra.mxu0 0.0
    %482 = vmatpush.msra.mxu0 0.0
    %483 = vmatpush.msra.mxu0 0.0
    %484 = vmatpush.msra.mxu0 0.0
    %485 = vmatpush.msra.mxu0 0.0
    %486 = vmatpush.msra.mxu0 0.0
    %487 = vmatpush.msra.mxu0 0.0
    %488 = vmatpush.msra.mxu0 0.0
    %489 = vmatpush.msra.mxu0 0.0
    %490 = vmatpush.msra.mxu0 0.0
    %491 = vmatpush.msra.mxu0 0.0
    %492 = vmatpush.msra.mxu0 0.0
    %493 = vmatpush.msra.mxu0 0.0
    %494 = vmatpush.msra.mxu0 0.0
    %495 = vmatpush.msra.mxu0 0.0
    %496 = vmatpush.msra.mxu0 %v399
    %497 = vmatmul.f32.gmra.mxu0 %v479
    %v498 = vpop.f32.mrf.mxu0
    %v499 = vadd.f32 0.0, %v498
    %500 = vdwg.mxu0
    %v502 = vsel %vm210, %v477, 0
    %504 = vmatpush.msra.mxu0 0.0
    %505 = vmatpush.msra.mxu0 0.0
    %506 = vmatpush.msra.mxu0 0.0
    %507 = vmatpush.msra.mxu0 0.0
    %508 = vmatpush.msra.mxu0 0.0
    %509 = vmatpush.msra.mxu0 0.0
    %510 = vmatpush.msra.mxu0 0.0
    %511 = vmatpush.msra.mxu0 0.0
    %512 = vmatpush.msra.mxu0 0.0
    %513 = vmatpush.msra.mxu0 0.0
    %514 = vmatpush.msra.mxu0 0.0
    %515 = vmatpush.msra.mxu0 0.0
    %516 = vmatpush.msra.mxu0 0.0
    %517 = vmatpush.msra.mxu0 0.0
    %518 = vmatpush.msra.mxu0 0.0
    %519 = vmatpush.msra.mxu0 %v402
    %520 = vmatmul.f32.gmra.mxu0 %v502
    %v521 = vpop.f32.mrf.mxu0
    %v522 = vadd.f32 0.0, %v521
    %523 = vdwg.mxu0
    %526 = vrot.lane.b32.xlu0 %v499, 16
    %v527 = vpop.permute.xlu0 %526
    %528 = vrot.lane.b32.xlu0 %v522, 16
    %v529 = vpop.permute.xlu0 %528
    %v532 = vsel %vm157, %v254, %v527
    %v533 = vsel %vm157, %v277, %v529
    %v534 = vld [vmem:[#allocation2] sm:$0xff]
    %v535 = vld [vmem:[#allocation2 + $0x8] sm:$0xff]
    %v536 = vld [vmem:[#allocation2 + $0x10] sm:$0xff]
    %v537 = vld [vmem:[#allocation2 + $0x18] sm:$0xff]
    %v538 = vld [vmem:[#allocation2 + $0xa0] sm:$0x1]
    %v539 = vperm.slane %v538, 0
    %544 = vrot.lane.b32.xlu0 %v534, 32
    %v545 = vpop.permute.xlu0 %544
    %546 = vrot.lane.b32.xlu0 %v535, 32
    %v547 = vpop.permute.xlu0 %546
    %548 = vrot.lane.b32.xlu0 %v536, 32
    %v549 = vpop.permute.xlu0 %548
    %550 = vrot.lane.b32.xlu0 %v537, 32
    %v551 = vpop.permute.xlu0 %550
    %557 = vrot.lane.b32.xlu0 %v539, 32
    %v558 = vpop.permute.xlu0 %557
    %v561 = vsel %vm46, %v532, 0
    %v564 = vsel %vm46, %v533, 0
    %566 = vmatpush.msra.mxu0 0.0
    %567 = vmatpush.msra.mxu0 0.0
    %568 = vmatpush.msra.mxu0 0.0
    %569 = vmatpush.msra.mxu0 0.0
    %570 = vmatpush.msra.mxu0 0.0
    %571 = vmatpush.msra.mxu0 0.0
    %572 = vmatpush.msra.mxu0 0.0
    %573 = vmatpush.msra.mxu0 0.0
    %574 = vmatpush.msra.mxu0 0.0
    %575 = vmatpush.msra.mxu0 0.0
    %576 = vmatpush.msra.mxu0 0.0
    %577 = vmatpush.msra.mxu0 0.0
    %578 = vmatpush.msra.mxu0 %v551
    %579 = vmatpush.msra.mxu0 %v549
    %580 = vmatpush.msra.mxu0 %v547
    %581 = vmatpush.msra.mxu0 %v545
    %582 = vmatmul.f32.gmra.mxu0 %v561
    %v583 = vpop.f32.mrf.mxu0
    %v584 = vadd.f32 %v558, %v583
    %585 = vmatmul.f32.gmra.mxu0 %v564
    %v586 = vpop.f32.mrf.mxu0
    %v587 = vadd.f32 %v558, %v586
    %588 = vdwg.mxu0
    %v589 = vadd.f32 %v584, %v31
    %v590 = vadd.f32 %v587, %v32
    %v591 = vld [vmem:[#allocation2 + $0xa3] sm:$0x1]
    %v592 = vsel %vm46, %v589, 0.0
    %593 = vadd.xlane.f32.xlu0 %v592
    %v594 = vpop.xlane.xlu0 %593
    %v595 = vsel %vm46, %v590, 0.0
    %596 = vadd.xlane.f32.xlu0 %v595
    %v597 = vpop.xlane.xlu0 %596
    %v598 = vrcp.pop 32.0
    %v599 = vmul.f32 32.0, %v598
    %v600 = vsub.f32 1.0, %v599
    %v601 = vmul.f32 %v598, %v600
    %v602 = vadd.f32 %v598, %v601
    %vm603 = vweird.f32 %v598
    %v604 = vsel %vm603, %v598, %v602
    %v605 = vmul.f32 %v594, %v604
    %v606 = vmul.f32 %v597, %v604
    %v607 = vsub.f32 %v589, %v605
    %v608 = vsub.f32 %v590, %v606
    %v609 = vmul.f32 %v607, %v607
    %v610 = vmul.f32 %v608, %v608
    %v611 = vsel %vm46, %v609, 0.0
    %612 = vadd.xlane.f32.xlu0 %v611
    %v613 = vpop.xlane.xlu0 %612
    %v614 = vsel %vm46, %v610, 0.0
    %615 = vadd.xlane.f32.xlu0 %v614
    %v616 = vpop.xlane.xlu0 %615
    %v617 = vmul.f32 %v613, %v604
    %v618 = vmul.f32 %v616, %v604
    %v619 = vadd.f32 %v617, 1e-05
    %v620 = vadd.f32 %v618, 1e-05
    %v621 = vrsqrt.pop %v619
    %v622 = vmul.f32 %v621, %v619
    %v623 = vmul.f32 %v622, %v621
    %v624 = vmul.f32 0.5, %v623
    %v625 = vsub.f32 1.5, %v624
    %v626 = vmul.f32 %v621, %v625
    %vm627 = vweird.f32 %v619
    %vm628 = vweird.f32 %v621
    %vm629 = vmor %vm627, %vm628
    %v630 = vsel %vm629, %v621, %v626
    %v631 = vrsqrt.pop %v620
    %v632 = vmul.f32 %v631, %v620
    %v633 = vmul.f32 %v632, %v631
    %v634 = vmul.f32 0.5, %v633
    %v635 = vsub.f32 1.5, %v634
    %v636 = vmul.f32 %v631, %v635
    %vm637 = vweird.f32 %v620
    %vm638 = vweird.f32 %v631
    %vm639 = vmor %vm637, %vm638
    %v640 = vsel %vm639, %v631, %v636
    %v641 = vmul.f32 %v607, %v630
    %v642 = vmul.f32 %v608, %v640
    %v643 = vperm.slane %v591, 0
    %v644 = vmul.f32 %v641, %v643
    %v645 = vmul.f32 %v642, %v643
    %647 = vrot.lane.b32.xlu0 %v643, 96
    %v648 = vpop.permute.xlu0 %647
    %v650 = vadd.f32 %v644, %v648
    %v651 = vadd.f32 %v645, %v648
    %v652 = vld [vmem:[#allocation2 + $0x20] sm:$0xff]
    %v653 = vld [vmem:[#allocation2 + $0x28] sm:$0xff]
    %v654 = vld [vmem:[#allocation2 + $0x30] sm:$0xff]
    %v655 = vld [vmem:[#allocation2 + $0x38] sm:$0xff]
    %v656 = vld [vmem:[#allocation2 + $0xa1] sm:$0x1]
    %v657 = vperm.slane %v656, 0
    %v659 = vsel %vm46, %v650, 0
    %v662 = vsel %vm46, %v651, 0
    %664 = vmatpush.msra.mxu0 0.0
    %665 = vmatpush.msra.mxu0 0.0
    %666 = vmatpush.msra.mxu0 0.0
    %667 = vmatpush.msra.mxu0 0.0
    %668 = vmatpush.msra.mxu0 0.0
    %669 = vmatpush.msra.mxu0 0.0
    %670 = vmatpush.msra.mxu0 0.0
    %671 = vmatpush.msra.mxu0 0.0
    %672 = vmatpush.msra.mxu0 0.0
    %673 = vmatpush.msra.mxu0 0.0
    %674 = vmatpush.msra.mxu0 0.0
    %675 = vmatpush.msra.mxu0 0.0
    %676 = vmatpush.msra.mxu0 %v655
    %677 = vmatpush.msra.mxu0 %v654
    %678 = vmatpush.msra.mxu0 %v653
    %679 = vmatpush.msra.mxu0 %v652
    %680 = vmatmul.f32.gmra.mxu0 %v659
    %v681 = vpop.f32.mrf.mxu0
    %v682 = vadd.f32 %v657, %v681
    %683 = vmatmul.f32.gmra.mxu0 %v662
    %v684 = vpop.f32.mrf.mxu0
    %v685 = vadd.f32 %v657, %v684
    %686 = vdwg.mxu0
    %691 = vrot.lane.b32.xlu0 %v652, 96
    %v692 = vpop.permute.xlu0 %691
    %693 = vrot.lane.b32.xlu0 %v653, 96
    %v694 = vpop.permute.xlu0 %693
    %695 = vrot.lane.b32.xlu0 %v654, 96
    %v696 = vpop.permute.xlu0 %695
    %697 = vrot.lane.b32.xlu0 %v655, 96
    %v698 = vpop.permute.xlu0 %697
    %704 = vrot.lane.b32.xlu0 %v657, 96
    %v705 = vpop.permute.xlu0 %704
    %v708 = vsel %vm46, %v33, 0
    %v711 = vsel %vm46, %v34, 0
    %713 = vmatpush.msra.mxu0 0.0
    %714 = vmatpush.msra.mxu0 0.0
    %715 = vmatpush.msra.mxu0 0.0
    %716 = vmatpush.msra.mxu0 0.0
    %717 = vmatpush.msra.mxu0 0.0
    %718 = vmatpush.msra.mxu0 0.0
    %719 = vmatpush.msra.mxu0 0.0
    %720 = vmatpush.msra.mxu0 0.0
    %721 = vmatpush.msra.mxu0 0.0
    %722 = vmatpush.msra.mxu0 0.0
    %723 = vmatpush.msra.mxu0 0.0
    %724 = vmatpush.msra.mxu0 0.0
    %725 = vmatpush.msra.mxu0 %v698
    %726 = vmatpush.msra.mxu0 %v696
    %727 = vmatpush.msra.mxu0 %v694
    %728 = vmatpush.msra.mxu0 %v692
    %729 = vmatmul.f32.gmra.mxu0 %v708
    %v730 = vpop.f32.mrf.mxu0
    %v731 = vadd.f32 %v705, %v730
    %732 = vmatmul.f32.gmra.mxu0 %v711
    %v733 = vpop.f32.mrf.mxu0
    %v734 = vadd.f32 %v705, %v733
    %735 = vdwg.mxu0
    %736 = vrot.lane.b32.xlu0 %v652, 64
    %v737 = vpop.permute.xlu0 %736
    %738 = vrot.lane.b32.xlu0 %v653, 64
    %v739 = vpop.permute.xlu0 %738
    %740 = vrot.lane.b32.xlu0 %v654, 64
    %v741 = vpop.permute.xlu0 %740
    %742 = vrot.lane.b32.xlu0 %v655, 64
    %v743 = vpop.permute.xlu0 %742
    %748 = vrot.lane.b32.xlu0 %v657, 64
    %v749 = vpop.permute.xlu0 %748
    %751 = vmatpush.msra.mxu0 0.0
    %752 = vmatpush.msra.mxu0 0.0
    %753 = vmatpush.msra.mxu0 0.0
    %754 = vmatpush.msra.mxu0 0.0
    %755 = vmatpush.msra.mxu0 0.0
    %756 = vmatpush.msra.mxu0 0.0
    %757 = vmatpush.msra.mxu0 0.0
    %758 = vmatpush.msra.mxu0 0.0
    %759 = vmatpush.msra.mxu0 0.0
    %760 = vmatpush.msra.mxu0 0.0
    %761 = vmatpush.msra.mxu0 0.0
    %762 = vmatpush.msra.mxu0 0.0
    %763 = vmatpush.msra.mxu0 %v743
    %764 = vmatpush.msra.mxu0 %v741
    %765 = vmatpush.msra.mxu0 %v739
    %766 = vmatpush.msra.mxu0 %v737
    %767 = vmatmul.f32.gmra.mxu0 %v708
    %v768 = vpop.f32.mrf.mxu0
    %v769 = vadd.f32 %v749, %v768
    %770 = vmatmul.f32.gmra.mxu0 %v711
    %v771 = vpop.f32.mrf.mxu0
    %v772 = vadd.f32 %v749, %v771
    %773 = vdwg.mxu0
    %v775 = vsel %vm157, %v682, 0
    %v778 = vsel %vm157, %v731, 0
    %780 = vmatpush.xpose.msra.mxu0 0.0
    %781 = vmatpush.xpose.msra.mxu0 0.0
    %782 = vmatpush.xpose.msra.mxu0 0.0
    %783 = vmatpush.xpose.msra.mxu0 0.0
    %784 = vmatpush.xpose.msra.mxu0 0.0
    %785 = vmatpush.xpose.msra.mxu0 0.0
    %786 = vmatpush.xpose.msra.mxu0 0.0
    %787 = vmatpush.xpose.msra.mxu0 0.0
    %788 = vmatpush.xpose.msra.mxu0 0.0
    %789 = vmatpush.xpose.msra.mxu0 0.0
    %790 = vmatpush.xpose.msra.mxu0 0.0
    %791 = vmatpush.xpose.msra.mxu0 0.0
    %792 = vmatpush.xpose.msra.mxu0 0.0
    %793 = vmatpush.xpose.msra.mxu0 0.0
    %794 = vmatpush.xpose.msra.mxu0 0.0
    %795 = vmatpush.xpose.msra.mxu0 %v778
    %796 = vmatmul.f32.gmra.mxu0 %v775
    %v797 = vpop.f32.mrf.mxu0
    %v798 = vadd.f32 %v38, %v797
    %799 = vdwg.mxu0
    %v801 = vsel %vm157, %v685, 0
    %v804 = vsel %vm157, %v734, 0
    %806 = vmatpush.xpose.msra.mxu0 0.0
    %807 = vmatpush.xpose.msra.mxu0 0.0
    %808 = vmatpush.xpose.msra.mxu0 0.0
    %809 = vmatpush.xpose.msra.mxu0 0.0
    %810 = vmatpush.xpose.msra.mxu0 0.0
    %811 = vmatpush.xpose.msra.mxu0 0.0
    %812 = vmatpush.xpose.msra.mxu0 0.0
    %813 = vmatpush.xpose.msra.mxu0 0.0
    %814 = vmatpush.xpose.msra.mxu0 0.0
    %815 = vmatpush.xpose.msra.mxu0 0.0
    %816 = vmatpush.xpose.msra.mxu0 0.0
    %817 = vmatpush.xpose.msra.mxu0 0.0
    %818 = vmatpush.xpose.msra.mxu0 0.0
    %819 = vmatpush.xpose.msra.mxu0 0.0
    %820 = vmatpush.xpose.msra.mxu0 0.0
    %821 = vmatpush.xpose.msra.mxu0 %v804
    %822 = vmatmul.f32.gmra.mxu0 %v801
    %v823 = vpop.f32.mrf.mxu0
    %v824 = vadd.f32 %v39, %v823
    %825 = vdwg.mxu0
    %v826 = vsel %vm210, %v798, -inf
    %827 = vmax.xlane.f32.xlu0 %v826
    %v828 = vpop.xlane.xlu0 %827
    %v829 = vsel %vm210, %v824, -inf
    %830 = vmax.xlane.f32.xlu0 %v829
    %v831 = vpop.xlane.xlu0 %830
    %v832 = vsub.f32 %v798, %v828
    %v833 = vsub.f32 %v824, %v831
    %v834 = vmul.f32 %v832, 1.442695
    %v835 = vpow.pop %v834
    %v836 = vmul.f32 %v833, 1.442695
    %v837 = vpow.pop %v836
    %v838 = vsel %vm210, %v835, 0.0
    %839 = vadd.xlane.f32.xlu0 %v838
    %v840 = vpop.xlane.xlu0 %839
    %v841 = vsel %vm210, %v837, 0.0
    %842 = vadd.xlane.f32.xlu0 %v841
    %v843 = vpop.xlane.xlu0 %842
    %v844 = vrcp.pop %v840
    %v845 = vrcp.pop %v843
    %v846 = vmul.f32 %v835, %v844
    %v847 = vmul.f32 %v837, %v845
    %v849 = vsel %vm210, %v846, 0
    %851 = vmatpush.msra.mxu0 0.0
    %852 = vmatpush.msra.mxu0 0.0
    %853 = vmatpush.msra.mxu0 0.0
    %854 = vmatpush.msra.mxu0 0.0
    %855 = vmatpush.msra.mxu0 0.0
    %856 = vmatpush.msra.mxu0 0.0
    %857 = vmatpush.msra.mxu0 0.0
    %858 = vmatpush.msra.mxu0 0.0
    %859 = vmatpush.msra.mxu0 0.0
    %860 = vmatpush.msra.mxu0 0.0
    %861 = vmatpush.msra.mxu0 0.0
    %862 = vmatpush.msra.mxu0 0.0
    %863 = vmatpush.msra.mxu0 0.0
    %864 = vmatpush.msra.mxu0 0.0
    %865 = vmatpush.msra.mxu0 0.0
    %866 = vmatpush.msra.mxu0 %v769
    %867 = vmatmul.f32.gmra.mxu0 %v849
    %v868 = vpop.f32.mrf.mxu0
    %v869 = vadd.f32 0.0, %v868
    %870 = vdwg.mxu0
    %v872 = vsel %vm210, %v847, 0
    %874 = vmatpush.msra.mxu0 0.0
    %875 = vmatpush.msra.mxu0 0.0
    %876 = vmatpush.msra.mxu0 0.0
    %877 = vmatpush.msra.mxu0 0.0
    %878 = vmatpush.msra.mxu0 0.0
    %879 = vmatpush.msra.mxu0 0.0
    %880 = vmatpush.msra.mxu0 0.0
    %881 = vmatpush.msra.mxu0 0.0
    %882 = vmatpush.msra.mxu0 0.0
    %883 = vmatpush.msra.mxu0 0.0
    %884 = vmatpush.msra.mxu0 0.0
    %885 = vmatpush.msra.mxu0 0.0
    %886 = vmatpush.msra.mxu0 0.0
    %887 = vmatpush.msra.mxu0 0.0
    %888 = vmatpush.msra.mxu0 0.0
    %889 = vmatpush.msra.mxu0 %v772
    %890 = vmatmul.f32.gmra.mxu0 %v872
    %v891 = vpop.f32.mrf.mxu0
    %v892 = vadd.f32 0.0, %v891
    %893 = vdwg.mxu0
    %v894 = vld [vmem:[#allocation2 + $0x20] sm:$0xff]
    %v895 = vld [vmem:[#allocation2 + $0x28] sm:$0xff]
    %v896 = vld [vmem:[#allocation2 + $0x30] sm:$0xff]
    %v897 = vld [vmem:[#allocation2 + $0x38] sm:$0xff]
    %v898 = vld [vmem:[#allocation2 + $0xa1] sm:$0x1]
    %v899 = vperm.slane %v898, 0
    %904 = vrot.lane.b32.xlu0 %v894, 112
    %v905 = vpop.permute.xlu0 %904
    %906 = vrot.lane.b32.xlu0 %v895, 112
    %v907 = vpop.permute.xlu0 %906
    %908 = vrot.lane.b32.xlu0 %v896, 112
    %v909 = vpop.permute.xlu0 %908
    %910 = vrot.lane.b32.xlu0 %v897, 112
    %v911 = vpop.permute.xlu0 %910
    %917 = vrot.lane.b32.xlu0 %v899, 112
    %v918 = vpop.permute.xlu0 %917
    %920 = vmatpush.msra.mxu0 0.0
    %921 = vmatpush.msra.mxu0 0.0
    %922 = vmatpush.msra.mxu0 0.0
    %923 = vmatpush.msra.mxu0 0.0
    %924 = vmatpush.msra.mxu0 0.0
    %925 = vmatpush.msra.mxu0 0.0
    %926 = vmatpush.msra.mxu0 0.0
    %927 = vmatpush.msra.mxu0 0.0
    %928 = vmatpush.msra.mxu0 0.0
    %929 = vmatpush.msra.mxu0 0.0
    %930 = vmatpush.msra.mxu0 0.0
    %931 = vmatpush.msra.mxu0 0.0
    %932 = vmatpush.msra.mxu0 %v911
    %933 = vmatpush.msra.mxu0 %v909
    %934 = vmatpush.msra.mxu0 %v907
    %935 = vmatpush.msra.mxu0 %v905
    %936 = vmatmul.f32.gmra.mxu0 %v659
    %v937 = vpop.f32.mrf.mxu0
    %v938 = vadd.f32 %v918, %v937
    %939 = vmatmul.f32.gmra.mxu0 %v662
    %v940 = vpop.f32.mrf.mxu0
    %v941 = vadd.f32 %v918, %v940
    %942 = vdwg.mxu0
    %943 = vrot.lane.b32.xlu0 %v894, 80
    %v944 = vpop.permute.xlu0 %943
    %945 = vrot.lane.b32.xlu0 %v895, 80
    %v946 = vpop.permute.xlu0 %945
    %947 = vrot.lane.b32.xlu0 %v896, 80
    %v948 = vpop.permute.xlu0 %947
    %949 = vrot.lane.b32.xlu0 %v897, 80
    %v950 = vpop.permute.xlu0 %949
    %955 = vrot.lane.b32.xlu0 %v899, 80
    %v956 = vpop.permute.xlu0 %955
    %958 = vmatpush.msra.mxu0 0.0
    %959 = vmatpush.msra.mxu0 0.0
    %960 = vmatpush.msra.mxu0 0.0
    %961 = vmatpush.msra.mxu0 0.0
    %962 = vmatpush.msra.mxu0 0.0
    %963 = vmatpush.msra.mxu0 0.0
    %964 = vmatpush.msra.mxu0 0.0
    %965 = vmatpush.msra.mxu0 0.0
    %966 = vmatpush.msra.mxu0 0.0
    %967 = vmatpush.msra.mxu0 0.0
    %968 = vmatpush.msra.mxu0 0.0
    %969 = vmatpush.msra.mxu0 0.0
    %970 = vmatpush.msra.mxu0 %v950
    %971 = vmatpush.msra.mxu0 %v948
    %972 = vmatpush.msra.mxu0 %v946
    %973 = vmatpush.msra.mxu0 %v944
    %974 = vmatmul.f32.gmra.mxu0 %v708
    %v975 = vpop.f32.mrf.mxu0
    %v976 = vadd.f32 %v956, %v975
    %977 = vmatmul.f32.gmra.mxu0 %v711
    %v978 = vpop.f32.mrf.mxu0
    %v979 = vadd.f32 %v956, %v978
    %980 = vdwg.mxu0
    %981 = vrot.lane.b32.xlu0 %v894, 48
    %v982 = vpop.permute.xlu0 %981
    %983 = vrot.lane.b32.xlu0 %v895, 48
    %v984 = vpop.permute.xlu0 %983
    %985 = vrot.lane.b32.xlu0 %v896, 48
    %v986 = vpop.permute.xlu0 %985
    %987 = vrot.lane.b32.xlu0 %v897, 48
    %v988 = vpop.permute.xlu0 %987
    %993 = vrot.lane.b32.xlu0 %v899, 48
    %v994 = vpop.permute.xlu0 %993
    %996 = vmatpush.msra.mxu0 0.0
    %997 = vmatpush.msra.mxu0 0.0
    %998 = vmatpush.msra.mxu0 0.0
    %999 = vmatpush.msra.mxu0 0.0
    %1000 = vmatpush.msra.mxu0 0.0
    %1001 = vmatpush.msra.mxu0 0.0
    %1002 = vmatpush.msra.mxu0 0.0
    %1003 = vmatpush.msra.mxu0 0.0
    %1004 = vmatpush.msra.mxu0 0.0
    %1005 = vmatpush.msra.mxu0 0.0
    %1006 = vmatpush.msra.mxu0 0.0
    %1007 = vmatpush.msra.mxu0 0.0
    %1008 = vmatpush.msra.mxu0 %v988
    %1009 = vmatpush.msra.mxu0 %v986
    %1010 = vmatpush.msra.mxu0 %v984
    %1011 = vmatpush.msra.mxu0 %v982
    %1012 = vmatmul.f32.gmra.mxu0 %v708
    %v1013 = vpop.f32.mrf.mxu0
    %v1014 = vadd.f32 %v994, %v1013
    %1015 = vmatmul.f32.gmra.mxu0 %v711
    %v1016 = vpop.f32.mrf.mxu0
    %v1017 = vadd.f32 %v994, %v1016
    %1018 = vdwg.mxu0
    %v1020 = vsel %vm157, %v938, 0
    %v1023 = vsel %vm157, %v976, 0
    %1025 = vmatpush.xpose.msra.mxu0 0.0
    %1026 = vmatpush.xpose.msra.mxu0 0.0
    %1027 = vmatpush.xpose.msra.mxu0 0.0
    %1028 = vmatpush.xpose.msra.mxu0 0.0
    %1029 = vmatpush.xpose.msra.mxu0 0.0
    %1030 = vmatpush.xpose.msra.mxu0 0.0
    %1031 = vmatpush.xpose.msra.mxu0 0.0
    %1032 = vmatpush.xpose.msra.mxu0 0.0
    %1033 = vmatpush.xpose.msra.mxu0 0.0
    %1034 = vmatpush.xpose.msra.mxu0 0.0
    %1035 = vmatpush.xpose.msra.mxu0 0.0
    %1036 = vmatpush.xpose.msra.mxu0 0.0
    %1037 = vmatpush.xpose.msra.mxu0 0.0
    %1038 = vmatpush.xpose.msra.mxu0 0.0
    %1039 = vmatpush.xpose.msra.mxu0 0.0
    %1040 = vmatpush.xpose.msra.mxu0 %v1023
    %1041 = vmatmul.f32.gmra.mxu0 %v1020
    %v1042 = vpop.f32.mrf.mxu0
    %v1043 = vadd.f32 %v38, %v1042
    %1044 = vdwg.mxu0
    %v1046 = vsel %vm157, %v941, 0
    %v1049 = vsel %vm157, %v979, 0
    %1051 = vmatpush.xpose.msra.mxu0 0.0
    %1052 = vmatpush.xpose.msra.mxu0 0.0
    %1053 = vmatpush.xpose.msra.mxu0 0.0
    %1054 = vmatpush.xpose.msra.mxu0 0.0
    %1055 = vmatpush.xpose.msra.mxu0 0.0
    %1056 = vmatpush.xpose.msra.mxu0 0.0
    %1057 = vmatpush.xpose.msra.mxu0 0.0
    %1058 = vmatpush.xpose.msra.mxu0 0.0
    %1059 = vmatpush.xpose.msra.mxu0 0.0
    %1060 = vmatpush.xpose.msra.mxu0 0.0
    %1061 = vmatpush.xpose.msra.mxu0 0.0
    %1062 = vmatpush.xpose.msra.mxu0 0.0
    %1063 = vmatpush.xpose.msra.mxu0 0.0
    %1064 = vmatpush.xpose.msra.mxu0 0.0
    %1065 = vmatpush.xpose.msra.mxu0 0.0
    %1066 = vmatpush.xpose.msra.mxu0 %v1049
    %1067 = vmatmul.f32.gmra.mxu0 %v1046
    %v1068 = vpop.f32.mrf.mxu0
    %v1069 = vadd.f32 %v39, %v1068
    %1070 = vdwg.mxu0
    %v1071 = vsel %vm210, %v1043, -inf
    %1072 = vmax.xlane.f32.xlu0 %v1071
    %v1073 = vpop.xlane.xlu0 %1072
    %v1074 = vsel %vm210, %v1069, -inf
    %1075 = vmax.xlane.f32.xlu0 %v1074
    %v1076 = vpop.xlane.xlu0 %1075
    %v1077 = vsub.f32 %v1043, %v1073
    %v1078 = vsub.f32 %v1069, %v1076
    %v1079 = vmul.f32 %v1077, 1.442695
    %v1080 = vpow.pop %v1079
    %v1081 = vmul.f32 %v1078, 1.442695
    %v1082 = vpow.pop %v1081
    %v1083 = vsel %vm210, %v1080, 0.0
    %1084 = vadd.xlane.f32.xlu0 %v1083
    %v1085 = vpop.xlane.xlu0 %1084
    %v1086 = vsel %vm210, %v1082, 0.0
    %1087 = vadd.xlane.f32.xlu0 %v1086
    %v1088 = vpop.xlane.xlu0 %1087
    %v1089 = vrcp.pop %v1085
    %v1090 = vrcp.pop %v1088
    %v1091 = vmul.f32 %v1080, %v1089
    %v1092 = vmul.f32 %v1082, %v1090
    %v1094 = vsel %vm210, %v1091, 0
    %1096 = vmatpush.msra.mxu0 0.0
    %1097 = vmatpush.msra.mxu0 0.0
    %1098 = vmatpush.msra.mxu0 0.0
    %1099 = vmatpush.msra.mxu0 0.0
    %1100 = vmatpush.msra.mxu0 0.0
    %1101 = vmatpush.msra.mxu0 0.0
    %1102 = vmatpush.msra.mxu0 0.0
    %1103 = vmatpush.msra.mxu0 0.0
    %1104 = vmatpush.msra.mxu0 0.0
    %1105 = vmatpush.msra.mxu0 0.0
    %1106 = vmatpush.msra.mxu0 0.0
    %1107 = vmatpush.msra.mxu0 0.0
    %1108 = vmatpush.msra.mxu0 0.0
    %1109 = vmatpush.msra.mxu0 0.0
    %1110 = vmatpush.msra.mxu0 0.0
    %1111 = vmatpush.msra.mxu0 %v1014
    %1112 = vmatmul.f32.gmra.mxu0 %v1094
    %v1113 = vpop.f32.mrf.mxu0
    %v1114 = vadd.f32 0.0, %v1113
    %1115 = vdwg.mxu0
    %v1117 = vsel %vm210, %v1092, 0
    %1119 = vmatpush.msra.mxu0 0.0
    %1120 = vmatpush.msra.mxu0 0.0
    %1121 = vmatpush.msra.mxu0 0.0
    %1122 = vmatpush.msra.mxu0 0.0
    %1123 = vmatpush.msra.mxu0 0.0
    %1124 = vmatpush.msra.mxu0 0.0
    %1125 = vmatpush.msra.mxu0 0.0
    %1126 = vmatpush.msra.mxu0 0.0
    %1127 = vmatpush.msra.mxu0 0.0
    %1128 = vmatpush.msra.mxu0 0.0
    %1129 = vmatpush.msra.mxu0 0.0
    %1130 = vmatpush.msra.mxu0 0.0
    %1131 = vmatpush.msra.mxu0 0.0
    %1132 = vmatpush.msra.mxu0 0.0
    %1133 = vmatpush.msra.mxu0 0.0
    %1134 = vmatpush.msra.mxu0 %v1017
    %1135 = vmatmul.f32.gmra.mxu0 %v1117
    %v1136 = vpop.f32.mrf.mxu0
    %v1137 = vadd.f32 0.0, %v1136
    %1138 = vdwg.mxu0
    %1141 = vrot.lane.b32.xlu0 %v1114, 16
    %v1142 = vpop.permute.xlu0 %1141
    %1143 = vrot.lane.b32.xlu0 %v1137, 16
    %v1144 = vpop.permute.xlu0 %1143
    %v1147 = vsel %vm157, %v869, %v1142
    %v1148 = vsel %vm157, %v892, %v1144
    %v1149 = vld [vmem:[#allocation2 + $0x20] sm:$0xff]
    %v1150 = vld [vmem:[#allocation2 + $0x28] sm:$0xff]
    %v1151 = vld [vmem:[#allocation2 + $0x30] sm:$0xff]
    %v1152 = vld [vmem:[#allocation2 + $0x38] sm:$0xff]
    %v1153 = vld [vmem:[#allocation2 + $0xa1] sm:$0x1]
    %v1154 = vperm.slane %v1153, 0
    %1159 = vrot.lane.b32.xlu0 %v1149, 32
    %v1160 = vpop.permute.xlu0 %1159
    %1161 = vrot.lane.b32.xlu0 %v1150, 32
    %v1162 = vpop.permute.xlu0 %1161
    %1163 = vrot.lane.b32.xlu0 %v1151, 32
    %v1164 = vpop.permute.xlu0 %1163
    %1165 = vrot.lane.b32.xlu0 %v1152, 32
    %v1166 = vpop.permute.xlu0 %1165
    %1172 = vrot.lane.b32.xlu0 %v1154, 32
    %v1173 = vpop.permute.xlu0 %1172
    %v1176 = vsel %vm46, %v1147, 0
    %v1179 = vsel %vm46, %v1148, 0
    %1181 = vmatpush.msra.mxu0 0.0
    %1182 = vmatpush.msra.mxu0 0.0
    %1183 = vmatpush.msra.mxu0 0.0
    %1184 = vmatpush.msra.mxu0 0.0
    %1185 = vmatpush.msra.mxu0 0.0
    %1186 = vmatpush.msra.mxu0 0.0
    %1187 = vmatpush.msra.mxu0 0.0
    %1188 = vmatpush.msra.mxu0 0.0
    %1189 = vmatpush.msra.mxu0 0.0
    %1190 = vmatpush.msra.mxu0 0.0
    %1191 = vmatpush.msra.mxu0 0.0
    %1192 = vmatpush.msra.mxu0 0.0
    %1193 = vmatpush.msra.mxu0 %v1166
    %1194 = vmatpush.msra.mxu0 %v1164
    %1195 = vmatpush.msra.mxu0 %v1162
    %1196 = vmatpush.msra.mxu0 %v1160
    %1197 = vmatmul.f32.gmra.mxu0 %v1176
    %v1198 = vpop.f32.mrf.mxu0
    %v1199 = vadd.f32 %v1173, %v1198
    %1200 = vmatmul.f32.gmra.mxu0 %v1179
    %v1201 = vpop.f32.mrf.mxu0
    %v1202 = vadd.f32 %v1173, %v1201
    %1203 = vdwg.mxu0
    %v1204 = vadd.f32 %v1199, %v650
    %v1205 = vadd.f32 %v1202, %v651
    %v1206 = vld [vmem:[#allocation2 + $0xa3] sm:$0x1]
    %v1207 = vsel %vm46, %v1204, 0.0
    %1208 = vadd.xlane.f32.xlu0 %v1207
    %v1209 = vpop.xlane.xlu0 %1208
    %v1210 = vsel %vm46, %v1205, 0.0
    %1211 = vadd.xlane.f32.xlu0 %v1210
    %v1212 = vpop.xlane.xlu0 %1211
    %v1213 = vmul.f32 %v1209, %v604
    %v1214 = vmul.f32 %v1212, %v604
    %v1215 = vsub.f32 %v1204, %v1213
    %v1216 = vsub.f32 %v1205, %v1214
    %v1217 = vmul.f32 %v1215, %v1215
    %v1218 = vmul.f32 %v1216, %v1216
    %v1219 = vsel %vm46, %v1217, 0.0
    %1220 = vadd.xlane.f32.xlu0 %v1219
    %v1221 = vpop.xlane.xlu0 %1220
    %v1222 = vsel %vm46, %v1218, 0.0
    %1223 = vadd.xlane.f32.xlu0 %v1222
    %v1224 = vpop.xlane.xlu0 %1223
    %v1225 = vmul.f32 %v1221, %v604
    %v1226 = vmul.f32 %v1224, %v604
    %v1227 = vadd.f32 %v1225, 1e-05
    %v1228 = vadd.f32 %v1226, 1e-05
    %v1229 = vrsqrt.pop %v1227
    %v1230 = vmul.f32 %v1229, %v1227
    %v1231 = vmul.f32 %v1230, %v1229
    %v1232 = vmul.f32 0.5, %v1231
    %v1233 = vsub.f32 1.5, %v1232
    %v1234 = vmul.f32 %v1229, %v1233
    %vm1235 = vweird.f32 %v1227
    %vm1236 = vweird.f32 %v1229
    %vm1237 = vmor %vm1235, %vm1236
    %v1238 = vsel %vm1237, %v1229, %v1234
    %v1239 = vrsqrt.pop %v1228
    %v1240 = vmul.f32 %v1239, %v1228
    %v1241 = vmul.f32 %v1240, %v1239
    %v1242 = vmul.f32 0.5, %v1241
    %v1243 = vsub.f32 1.5, %v1242
    %v1244 = vmul.f32 %v1239, %v1243
    %vm1245 = vweird.f32 %v1228
    %vm1246 = vweird.f32 %v1239
    %vm1247 = vmor %vm1245, %vm1246
    %v1248 = vsel %vm1247, %v1239, %v1244
    %v1249 = vmul.f32 %v1215, %v1238
    %v1250 = vmul.f32 %v1216, %v1248
    %v1251 = vperm.slane %v1206, 0
    %1253 = vrot.lane.b32.xlu0 %v1251, 64
    %v1254 = vpop.permute.xlu0 %1253
    %v1256 = vmul.f32 %v1249, %v1254
    %v1257 = vmul.f32 %v1250, %v1254
    %1258 = vrot.lane.b32.xlu0 %v1251, 32
    %v1259 = vpop.permute.xlu0 %1258
    %v1261 = vadd.f32 %v1256, %v1259
    %v1262 = vadd.f32 %v1257, %v1259
    %v1263 = vld [vmem:[#allocation2 + $0x40] sm:$0xff]
    %v1264 = vld [vmem:[#allocation2 + $0x48] sm:$0xff]
    %v1265 = vld [vmem:[#allocation2 + $0x50] sm:$0xff]
    %v1266 = vld [vmem:[#allocation2 + $0x58] sm:$0xff]
    %v1267 = vld [vmem:[#allocation2 + $0xa2] sm:$0x1]
    %v1268 = vperm.slane %v1267, 0
    %v1270 = vsel %vm46, %v1261, 0
    %v1273 = vsel %vm46, %v1262, 0
    %1275 = vmatpush.msra.mxu0 0.0
    %1276 = vmatpush.msra.mxu0 0.0
    %1277 = vmatpush.msra.mxu0 0.0
    %1278 = vmatpush.msra.mxu0 0.0
    %1279 = vmatpush.msra.mxu0 0.0
    %1280 = vmatpush.msra.mxu0 0.0
    %1281 = vmatpush.msra.mxu0 0.0
    %1282 = vmatpush.msra.mxu0 0.0
    %1283 = vmatpush.msra.mxu0 0.0
    %1284 = vmatpush.msra.mxu0 0.0
    %1285 = vmatpush.msra.mxu0 0.0
    %1286 = vmatpush.msra.mxu0 0.0
    %1287 = vmatpush.msra.mxu0 %v1266
    %1288 = vmatpush.msra.mxu0 %v1265
    %1289 = vmatpush.msra.mxu0 %v1264
    %1290 = vmatpush.msra.mxu0 %v1263
    %1291 = vmatmul.f32.gmra.mxu0 %v1270
    %v1292 = vpop.f32.mrf.mxu0
    %v1293 = vadd.f32 %v1268, %v1292
    %1294 = vmatmul.f32.gmra.mxu0 %v1273
    %v1295 = vpop.f32.mrf.mxu0
    %v1296 = vadd.f32 %v1268, %v1295
    %1297 = vdwg.mxu0
    %v1298 = vmax.f32 %v1293, 0.0
    %v1299 = vmax.f32 %v1296, 0.0
    %v1300 = vld [vmem:[#allocation2 + $0x60] sm:$0xff]
    %v1301 = vld [vmem:[#allocation2 + $0x68] sm:$0xff]
    %v1302 = vld [vmem:[#allocation2 + $0x70] sm:$0xff]
    %v1303 = vld [vmem:[#allocation2 + $0x78] sm:$0xff]
    %v1304 = vld [vmem:[#allocation2 + $0x80] sm:$0xff]
    %v1305 = vld [vmem:[#allocation2 + $0x88] sm:$0xff]
    %v1306 = vld [vmem:[#allocation2 + $0x90] sm:$0xff]
    %v1307 = vld [vmem:[#allocation2 + $0x98] sm:$0xff]
    %1309 = vrot.lane.b32.xlu0 %v1268, 64
    %v1310 = vpop.permute.xlu0 %1309
    %vm1312 = vcmask 523264
    %v1314 = vsel %vm1312, %v1298, 0
    %v1317 = vsel %vm1312, %v1299, 0
    %1319 = vmatpush.msra.mxu0 0.0
    %1320 = vmatpush.msra.mxu0 0.0
    %1321 = vmatpush.msra.mxu0 0.0
    %1322 = vmatpush.msra.mxu0 0.0
    %1323 = vmatpush.msra.mxu0 0.0
    %1324 = vmatpush.msra.mxu0 0.0
    %1325 = vmatpush.msra.mxu0 0.0
    %1326 = vmatpush.msra.mxu0 0.0
    %1327 = vmatpush.msra.mxu0 %v1307
    %1328 = vmatpush.msra.mxu0 %v1306
    %1329 = vmatpush.msra.mxu0 %v1305
    %1330 = vmatpush.msra.mxu0 %v1304
    %1331 = vmatpush.msra.mxu0 %v1303
    %1332 = vmatpush.msra.mxu0 %v1302
    %1333 = vmatpush.msra.mxu0 %v1301
    %1334 = vmatpush.msra.mxu0 %v1300
    %1335 = vmatmul.f32.gmra.mxu0 %v1314
    %v1336 = vpop.f32.mrf.mxu0
    %v1337 = vadd.f32 %v1310, %v1336
    %1338 = vmatmul.f32.gmra.mxu0 %v1317
    %v1339 = vpop.f32.mrf.mxu0
    %v1340 = vadd.f32 %v1310, %v1339
    %1341 = vdwg.mxu0
    %v1342 = vadd.f32 %v1337, %v1261
    %v1343 = vadd.f32 %v1340, %v1262
    %v1344 = vld [vmem:[#allocation2 + $0xa4] sm:$0x1]
    %v1345 = vsel %vm46, %v1342, 0.0
    %1346 = vadd.xlane.f32.xlu0 %v1345
    %v1347 = vpop.xlane.xlu0 %1346
    %v1348 = vsel %vm46, %v1343, 0.0
    %1349 = vadd.xlane.f32.xlu0 %v1348
    %v1350 = vpop.xlane.xlu0 %1349
    %v1351 = vmul.f32 %v1347, %v604
    %v1352 = vmul.f32 %v1350, %v604
    %v1353 = vsub.f32 %v1342, %v1351
    %v1354 = vsub.f32 %v1343, %v1352
    %v1355 = vmul.f32 %v1353, %v1353
    %v1356 = vmul.f32 %v1354, %v1354
    %v1357 = vsel %vm46, %v1355, 0.0
    %1358 = vadd.xlane.f32.xlu0 %v1357
    %v1359 = vpop.xlane.xlu0 %1358
    %v1360 = vsel %vm46, %v1356, 0.0
    %1361 = vadd.xlane.f32.xlu0 %v1360
    %v1362 = vpop.xlane.xlu0 %1361
    %v1363 = vmul.f32 %v1359, %v604
    %v1364 = vmul.f32 %v1362, %v604
    %v1365 = vadd.f32 %v1363, 1e-05
    %v1366 = vadd.f32 %v1364, 1e-05
    %v1367 = vrsqrt.pop %v1365
    %v1368 = vmul.f32 %v1367, %v1365
    %v1369 = vmul.f32 %v1368, %v1367
    %v1370 = vmul.f32 0.5, %v1369
    %v1371 = vsub.f32 1.5, %v1370
    %v1372 = vmul.f32 %v1367, %v1371
    %vm1373 = vweird.f32 %v1365
    %vm1374 = vweird.f32 %v1367
    %vm1375 = vmor %vm1373, %vm1374
    %v1376 = vsel %vm1375, %v1367, %v1372
    %v1377 = vrsqrt.pop %v1366
    %v1378 = vmul.f32 %v1377, %v1366
    %v1379 = vmul.f32 %v1378, %v1377
    %v1380 = vmul.f32 0.5, %v1379
    %v1381 = vsub.f32 1.5, %v1380
    %v1382 = vmul.f32 %v1377, %v1381
    %vm1383 = vweird.f32 %v1366
    %vm1384 = vweird.f32 %v1377
    %vm1385 = vmor %vm1383, %vm1384
    %v1386 = vsel %vm1385, %v1377, %v1382
    %v1387 = vmul.f32 %v1353, %v1376
    %v1388 = vmul.f32 %v1354, %v1386
    %v1389 = vperm.slane %v1344, 0
    %v1390 = vmul.f32 %v1387, %v1389
    %v1391 = vmul.f32 %v1388, %v1389
    %1393 = vrot.lane.b32.xlu0 %v1389, 96
    %v1394 = vpop.permute.xlu0 %1393
    %v1396 = vadd.f32 %v1390, %v1394
    %v1397 = vadd.f32 %v1391, %v1394
    %s1398 = scalar_lea.vmem [#allocation2], 168
    %v1399 = vld [vmem:[%s1398] sm:$0xff]
    %v1400 = vld [vmem:[%s1398 + $0x8] sm:$0xff]
    %v1401 = vld [vmem:[%s1398 + $0x10] sm:$0xff]
    %v1402 = vld [vmem:[%s1398 + $0x18] sm:$0xff]
    %v1403 = vld [vmem:[%s1398 + $0xa0] sm:$0x1]
    %v1404 = vperm.slane %v1403, 0
    %v1406 = vsel %vm46, %v1396, 0
    %v1409 = vsel %vm46, %v1397, 0
    %1411 = vmatpush.msra.mxu0 0.0
    %1412 = vmatpush.msra.mxu0 0.0
    %1413 = vmatpush.msra.mxu0 0.0
    %1414 = vmatpush.msra.mxu0 0.0
    %1415 = vmatpush.msra.mxu0 0.0
    %1416 = vmatpush.msra.mxu0 0.0
    %1417 = vmatpush.msra.mxu0 0.0
    %1418 = vmatpush.msra.mxu0 0.0
    %1419 = vmatpush.msra.mxu0 0.0
    %1420 = vmatpush.msra.mxu0 0.0
    %1421 = vmatpush.msra.mxu0 0.0
    %1422 = vmatpush.msra.mxu0 0.0
    %1423 = vmatpush.msra.mxu0 %v1402
    %1424 = vmatpush.msra.mxu0 %v1401
    %1425 = vmatpush.msra.mxu0 %v1400
    %1426 = vmatpush.msra.mxu0 %v1399
    %1427 = vmatmul.f32.gmra.mxu0 %v1406
    %v1428 = vpop.f32.mrf.mxu0
    %v1429 = vadd.f32 %v1404, %v1428
    %1430 = vmatmul.f32.gmra.mxu0 %v1409
    %v1431 = vpop.f32.mrf.mxu0
    %v1432 = vadd.f32 %v1404, %v1431
    %1433 = vdwg.mxu0
    %1438 = vrot.lane.b32.xlu0 %v1399, 96
    %v1439 = vpop.permute.xlu0 %1438
    %1440 = vrot.lane.b32.xlu0 %v1400, 96
    %v1441 = vpop.permute.xlu0 %1440
    %1442 = vrot.lane.b32.xlu0 %v1401, 96
    %v1443 = vpop.permute.xlu0 %1442
    %1444 = vrot.lane.b32.xlu0 %v1402, 96
    %v1445 = vpop.permute.xlu0 %1444
    %1451 = vrot.lane.b32.xlu0 %v1404, 96
    %v1452 = vpop.permute.xlu0 %1451
    %1454 = vmatpush.msra.mxu0 0.0
    %1455 = vmatpush.msra.mxu0 0.0
    %1456 = vmatpush.msra.mxu0 0.0
    %1457 = vmatpush.msra.mxu0 0.0
    %1458 = vmatpush.msra.mxu0 0.0
    %1459 = vmatpush.msra.mxu0 0.0
    %1460 = vmatpush.msra.mxu0 0.0
    %1461 = vmatpush.msra.mxu0 0.0
    %1462 = vmatpush.msra.mxu0 0.0
    %1463 = vmatpush.msra.mxu0 0.0
    %1464 = vmatpush.msra.mxu0 0.0
    %1465 = vmatpush.msra.mxu0 0.0
    %1466 = vmatpush.msra.mxu0 %v1445
    %1467 = vmatpush.msra.mxu0 %v1443
    %1468 = vmatpush.msra.mxu0 %v1441
    %1469 = vmatpush.msra.mxu0 %v1439
    %1470 = vmatmul.f32.gmra.mxu0 %v1406
    %v1471 = vpop.f32.mrf.mxu0
    %v1472 = vadd.f32 %v1452, %v1471
    %1473 = vmatmul.f32.gmra.mxu0 %v1409
    %v1474 = vpop.f32.mrf.mxu0
    %v1475 = vadd.f32 %v1452, %v1474
    %1476 = vdwg.mxu0
    %1477 = vrot.lane.b32.xlu0 %v1399, 64
    %v1478 = vpop.permute.xlu0 %1477
    %1479 = vrot.lane.b32.xlu0 %v1400, 64
    %v1480 = vpop.permute.xlu0 %1479
    %1481 = vrot.lane.b32.xlu0 %v1401, 64
    %v1482 = vpop.permute.xlu0 %1481
    %1483 = vrot.lane.b32.xlu0 %v1402, 64
    %v1484 = vpop.permute.xlu0 %1483
    %1489 = vrot.lane.b32.xlu0 %v1404, 64
    %v1490 = vpop.permute.xlu0 %1489
    %1492 = vmatpush.msra.mxu0 0.0
    %1493 = vmatpush.msra.mxu0 0.0
    %1494 = vmatpush.msra.mxu0 0.0
    %1495 = vmatpush.msra.mxu0 0.0
    %1496 = vmatpush.msra.mxu0 0.0
    %1497 = vmatpush.msra.mxu0 0.0
    %1498 = vmatpush.msra.mxu0 0.0
    %1499 = vmatpush.msra.mxu0 0.0
    %1500 = vmatpush.msra.mxu0 0.0
    %1501 = vmatpush.msra.mxu0 0.0
    %1502 = vmatpush.msra.mxu0 0.0
    %1503 = vmatpush.msra.mxu0 0.0
    %1504 = vmatpush.msra.mxu0 %v1484
    %1505 = vmatpush.msra.mxu0 %v1482
    %1506 = vmatpush.msra.mxu0 %v1480
    %1507 = vmatpush.msra.mxu0 %v1478
    %1508 = vmatmul.f32.gmra.mxu0 %v1406
    %v1509 = vpop.f32.mrf.mxu0
    %v1510 = vadd.f32 %v1490, %v1509
    %1511 = vmatmul.f32.gmra.mxu0 %v1409
    %v1512 = vpop.f32.mrf.mxu0
    %v1513 = vadd.f32 %v1490, %v1512
    %1514 = vdwg.mxu0
    %v1516 = vsel %vm157, %v1429, 0
    %v1519 = vsel %vm157, %v1472, 0
    %1521 = vmatpush.xpose.msra.mxu0 0.0
    %1522 = vmatpush.xpose.msra.mxu0 0.0
    %1523 = vmatpush.xpose.msra.mxu0 0.0
    %1524 = vmatpush.xpose.msra.mxu0 0.0
    %1525 = vmatpush.xpose.msra.mxu0 0.0
    %1526 = vmatpush.xpose.msra.mxu0 0.0
    %1527 = vmatpush.xpose.msra.mxu0 0.0
    %1528 = vmatpush.xpose.msra.mxu0 0.0
    %1529 = vmatpush.xpose.msra.mxu0 0.0
    %1530 = vmatpush.xpose.msra.mxu0 0.0
    %1531 = vmatpush.xpose.msra.mxu0 0.0
    %1532 = vmatpush.xpose.msra.mxu0 0.0
    %1533 = vmatpush.xpose.msra.mxu0 0.0
    %1534 = vmatpush.xpose.msra.mxu0 0.0
    %1535 = vmatpush.xpose.msra.mxu0 0.0
    %1536 = vmatpush.xpose.msra.mxu0 %v1519
    %1537 = vmatmul.f32.gmra.mxu0 %v1516
    %v1538 = vpop.f32.mrf.mxu0
    %v1539 = vadd.f32 %v35, %v1538
    %1540 = vdwg.mxu0
    %v1542 = vsel %vm157, %v1432, 0
    %v1545 = vsel %vm157, %v1475, 0
    %1547 = vmatpush.xpose.msra.mxu0 0.0
    %1548 = vmatpush.xpose.msra.mxu0 0.0
    %1549 = vmatpush.xpose.msra.mxu0 0.0
    %1550 = vmatpush.xpose.msra.mxu0 0.0
    %1551 = vmatpush.xpose.msra.mxu0 0.0
    %1552 = vmatpush.xpose.msra.mxu0 0.0
    %1553 = vmatpush.xpose.msra.mxu0 0.0
    %1554 = vmatpush.xpose.msra.mxu0 0.0
    %1555 = vmatpush.xpose.msra.mxu0 0.0
    %1556 = vmatpush.xpose.msra.mxu0 0.0
    %1557 = vmatpush.xpose.msra.mxu0 0.0
    %1558 = vmatpush.xpose.msra.mxu0 0.0
    %1559 = vmatpush.xpose.msra.mxu0 0.0
    %1560 = vmatpush.xpose.msra.mxu0 0.0
    %1561 = vmatpush.xpose.msra.mxu0 0.0
    %1562 = vmatpush.xpose.msra.mxu0 %v1545
    %1563 = vmatmul.f32.gmra.mxu0 %v1542
    %v1564 = vpop.f32.mrf.mxu0
    %v1565 = vadd.f32 %v36, %v1564
    %1566 = vdwg.mxu0
    %v1567 = vsel %vm210, %v1539, -inf
    %1568 = vmax.xlane.f32.xlu0 %v1567
    %v1569 = vpop.xlane.xlu0 %1568
    %v1570 = vsel %vm210, %v1565, -inf
    %1571 = vmax.xlane.f32.xlu0 %v1570
    %v1572 = vpop.xlane.xlu0 %1571
    %v1573 = vsub.f32 %v1539, %v1569
    %v1574 = vsub.f32 %v1565, %v1572
    %v1575 = vmul.f32 %v1573, 1.442695
    %v1576 = vpow.pop %v1575
    %v1577 = vmul.f32 %v1574, 1.442695
    %v1578 = vpow.pop %v1577
    %v1579 = vsel %vm210, %v1576, 0.0
    %1580 = vadd.xlane.f32.xlu0 %v1579
    %v1581 = vpop.xlane.xlu0 %1580
    %v1582 = vsel %vm210, %v1578, 0.0
    %1583 = vadd.xlane.f32.xlu0 %v1582
    %v1584 = vpop.xlane.xlu0 %1583
    %v1585 = vrcp.pop %v1581
    %v1586 = vrcp.pop %v1584
    %v1587 = vmul.f32 %v1576, %v1585
    %v1588 = vmul.f32 %v1578, %v1586
    %v1590 = vsel %vm210, %v1587, 0
    %1592 = vmatpush.msra.mxu0 0.0
    %1593 = vmatpush.msra.mxu0 0.0
    %1594 = vmatpush.msra.mxu0 0.0
    %1595 = vmatpush.msra.mxu0 0.0
    %1596 = vmatpush.msra.mxu0 0.0
    %1597 = vmatpush.msra.mxu0 0.0
    %1598 = vmatpush.msra.mxu0 0.0
    %1599 = vmatpush.msra.mxu0 0.0
    %1600 = vmatpush.msra.mxu0 0.0
    %1601 = vmatpush.msra.mxu0 0.0
    %1602 = vmatpush.msra.mxu0 0.0
    %1603 = vmatpush.msra.mxu0 0.0
    %1604 = vmatpush.msra.mxu0 0.0
    %1605 = vmatpush.msra.mxu0 0.0
    %1606 = vmatpush.msra.mxu0 0.0
    %1607 = vmatpush.msra.mxu0 %v1510
    %1608 = vmatmul.f32.gmra.mxu0 %v1590
    %v1609 = vpop.f32.mrf.mxu0
    %v1610 = vadd.f32 0.0, %v1609
    %1611 = vdwg.mxu0
    %v1613 = vsel %vm210, %v1588, 0
    %1615 = vmatpush.msra.mxu0 0.0
    %1616 = vmatpush.msra.mxu0 0.0
    %1617 = vmatpush.msra.mxu0 0.0
    %1618 = vmatpush.msra.mxu0 0.0
    %1619 = vmatpush.msra.mxu0 0.0
    %1620 = vmatpush.msra.mxu0 0.0
    %1621 = vmatpush.msra.mxu0 0.0
    %1622 = vmatpush.msra.mxu0 0.0
    %1623 = vmatpush.msra.mxu0 0.0
    %1624 = vmatpush.msra.mxu0 0.0
    %1625 = vmatpush.msra.mxu0 0.0
    %1626 = vmatpush.msra.mxu0 0.0
    %1627 = vmatpush.msra.mxu0 0.0
    %1628 = vmatpush.msra.mxu0 0.0
    %1629 = vmatpush.msra.mxu0 0.0
    %1630 = vmatpush.msra.mxu0 %v1513
    %1631 = vmatmul.f32.gmra.mxu0 %v1613
    %v1632 = vpop.f32.mrf.mxu0
    %v1633 = vadd.f32 0.0, %v1632
    %1634 = vdwg.mxu0
    %v1635 = vld [vmem:[%s1398] sm:$0xff]
    %v1636 = vld [vmem:[%s1398 + $0x8] sm:$0xff]
    %v1637 = vld [vmem:[%s1398 + $0x10] sm:$0xff]
    %v1638 = vld [vmem:[%s1398 + $0x18] sm:$0xff]
    %v1639 = vld [vmem:[%s1398 + $0xa0] sm:$0x1]
    %v1640 = vperm.slane %v1639, 0
    %1645 = vrot.lane.b32.xlu0 %v1635, 112
    %v1646 = vpop.permute.xlu0 %1645
    %1647 = vrot.lane.b32.xlu0 %v1636, 112
    %v1648 = vpop.permute.xlu0 %1647
    %1649 = vrot.lane.b32.xlu0 %v1637, 112
    %v1650 = vpop.permute.xlu0 %1649
    %1651 = vrot.lane.b32.xlu0 %v1638, 112
    %v1652 = vpop.permute.xlu0 %1651
    %1658 = vrot.lane.b32.xlu0 %v1640, 112
    %v1659 = vpop.permute.xlu0 %1658
    %1661 = vmatpush.msra.mxu0 0.0
    %1662 = vmatpush.msra.mxu0 0.0
    %1663 = vmatpush.msra.mxu0 0.0
    %1664 = vmatpush.msra.mxu0 0.0
    %1665 = vmatpush.msra.mxu0 0.0
    %1666 = vmatpush.msra.mxu0 0.0
    %1667 = vmatpush.msra.mxu0 0.0
    %1668 = vmatpush.msra.mxu0 0.0
    %1669 = vmatpush.msra.mxu0 0.0
    %1670 = vmatpush.msra.mxu0 0.0
    %1671 = vmatpush.msra.mxu0 0.0
    %1672 = vmatpush.msra.mxu0 0.0
    %1673 = vmatpush.msra.mxu0 %v1652
    %1674 = vmatpush.msra.mxu0 %v1650
    %1675 = vmatpush.msra.mxu0 %v1648
    %1676 = vmatpush.msra.mxu0 %v1646
    %1677 = vmatmul.f32.gmra.mxu0 %v1406
    %v1678 = vpop.f32.mrf.mxu0
    %v1679 = vadd.f32 %v1659, %v1678
    %1680 = vmatmul.f32.gmra.mxu0 %v1409
    %v1681 = vpop.f32.mrf.mxu0
    %v1682 = vadd.f32 %v1659, %v1681
    %1683 = vdwg.mxu0
    %1684 = vrot.lane.b32.xlu0 %v1635, 80
    %v1685 = vpop.permute.xlu0 %1684
    %1686 = vrot.lane.b32.xlu0 %v1636, 80
    %v1687 = vpop.permute.xlu0 %1686
    %1688 = vrot.lane.b32.xlu0 %v1637, 80
    %v1689 = vpop.permute.xlu0 %1688
    %1690 = vrot.lane.b32.xlu0 %v1638, 80
    %v1691 = vpop.permute.xlu0 %1690
    %1696 = vrot.lane.b32.xlu0 %v1640, 80
    %v1697 = vpop.permute.xlu0 %1696
    %1699 = vmatpush.msra.mxu0 0.0
    %1700 = vmatpush.msra.mxu0 0.0
    %1701 = vmatpush.msra.mxu0 0.0
    %1702 = vmatpush.msra.mxu0 0.0
    %1703 = vmatpush.msra.mxu0 0.0
    %1704 = vmatpush.msra.mxu0 0.0
    %1705 = vmatpush.msra.mxu0 0.0
    %1706 = vmatpush.msra.mxu0 0.0
    %1707 = vmatpush.msra.mxu0 0.0
    %1708 = vmatpush.msra.mxu0 0.0
    %1709 = vmatpush.msra.mxu0 0.0
    %1710 = vmatpush.msra.mxu0 0.0
    %1711 = vmatpush.msra.mxu0 %v1691
    %1712 = vmatpush.msra.mxu0 %v1689
    %1713 = vmatpush.msra.mxu0 %v1687
    %1714 = vmatpush.msra.mxu0 %v1685
    %1715 = vmatmul.f32.gmra.mxu0 %v1406
    %v1716 = vpop.f32.mrf.mxu0
    %v1717 = vadd.f32 %v1697, %v1716
    %1718 = vmatmul.f32.gmra.mxu0 %v1409
    %v1719 = vpop.f32.mrf.mxu0
    %v1720 = vadd.f32 %v1697, %v1719
    %1721 = vdwg.mxu0
    %1722 = vrot.lane.b32.xlu0 %v1635, 48
    %v1723 = vpop.permute.xlu0 %1722
    %1724 = vrot.lane.b32.xlu0 %v1636, 48
    %v1725 = vpop.permute.xlu0 %1724
    %1726 = vrot.lane.b32.xlu0 %v1637, 48
    %v1727 = vpop.permute.xlu0 %1726
    %1728 = vrot.lane.b32.xlu0 %v1638, 48
    %v1729 = vpop.permute.xlu0 %1728
    %1734 = vrot.lane.b32.xlu0 %v1640, 48
    %v1735 = vpop.permute.xlu0 %1734
    %1737 = vmatpush.msra.mxu0 0.0
    %1738 = vmatpush.msra.mxu0 0.0
    %1739 = vmatpush.msra.mxu0 0.0
    %1740 = vmatpush.msra.mxu0 0.0
    %1741 = vmatpush.msra.mxu0 0.0
    %1742 = vmatpush.msra.mxu0 0.0
    %1743 = vmatpush.msra.mxu0 0.0
    %1744 = vmatpush.msra.mxu0 0.0
    %1745 = vmatpush.msra.mxu0 0.0
    %1746 = vmatpush.msra.mxu0 0.0
    %1747 = vmatpush.msra.mxu0 0.0
    %1748 = vmatpush.msra.mxu0 0.0
    %1749 = vmatpush.msra.mxu0 %v1729
    %1750 = vmatpush.msra.mxu0 %v1727
    %1751 = vmatpush.msra.mxu0 %v1725
    %1752 = vmatpush.msra.mxu0 %v1723
    %1753 = vmatmul.f32.gmra.mxu0 %v1406
    %v1754 = vpop.f32.mrf.mxu0
    %v1755 = vadd.f32 %v1735, %v1754
    %1756 = vmatmul.f32.gmra.mxu0 %v1409
    %v1757 = vpop.f32.mrf.mxu0
    %v1758 = vadd.f32 %v1735, %v1757
    %1759 = vdwg.mxu0
    %v1761 = vsel %vm157, %v1679, 0
    %v1764 = vsel %vm157, %v1717, 0
    %1766 = vmatpush.xpose.msra.mxu0 0.0
    %1767 = vmatpush.xpose.msra.mxu0 0.0
    %1768 = vmatpush.xpose.msra.mxu0 0.0
    %1769 = vmatpush.xpose.msra.mxu0 0.0
    %1770 = vmatpush.xpose.msra.mxu0 0.0
    %1771 = vmatpush.xpose.msra.mxu0 0.0
    %1772 = vmatpush.xpose.msra.mxu0 0.0
    %1773 = vmatpush.xpose.msra.mxu0 0.0
    %1774 = vmatpush.xpose.msra.mxu0 0.0
    %1775 = vmatpush.xpose.msra.mxu0 0.0
    %1776 = vmatpush.xpose.msra.mxu0 0.0
    %1777 = vmatpush.xpose.msra.mxu0 0.0
    %1778 = vmatpush.xpose.msra.mxu0 0.0
    %1779 = vmatpush.xpose.msra.mxu0 0.0
    %1780 = vmatpush.xpose.msra.mxu0 0.0
    %1781 = vmatpush.xpose.msra.mxu0 %v1764
    %1782 = vmatmul.f32.gmra.mxu0 %v1761
    %v1783 = vpop.f32.mrf.mxu0
    %v1784 = vadd.f32 %v35, %v1783
    %1785 = vdwg.mxu0
    %v1787 = vsel %vm157, %v1682, 0
    %v1790 = vsel %vm157, %v1720, 0
    %1792 = vmatpush.xpose.msra.mxu0 0.0
    %1793 = vmatpush.xpose.msra.mxu0 0.0
    %1794 = vmatpush.xpose.msra.mxu0 0.0
    %1795 = vmatpush.xpose.msra.mxu0 0.0
    %1796 = vmatpush.xpose.msra.mxu0 0.0
    %1797 = vmatpush.xpose.msra.mxu0 0.0
    %1798 = vmatpush.xpose.msra.mxu0 0.0
    %1799 = vmatpush.xpose.msra.mxu0 0.0
    %1800 = vmatpush.xpose.msra.mxu0 0.0
    %1801 = vmatpush.xpose.msra.mxu0 0.0
    %1802 = vmatpush.xpose.msra.mxu0 0.0
    %1803 = vmatpush.xpose.msra.mxu0 0.0
    %1804 = vmatpush.xpose.msra.mxu0 0.0
    %1805 = vmatpush.xpose.msra.mxu0 0.0
    %1806 = vmatpush.xpose.msra.mxu0 0.0
    %1807 = vmatpush.xpose.msra.mxu0 %v1790
    %1808 = vmatmul.f32.gmra.mxu0 %v1787
    %v1809 = vpop.f32.mrf.mxu0
    %v1810 = vadd.f32 %v36, %v1809
    %1811 = vdwg.mxu0
    %v1812 = vsel %vm210, %v1784, -inf
    %1813 = vmax.xlane.f32.xlu0 %v1812
    %v1814 = vpop.xlane.xlu0 %1813
    %v1815 = vsel %vm210, %v1810, -inf
    %1816 = vmax.xlane.f32.xlu0 %v1815
    %v1817 = vpop.xlane.xlu0 %1816
    %v1818 = vsub.f32 %v1784, %v1814
    %v1819 = vsub.f32 %v1810, %v1817
    %v1820 = vmul.f32 %v1818, 1.442695
    %v1821 = vpow.pop %v1820
    %v1822 = vmul.f32 %v1819, 1.442695
    %v1823 = vpow.pop %v1822
    %v1824 = vsel %vm210, %v1821, 0.0
    %1825 = vadd.xlane.f32.xlu0 %v1824
    %v1826 = vpop.xlane.xlu0 %1825
    %v1827 = vsel %vm210, %v1823, 0.0
    %1828 = vadd.xlane.f32.xlu0 %v1827
    %v1829 = vpop.xlane.xlu0 %1828
    %v1830 = vrcp.pop %v1826
    %v1831 = vrcp.pop %v1829
    %v1832 = vmul.f32 %v1821, %v1830
    %v1833 = vmul.f32 %v1823, %v1831
    %v1835 = vsel %vm210, %v1832, 0
    %1837 = vmatpush.msra.mxu0 0.0
    %1838 = vmatpush.msra.mxu0 0.0
    %1839 = vmatpush.msra.mxu0 0.0
    %1840 = vmatpush.msra.mxu0 0.0
    %1841 = vmatpush.msra.mxu0 0.0
    %1842 = vmatpush.msra.mxu0 0.0
    %1843 = vmatpush.msra.mxu0 0.0
    %1844 = vmatpush.msra.mxu0 0.0
    %1845 = vmatpush.msra.mxu0 0.0
    %1846 = vmatpush.msra.mxu0 0.0
    %1847 = vmatpush.msra.mxu0 0.0
    %1848 = vmatpush.msra.mxu0 0.0
    %1849 = vmatpush.msra.mxu0 0.0
    %1850 = vmatpush.msra.mxu0 0.0
    %1851 = vmatpush.msra.mxu0 0.0
    %1852 = vmatpush.msra.mxu0 %v1755
    %1853 = vmatmul.f32.gmra.mxu0 %v1835
    %v1854 = vpop.f32.mrf.mxu0
    %v1855 = vadd.f32 0.0, %v1854
    %1856 = vdwg.mxu0
    %v1858 = vsel %vm210, %v1833, 0
    %1860 = vmatpush.msra.mxu0 0.0
    %1861 = vmatpush.msra.mxu0 0.0
    %1862 = vmatpush.msra.mxu0 0.0
    %1863 = vmatpush.msra.mxu0 0.0
    %1864 = vmatpush.msra.mxu0 0.0
    %1865 = vmatpush.msra.mxu0 0.0
    %1866 = vmatpush.msra.mxu0 0.0
    %1867 = vmatpush.msra.mxu0 0.0
    %1868 = vmatpush.msra.mxu0 0.0
    %1869 = vmatpush.msra.mxu0 0.0
    %1870 = vmatpush.msra.mxu0 0.0
    %1871 = vmatpush.msra.mxu0 0.0
    %1872 = vmatpush.msra.mxu0 0.0
    %1873 = vmatpush.msra.mxu0 0.0
    %1874 = vmatpush.msra.mxu0 0.0
    %1875 = vmatpush.msra.mxu0 %v1758
    %1876 = vmatmul.f32.gmra.mxu0 %v1858
    %v1877 = vpop.f32.mrf.mxu0
    %v1878 = vadd.f32 0.0, %v1877
    %1879 = vdwg.mxu0
    %1882 = vrot.lane.b32.xlu0 %v1855, 16
    %v1883 = vpop.permute.xlu0 %1882
    %1884 = vrot.lane.b32.xlu0 %v1878, 16
    %v1885 = vpop.permute.xlu0 %1884
    %v1888 = vsel %vm157, %v1610, %v1883
    %v1889 = vsel %vm157, %v1633, %v1885
    %v1890 = vld [vmem:[%s1398] sm:$0xff]
    %v1891 = vld [vmem:[%s1398 + $0x8] sm:$0xff]
    %v1892 = vld [vmem:[%s1398 + $0x10] sm:$0xff]
    %v1893 = vld [vmem:[%s1398 + $0x18] sm:$0xff]
    %v1894 = vld [vmem:[%s1398 + $0xa0] sm:$0x1]
    %v1895 = vperm.slane %v1894, 0
    %1900 = vrot.lane.b32.xlu0 %v1890, 32
    %v1901 = vpop.permute.xlu0 %1900
    %1902 = vrot.lane.b32.xlu0 %v1891, 32
    %v1903 = vpop.permute.xlu0 %1902
    %1904 = vrot.lane.b32.xlu0 %v1892, 32
    %v1905 = vpop.permute.xlu0 %1904
    %1906 = vrot.lane.b32.xlu0 %v1893, 32
    %v1907 = vpop.permute.xlu0 %1906
    %1913 = vrot.lane.b32.xlu0 %v1895, 32
    %v1914 = vpop.permute.xlu0 %1913
    %v1917 = vsel %vm46, %v1888, 0
    %v1920 = vsel %vm46, %v1889, 0
    %1922 = vmatpush.msra.mxu0 0.0
    %1923 = vmatpush.msra.mxu0 0.0
    %1924 = vmatpush.msra.mxu0 0.0
    %1925 = vmatpush.msra.mxu0 0.0
    %1926 = vmatpush.msra.mxu0 0.0
    %1927 = vmatpush.msra.mxu0 0.0
    %1928 = vmatpush.msra.mxu0 0.0
    %1929 = vmatpush.msra.mxu0 0.0
    %1930 = vmatpush.msra.mxu0 0.0
    %1931 = vmatpush.msra.mxu0 0.0
    %1932 = vmatpush.msra.mxu0 0.0
    %1933 = vmatpush.msra.mxu0 0.0
    %1934 = vmatpush.msra.mxu0 %v1907
    %1935 = vmatpush.msra.mxu0 %v1905
    %1936 = vmatpush.msra.mxu0 %v1903
    %1937 = vmatpush.msra.mxu0 %v1901
    %1938 = vmatmul.f32.gmra.mxu0 %v1917
    %v1939 = vpop.f32.mrf.mxu0
    %v1940 = vadd.f32 %v1914, %v1939
    %1941 = vmatmul.f32.gmra.mxu0 %v1920
    %v1942 = vpop.f32.mrf.mxu0
    %v1943 = vadd.f32 %v1914, %v1942
    %1944 = vdwg.mxu0
    %v1945 = vadd.f32 %v1940, %v1396
    %v1946 = vadd.f32 %v1943, %v1397
    %v1947 = vld [vmem:[%s1398 + $0xa3] sm:$0x1]
    %v1948 = vsel %vm46, %v1945, 0.0
    %1949 = vadd.xlane.f32.xlu0 %v1948
    %v1950 = vpop.xlane.xlu0 %1949
    %v1951 = vsel %vm46, %v1946, 0.0
    %1952 = vadd.xlane.f32.xlu0 %v1951
    %v1953 = vpop.xlane.xlu0 %1952
    %v1954 = vmul.f32 %v1950, %v604
    %v1955 = vmul.f32 %v1953, %v604
    %v1956 = vsub.f32 %v1945, %v1954
    %v1957 = vsub.f32 %v1946, %v1955
    %v1958 = vmul.f32 %v1956, %v1956
    %v1959 = vmul.f32 %v1957, %v1957
    %v1960 = vsel %vm46, %v1958, 0.0
    %1961 = vadd.xlane.f32.xlu0 %v1960
    %v1962 = vpop.xlane.xlu0 %1961
    %v1963 = vsel %vm46, %v1959, 0.0
    %1964 = vadd.xlane.f32.xlu0 %v1963
    %v1965 = vpop.xlane.xlu0 %1964
    %v1966 = vmul.f32 %v1962, %v604
    %v1967 = vmul.f32 %v1965, %v604
    %v1968 = vadd.f32 %v1966, 1e-05
    %v1969 = vadd.f32 %v1967, 1e-05
    %v1970 = vrsqrt.pop %v1968
    %v1971 = vmul.f32 %v1970, %v1968
    %v1972 = vmul.f32 %v1971, %v1970
    %v1973 = vmul.f32 0.5, %v1972
    %v1974 = vsub.f32 1.5, %v1973
    %v1975 = vmul.f32 %v1970, %v1974
    %vm1976 = vweird.f32 %v1968
    %vm1977 = vweird.f32 %v1970
    %vm1978 = vmor %vm1976, %vm1977
    %v1979 = vsel %vm1978, %v1970, %v1975
    %v1980 = vrsqrt.pop %v1969
    %v1981 = vmul.f32 %v1980, %v1969
    %v1982 = vmul.f32 %v1981, %v1980
    %v1983 = vmul.f32 0.5, %v1982
    %v1984 = vsub.f32 1.5, %v1983
    %v1985 = vmul.f32 %v1980, %v1984
    %vm1986 = vweird.f32 %v1969
    %vm1987 = vweird.f32 %v1980
    %vm1988 = vmor %vm1986, %vm1987
    %v1989 = vsel %vm1988, %v1980, %v1985
    %v1990 = vmul.f32 %v1956, %v1979
    %v1991 = vmul.f32 %v1957, %v1989
    %v1992 = vperm.slane %v1947, 0
    %v1993 = vmul.f32 %v1990, %v1992
    %v1994 = vmul.f32 %v1991, %v1992
    %1996 = vrot.lane.b32.xlu0 %v1992, 96
    %v1997 = vpop.permute.xlu0 %1996
    %v1999 = vadd.f32 %v1993, %v1997
    %v2000 = vadd.f32 %v1994, %v1997
    %v2001 = vld [vmem:[%s1398 + $0x20] sm:$0xff]
    %v2002 = vld [vmem:[%s1398 + $0x28] sm:$0xff]
    %v2003 = vld [vmem:[%s1398 + $0x30] sm:$0xff]
    %v2004 = vld [vmem:[%s1398 + $0x38] sm:$0xff]
    %v2005 = vld [vmem:[%s1398 + $0xa1] sm:$0x1]
    %v2006 = vperm.slane %v2005, 0
    %v2008 = vsel %vm46, %v1999, 0
    %v2011 = vsel %vm46, %v2000, 0
    %2013 = vmatpush.msra.mxu0 0.0
    %2014 = vmatpush.msra.mxu0 0.0
    %2015 = vmatpush.msra.mxu0 0.0
    %2016 = vmatpush.msra.mxu0 0.0
    %2017 = vmatpush.msra.mxu0 0.0
    %2018 = vmatpush.msra.mxu0 0.0
    %2019 = vmatpush.msra.mxu0 0.0
    %2020 = vmatpush.msra.mxu0 0.0
    %2021 = vmatpush.msra.mxu0 0.0
    %2022 = vmatpush.msra.mxu0 0.0
    %2023 = vmatpush.msra.mxu0 0.0
    %2024 = vmatpush.msra.mxu0 0.0
    %2025 = vmatpush.msra.mxu0 %v2004
    %2026 = vmatpush.msra.mxu0 %v2003
    %2027 = vmatpush.msra.mxu0 %v2002
    %2028 = vmatpush.msra.mxu0 %v2001
    %2029 = vmatmul.f32.gmra.mxu0 %v2008
    %v2030 = vpop.f32.mrf.mxu0
    %v2031 = vadd.f32 %v2006, %v2030
    %2032 = vmatmul.f32.gmra.mxu0 %v2011
    %v2033 = vpop.f32.mrf.mxu0
    %v2034 = vadd.f32 %v2006, %v2033
    %2035 = vdwg.mxu0
    %2040 = vrot.lane.b32.xlu0 %v2001, 96
    %v2041 = vpop.permute.xlu0 %2040
    %2042 = vrot.lane.b32.xlu0 %v2002, 96
    %v2043 = vpop.permute.xlu0 %2042
    %2044 = vrot.lane.b32.xlu0 %v2003, 96
    %v2045 = vpop.permute.xlu0 %2044
    %2046 = vrot.lane.b32.xlu0 %v2004, 96
    %v2047 = vpop.permute.xlu0 %2046
    %2053 = vrot.lane.b32.xlu0 %v2006, 96
    %v2054 = vpop.permute.xlu0 %2053
    %2056 = vmatpush.msra.mxu0 0.0
    %2057 = vmatpush.msra.mxu0 0.0
    %2058 = vmatpush.msra.mxu0 0.0
    %2059 = vmatpush.msra.mxu0 0.0
    %2060 = vmatpush.msra.mxu0 0.0
    %2061 = vmatpush.msra.mxu0 0.0
    %2062 = vmatpush.msra.mxu0 0.0
    %2063 = vmatpush.msra.mxu0 0.0
    %2064 = vmatpush.msra.mxu0 0.0
    %2065 = vmatpush.msra.mxu0 0.0
    %2066 = vmatpush.msra.mxu0 0.0
    %2067 = vmatpush.msra.mxu0 0.0
    %2068 = vmatpush.msra.mxu0 %v2047
    %2069 = vmatpush.msra.mxu0 %v2045
    %2070 = vmatpush.msra.mxu0 %v2043
    %2071 = vmatpush.msra.mxu0 %v2041
    %2072 = vmatmul.f32.gmra.mxu0 %v708
    %v2073 = vpop.f32.mrf.mxu0
    %v2074 = vadd.f32 %v2054, %v2073
    %2075 = vmatmul.f32.gmra.mxu0 %v711
    %v2076 = vpop.f32.mrf.mxu0
    %v2077 = vadd.f32 %v2054, %v2076
    %2078 = vdwg.mxu0
    %2079 = vrot.lane.b32.xlu0 %v2001, 64
    %v2080 = vpop.permute.xlu0 %2079
    %2081 = vrot.lane.b32.xlu0 %v2002, 64
    %v2082 = vpop.permute.xlu0 %2081
    %2083 = vrot.lane.b32.xlu0 %v2003, 64
    %v2084 = vpop.permute.xlu0 %2083
    %2085 = vrot.lane.b32.xlu0 %v2004, 64
    %v2086 = vpop.permute.xlu0 %2085
    %2091 = vrot.lane.b32.xlu0 %v2006, 64
    %v2092 = vpop.permute.xlu0 %2091
    %2094 = vmatpush.msra.mxu0 0.0
    %2095 = vmatpush.msra.mxu0 0.0
    %2096 = vmatpush.msra.mxu0 0.0
    %2097 = vmatpush.msra.mxu0 0.0
    %2098 = vmatpush.msra.mxu0 0.0
    %2099 = vmatpush.msra.mxu0 0.0
    %2100 = vmatpush.msra.mxu0 0.0
    %2101 = vmatpush.msra.mxu0 0.0
    %2102 = vmatpush.msra.mxu0 0.0
    %2103 = vmatpush.msra.mxu0 0.0
    %2104 = vmatpush.msra.mxu0 0.0
    %2105 = vmatpush.msra.mxu0 0.0
    %2106 = vmatpush.msra.mxu0 %v2086
    %2107 = vmatpush.msra.mxu0 %v2084
    %2108 = vmatpush.msra.mxu0 %v2082
    %2109 = vmatpush.msra.mxu0 %v2080
    %2110 = vmatmul.f32.gmra.mxu0 %v708
    %v2111 = vpop.f32.mrf.mxu0
    %v2112 = vadd.f32 %v2092, %v2111
    %2113 = vmatmul.f32.gmra.mxu0 %v711
    %v2114 = vpop.f32.mrf.mxu0
    %v2115 = vadd.f32 %v2092, %v2114
    %2116 = vdwg.mxu0
    %v2118 = vsel %vm157, %v2031, 0
    %v2121 = vsel %vm157, %v2074, 0
    %2123 = vmatpush.xpose.msra.mxu0 0.0
    %2124 = vmatpush.xpose.msra.mxu0 0.0
    %2125 = vmatpush.xpose.msra.mxu0 0.0
    %2126 = vmatpush.xpose.msra.mxu0 0.0
    %2127 = vmatpush.xpose.msra.mxu0 0.0
    %2128 = vmatpush.xpose.msra.mxu0 0.0
    %2129 = vmatpush.xpose.msra.mxu0 0.0
    %2130 = vmatpush.xpose.msra.mxu0 0.0
    %2131 = vmatpush.xpose.msra.mxu0 0.0
    %2132 = vmatpush.xpose.msra.mxu0 0.0
    %2133 = vmatpush.xpose.msra.mxu0 0.0
    %2134 = vmatpush.xpose.msra.mxu0 0.0
    %2135 = vmatpush.xpose.msra.mxu0 0.0
    %2136 = vmatpush.xpose.msra.mxu0 0.0
    %2137 = vmatpush.xpose.msra.mxu0 0.0
    %2138 = vmatpush.xpose.msra.mxu0 %v2121
    %2139 = vmatmul.f32.gmra.mxu0 %v2118
    %v2140 = vpop.f32.mrf.mxu0
    %v2141 = vadd.f32 %v38, %v2140
    %2142 = vdwg.mxu0
    %v2144 = vsel %vm157, %v2034, 0
    %v2147 = vsel %vm157, %v2077, 0
    %2149 = vmatpush.xpose.msra.mxu0 0.0
    %2150 = vmatpush.xpose.msra.mxu0 0.0
    %2151 = vmatpush.xpose.msra.mxu0 0.0
    %2152 = vmatpush.xpose.msra.mxu0 0.0
    %2153 = vmatpush.xpose.msra.mxu0 0.0
    %2154 = vmatpush.xpose.msra.mxu0 0.0
    %2155 = vmatpush.xpose.msra.mxu0 0.0
    %2156 = vmatpush.xpose.msra.mxu0 0.0
    %2157 = vmatpush.xpose.msra.mxu0 0.0
    %2158 = vmatpush.xpose.msra.mxu0 0.0
    %2159 = vmatpush.xpose.msra.mxu0 0.0
    %2160 = vmatpush.xpose.msra.mxu0 0.0
    %2161 = vmatpush.xpose.msra.mxu0 0.0
    %2162 = vmatpush.xpose.msra.mxu0 0.0
    %2163 = vmatpush.xpose.msra.mxu0 0.0
    %2164 = vmatpush.xpose.msra.mxu0 %v2147
    %2165 = vmatmul.f32.gmra.mxu0 %v2144
    %v2166 = vpop.f32.mrf.mxu0
    %v2167 = vadd.f32 %v39, %v2166
    %2168 = vdwg.mxu0
    %v2169 = vsel %vm210, %v2141, -inf
    %2170 = vmax.xlane.f32.xlu0 %v2169
    %v2171 = vpop.xlane.xlu0 %2170
    %v2172 = vsel %vm210, %v2167, -inf
    %2173 = vmax.xlane.f32.xlu0 %v2172
    %v2174 = vpop.xlane.xlu0 %2173
    %v2175 = vsub.f32 %v2141, %v2171
    %v2176 = vsub.f32 %v2167, %v2174
    %v2177 = vmul.f32 %v2175, 1.442695
    %v2178 = vpow.pop %v2177
    %v2179 = vmul.f32 %v2176, 1.442695
    %v2180 = vpow.pop %v2179
    %v2181 = vsel %vm210, %v2178, 0.0
    %2182 = vadd.xlane.f32.xlu0 %v2181
    %v2183 = vpop.xlane.xlu0 %2182
    %v2184 = vsel %vm210, %v2180, 0.0
    %2185 = vadd.xlane.f32.xlu0 %v2184
    %v2186 = vpop.xlane.xlu0 %2185
    %v2187 = vrcp.pop %v2183
    %v2188 = vrcp.pop %v2186
    %v2189 = vmul.f32 %v2178, %v2187
    %v2190 = vmul.f32 %v2180, %v2188
    %v2192 = vsel %vm210, %v2189, 0
    %2194 = vmatpush.msra.mxu0 0.0
    %2195 = vmatpush.msra.mxu0 0.0
    %2196 = vmatpush.msra.mxu0 0.0
    %2197 = vmatpush.msra.mxu0 0.0
    %2198 = vmatpush.msra.mxu0 0.0
    %2199 = vmatpush.msra.mxu0 0.0
    %2200 = vmatpush.msra.mxu0 0.0
    %2201 = vmatpush.msra.mxu0 0.0
    %2202 = vmatpush.msra.mxu0 0.0
    %2203 = vmatpush.msra.mxu0 0.0
    %2204 = vmatpush.msra.mxu0 0.0
    %2205 = vmatpush.msra.mxu0 0.0
    %2206 = vmatpush.msra.mxu0 0.0
    %2207 = vmatpush.msra.mxu0 0.0
    %2208 = vmatpush.msra.mxu0 0.0
    %2209 = vmatpush.msra.mxu0 %v2112
    %2210 = vmatmul.f32.gmra.mxu0 %v2192
    %v2211 = vpop.f32.mrf.mxu0
    %v2212 = vadd.f32 0.0, %v2211
    %2213 = vdwg.mxu0
    %v2215 = vsel %vm210, %v2190, 0
    %2217 = vmatpush.msra.mxu0 0.0
    %2218 = vmatpush.msra.mxu0 0.0
    %2219 = vmatpush.msra.mxu0 0.0
    %2220 = vmatpush.msra.mxu0 0.0
    %2221 = vmatpush.msra.mxu0 0.0
    %2222 = vmatpush.msra.mxu0 0.0
    %2223 = vmatpush.msra.mxu0 0.0
    %2224 = vmatpush.msra.mxu0 0.0
    %2225 = vmatpush.msra.mxu0 0.0
    %2226 = vmatpush.msra.mxu0 0.0
    %2227 = vmatpush.msra.mxu0 0.0
    %2228 = vmatpush.msra.mxu0 0.0
    %2229 = vmatpush.msra.mxu0 0.0
    %2230 = vmatpush.msra.mxu0 0.0
    %2231 = vmatpush.msra.mxu0 0.0
    %2232 = vmatpush.msra.mxu0 %v2115
    %2233 = vmatmul.f32.gmra.mxu0 %v2215
    %v2234 = vpop.f32.mrf.mxu0
    %v2235 = vadd.f32 0.0, %v2234
    %2236 = vdwg.mxu0
    %v2237 = vld [vmem:[%s1398 + $0x20] sm:$0xff]
    %v2238 = vld [vmem:[%s1398 + $0x28] sm:$0xff]
    %v2239 = vld [vmem:[%s1398 + $0x30] sm:$0xff]
    %v2240 = vld [vmem:[%s1398 + $0x38] sm:$0xff]
    %v2241 = vld [vmem:[%s1398 + $0xa1] sm:$0x1]
    %v2242 = vperm.slane %v2241, 0
    %2247 = vrot.lane.b32.xlu0 %v2237, 112
    %v2248 = vpop.permute.xlu0 %2247
    %2249 = vrot.lane.b32.xlu0 %v2238, 112
    %v2250 = vpop.permute.xlu0 %2249
    %2251 = vrot.lane.b32.xlu0 %v2239, 112
    %v2252 = vpop.permute.xlu0 %2251
    %2253 = vrot.lane.b32.xlu0 %v2240, 112
    %v2254 = vpop.permute.xlu0 %2253
    %2260 = vrot.lane.b32.xlu0 %v2242, 112
    %v2261 = vpop.permute.xlu0 %2260
    %2263 = vmatpush.msra.mxu0 0.0
    %2264 = vmatpush.msra.mxu0 0.0
    %2265 = vmatpush.msra.mxu0 0.0
    %2266 = vmatpush.msra.mxu0 0.0
    %2267 = vmatpush.msra.mxu0 0.0
    %2268 = vmatpush.msra.mxu0 0.0
    %2269 = vmatpush.msra.mxu0 0.0
    %2270 = vmatpush.msra.mxu0 0.0
    %2271 = vmatpush.msra.mxu0 0.0
    %2272 = vmatpush.msra.mxu0 0.0
    %2273 = vmatpush.msra.mxu0 0.0
    %2274 = vmatpush.msra.mxu0 0.0
    %2275 = vmatpush.msra.mxu0 %v2254
    %2276 = vmatpush.msra.mxu0 %v2252
    %2277 = vmatpush.msra.mxu0 %v2250
    %2278 = vmatpush.msra.mxu0 %v2248
    %2279 = vmatmul.f32.gmra.mxu0 %v2008
    %v2280 = vpop.f32.mrf.mxu0
    %v2281 = vadd.f32 %v2261, %v2280
    %2282 = vmatmul.f32.gmra.mxu0 %v2011
    %v2283 = vpop.f32.mrf.mxu0
    %v2284 = vadd.f32 %v2261, %v2283
    %2285 = vdwg.mxu0
    %2286 = vrot.lane.b32.xlu0 %v2237, 80
    %v2287 = vpop.permute.xlu0 %2286
    %2288 = vrot.lane.b32.xlu0 %v2238, 80
    %v2289 = vpop.permute.xlu0 %2288
    %2290 = vrot.lane.b32.xlu0 %v2239, 80
    %v2291 = vpop.permute.xlu0 %2290
    %2292 = vrot.lane.b32.xlu0 %v2240, 80
    %v2293 = vpop.permute.xlu0 %2292
    %2298 = vrot.lane.b32.xlu0 %v2242, 80
    %v2299 = vpop.permute.xlu0 %2298
    %2301 = vmatpush.msra.mxu0 0.0
    %2302 = vmatpush.msra.mxu0 0.0
    %2303 = vmatpush.msra.mxu0 0.0
    %2304 = vmatpush.msra.mxu0 0.0
    %2305 = vmatpush.msra.mxu0 0.0
    %2306 = vmatpush.msra.mxu0 0.0
    %2307 = vmatpush.msra.mxu0 0.0
    %2308 = vmatpush.msra.mxu0 0.0
    %2309 = vmatpush.msra.mxu0 0.0
    %2310 = vmatpush.msra.mxu0 0.0
    %2311 = vmatpush.msra.mxu0 0.0
    %2312 = vmatpush.msra.mxu0 0.0
    %2313 = vmatpush.msra.mxu0 %v2293
    %2314 = vmatpush.msra.mxu0 %v2291
    %2315 = vmatpush.msra.mxu0 %v2289
    %2316 = vmatpush.msra.mxu0 %v2287
    %2317 = vmatmul.f32.gmra.mxu0 %v708
    %v2318 = vpop.f32.mrf.mxu0
    %v2319 = vadd.f32 %v2299, %v2318
    %2320 = vmatmul.f32.gmra.mxu0 %v711
    %v2321 = vpop.f32.mrf.mxu0
    %v2322 = vadd.f32 %v2299, %v2321
    %2323 = vdwg.mxu0
    %2324 = vrot.lane.b32.xlu0 %v2237, 48
    %v2325 = vpop.permute.xlu0 %2324
    %2326 = vrot.lane.b32.xlu0 %v2238, 48
    %v2327 = vpop.permute.xlu0 %2326
    %2328 = vrot.lane.b32.xlu0 %v2239, 48
    %v2329 = vpop.permute.xlu0 %2328
    %2330 = vrot.lane.b32.xlu0 %v2240, 48
    %v2331 = vpop.permute.xlu0 %2330
    %2336 = vrot.lane.b32.xlu0 %v2242, 48
    %v2337 = vpop.permute.xlu0 %2336
    %2339 = vmatpush.msra.mxu0 0.0
    %2340 = vmatpush.msra.mxu0 0.0
    %2341 = vmatpush.msra.mxu0 0.0
    %2342 = vmatpush.msra.mxu0 0.0
    %2343 = vmatpush.msra.mxu0 0.0
    %2344 = vmatpush.msra.mxu0 0.0
    %2345 = vmatpush.msra.mxu0 0.0
    %2346 = vmatpush.msra.mxu0 0.0
    %2347 = vmatpush.msra.mxu0 0.0
    %2348 = vmatpush.msra.mxu0 0.0
    %2349 = vmatpush.msra.mxu0 0.0
    %2350 = vmatpush.msra.mxu0 0.0
    %2351 = vmatpush.msra.mxu0 %v2331
    %2352 = vmatpush.msra.mxu0 %v2329
    %2353 = vmatpush.msra.mxu0 %v2327
    %2354 = vmatpush.msra.mxu0 %v2325
    %2355 = vmatmul.f32.gmra.mxu0 %v708
    %v2356 = vpop.f32.mrf.mxu0
    %v2357 = vadd.f32 %v2337, %v2356
    %2358 = vmatmul.f32.gmra.mxu0 %v711
    %v2359 = vpop.f32.mrf.mxu0
    %v2360 = vadd.f32 %v2337, %v2359
    %2361 = vdwg.mxu0
    %v2363 = vsel %vm157, %v2281, 0
    %v2366 = vsel %vm157, %v2319, 0
    %2368 = vmatpush.xpose.msra.mxu0 0.0
    %2369 = vmatpush.xpose.msra.mxu0 0.0
    %2370 = vmatpush.xpose.msra.mxu0 0.0
    %2371 = vmatpush.xpose.msra.mxu0 0.0
    %2372 = vmatpush.xpose.msra.mxu0 0.0
    %2373 = vmatpush.xpose.msra.mxu0 0.0
    %2374 = vmatpush.xpose.msra.mxu0 0.0
    %2375 = vmatpush.xpose.msra.mxu0 0.0
    %2376 = vmatpush.xpose.msra.mxu0 0.0
    %2377 = vmatpush.xpose.msra.mxu0 0.0
    %2378 = vmatpush.xpose.msra.mxu0 0.0
    %2379 = vmatpush.xpose.msra.mxu0 0.0
    %2380 = vmatpush.xpose.msra.mxu0 0.0
    %2381 = vmatpush.xpose.msra.mxu0 0.0
    %2382 = vmatpush.xpose.msra.mxu0 0.0
    %2383 = vmatpush.xpose.msra.mxu0 %v2366
    %2384 = vmatmul.f32.gmra.mxu0 %v2363
    %v2385 = vpop.f32.mrf.mxu0
    %v2386 = vadd.f32 %v38, %v2385
    %2387 = vdwg.mxu0
    %v2389 = vsel %vm157, %v2284, 0
    %v2392 = vsel %vm157, %v2322, 0
    %2394 = vmatpush.xpose.msra.mxu0 0.0
    %2395 = vmatpush.xpose.msra.mxu0 0.0
    %2396 = vmatpush.xpose.msra.mxu0 0.0
    %2397 = vmatpush.xpose.msra.mxu0 0.0
    %2398 = vmatpush.xpose.msra.mxu0 0.0
    %2399 = vmatpush.xpose.msra.mxu0 0.0
    %2400 = vmatpush.xpose.msra.mxu0 0.0
    %2401 = vmatpush.xpose.msra.mxu0 0.0
    %2402 = vmatpush.xpose.msra.mxu0 0.0
    %2403 = vmatpush.xpose.msra.mxu0 0.0
    %2404 = vmatpush.xpose.msra.mxu0 0.0
    %2405 = vmatpush.xpose.msra.mxu0 0.0
    %2406 = vmatpush.xpose.msra.mxu0 0.0
    %2407 = vmatpush.xpose.msra.mxu0 0.0
    %2408 = vmatpush.xpose.msra.mxu0 0.0
    %2409 = vmatpush.xpose.msra.mxu0 %v2392
    %2410 = vmatmul.f32.gmra.mxu0 %v2389
    %v2411 = vpop.f32.mrf.mxu0
    %v2412 = vadd.f32 %v39, %v2411
    %2413 = vdwg.mxu0
    %v2414 = vsel %vm210, %v2386, -inf
    %2415 = vmax.xlane.f32.xlu0 %v2414
    %v2416 = vpop.xlane.xlu0 %2415
    %v2417 = vsel %vm210, %v2412, -inf
    %2418 = vmax.xlane.f32.xlu0 %v2417
    %v2419 = vpop.xlane.xlu0 %2418
    %v2420 = vsub.f32 %v2386, %v2416
    %v2421 = vsub.f32 %v2412, %v2419
    %v2422 = vmul.f32 %v2420, 1.442695
    %v2423 = vpow.pop %v2422
    %v2424 = vmul.f32 %v2421, 1.442695
    %v2425 = vpow.pop %v2424
    %v2426 = vsel %vm210, %v2423, 0.0
    %2427 = vadd.xlane.f32.xlu0 %v2426
    %v2428 = vpop.xlane.xlu0 %2427
    %v2429 = vsel %vm210, %v2425, 0.0
    %2430 = vadd.xlane.f32.xlu0 %v2429
    %v2431 = vpop.xlane.xlu0 %2430
    %v2432 = vrcp.pop %v2428
    %v2433 = vrcp.pop %v2431
    %v2434 = vmul.f32 %v2423, %v2432
    %v2435 = vmul.f32 %v2425, %v2433
    %v2437 = vsel %vm210, %v2434, 0
    %2439 = vmatpush.msra.mxu0 0.0
    %2440 = vmatpush.msra.mxu0 0.0
    %2441 = vmatpush.msra.mxu0 0.0
    %2442 = vmatpush.msra.mxu0 0.0
    %2443 = vmatpush.msra.mxu0 0.0
    %2444 = vmatpush.msra.mxu0 0.0
    %2445 = vmatpush.msra.mxu0 0.0
    %2446 = vmatpush.msra.mxu0 0.0
    %2447 = vmatpush.msra.mxu0 0.0
    %2448 = vmatpush.msra.mxu0 0.0
    %2449 = vmatpush.msra.mxu0 0.0
    %2450 = vmatpush.msra.mxu0 0.0
    %2451 = vmatpush.msra.mxu0 0.0
    %2452 = vmatpush.msra.mxu0 0.0
    %2453 = vmatpush.msra.mxu0 0.0
    %2454 = vmatpush.msra.mxu0 %v2357
    %2455 = vmatmul.f32.gmra.mxu0 %v2437
    %v2456 = vpop.f32.mrf.mxu0
    %v2457 = vadd.f32 0.0, %v2456
    %2458 = vdwg.mxu0
    %v2460 = vsel %vm210, %v2435, 0
    %2462 = vmatpush.msra.mxu0 0.0
    %2463 = vmatpush.msra.mxu0 0.0
    %2464 = vmatpush.msra.mxu0 0.0
    %2465 = vmatpush.msra.mxu0 0.0
    %2466 = vmatpush.msra.mxu0 0.0
    %2467 = vmatpush.msra.mxu0 0.0
    %2468 = vmatpush.msra.mxu0 0.0
    %2469 = vmatpush.msra.mxu0 0.0
    %2470 = vmatpush.msra.mxu0 0.0
    %2471 = vmatpush.msra.mxu0 0.0
    %2472 = vmatpush.msra.mxu0 0.0
    %2473 = vmatpush.msra.mxu0 0.0
    %2474 = vmatpush.msra.mxu0 0.0
    %2475 = vmatpush.msra.mxu0 0.0
    %2476 = vmatpush.msra.mxu0 0.0
    %2477 = vmatpush.msra.mxu0 %v2360
    %2478 = vmatmul.f32.gmra.mxu0 %v2460
    %v2479 = vpop.f32.mrf.mxu0
    %v2480 = vadd.f32 0.0, %v2479
    %2481 = vdwg.mxu0
    %2484 = vrot.lane.b32.xlu0 %v2457, 16
    %v2485 = vpop.permute.xlu0 %2484
    %2486 = vrot.lane.b32.xlu0 %v2480, 16
    %v2487 = vpop.permute.xlu0 %2486
    %v2490 = vsel %vm157, %v2212, %v2485
    %v2491 = vsel %vm157, %v2235, %v2487
    %v2492 = vld [vmem:[%s1398 + $0x20] sm:$0xff]
    %v2493 = vld [vmem:[%s1398 + $0x28] sm:$0xff]
    %v2494 = vld [vmem:[%s1398 + $0x30] sm:$0xff]
    %v2495 = vld [vmem:[%s1398 + $0x38] sm:$0xff]
    %v2496 = vld [vmem:[%s1398 + $0xa1] sm:$0x1]
    %v2497 = vperm.slane %v2496, 0
    %2502 = vrot.lane.b32.xlu0 %v2492, 32
    %v2503 = vpop.permute.xlu0 %2502
    %2504 = vrot.lane.b32.xlu0 %v2493, 32
    %v2505 = vpop.permute.xlu0 %2504
    %2506 = vrot.lane.b32.xlu0 %v2494, 32
    %v2507 = vpop.permute.xlu0 %2506
    %2508 = vrot.lane.b32.xlu0 %v2495, 32
    %v2509 = vpop.permute.xlu0 %2508
    %2515 = vrot.lane.b32.xlu0 %v2497, 32
    %v2516 = vpop.permute.xlu0 %2515
    %v2519 = vsel %vm46, %v2490, 0
    %v2522 = vsel %vm46, %v2491, 0
    %2524 = vmatpush.msra.mxu0 0.0
    %2525 = vmatpush.msra.mxu0 0.0
    %2526 = vmatpush.msra.mxu0 0.0
    %2527 = vmatpush.msra.mxu0 0.0
    %2528 = vmatpush.msra.mxu0 0.0
    %2529 = vmatpush.msra.mxu0 0.0
    %2530 = vmatpush.msra.mxu0 0.0
    %2531 = vmatpush.msra.mxu0 0.0
    %2532 = vmatpush.msra.mxu0 0.0
    %2533 = vmatpush.msra.mxu0 0.0
    %2534 = vmatpush.msra.mxu0 0.0
    %2535 = vmatpush.msra.mxu0 0.0
    %2536 = vmatpush.msra.mxu0 %v2509
    %2537 = vmatpush.msra.mxu0 %v2507
    %2538 = vmatpush.msra.mxu0 %v2505
    %2539 = vmatpush.msra.mxu0 %v2503
    %2540 = vmatmul.f32.gmra.mxu0 %v2519
    %v2541 = vpop.f32.mrf.mxu0
    %v2542 = vadd.f32 %v2516, %v2541
    %2543 = vmatmul.f32.gmra.mxu0 %v2522
    %v2544 = vpop.f32.mrf.mxu0
    %v2545 = vadd.f32 %v2516, %v2544
    %2546 = vdwg.mxu0
    %v2547 = vadd.f32 %v2542, %v1999
    %v2548 = vadd.f32 %v2545, %v2000
    %v2549 = vld [vmem:[%s1398 + $0xa3] sm:$0x1]
    %v2550 = vsel %vm46, %v2547, 0.0
    %2551 = vadd.xlane.f32.xlu0 %v2550
    %v2552 = vpop.xlane.xlu0 %2551
    %v2553 = vsel %vm46, %v2548, 0.0
    %2554 = vadd.xlane.f32.xlu0 %v2553
    %v2555 = vpop.xlane.xlu0 %2554
    %v2556 = vmul.f32 %v2552, %v604
    %v2557 = vmul.f32 %v2555, %v604
    %v2558 = vsub.f32 %v2547, %v2556
    %v2559 = vsub.f32 %v2548, %v2557
    %v2560 = vmul.f32 %v2558, %v2558
    %v2561 = vmul.f32 %v2559, %v2559
    %v2562 = vsel %vm46, %v2560, 0.0
    %2563 = vadd.xlane.f32.xlu0 %v2562
    %v2564 = vpop.xlane.xlu0 %2563
    %v2565 = vsel %vm46, %v2561, 0.0
    %2566 = vadd.xlane.f32.xlu0 %v2565
    %v2567 = vpop.xlane.xlu0 %2566
    %v2568 = vmul.f32 %v2564, %v604
    %v2569 = vmul.f32 %v2567, %v604
    %v2570 = vadd.f32 %v2568, 1e-05
    %v2571 = vadd.f32 %v2569, 1e-05
    %v2572 = vrsqrt.pop %v2570
    %v2573 = vmul.f32 %v2572, %v2570
    %v2574 = vmul.f32 %v2573, %v2572
    %v2575 = vmul.f32 0.5, %v2574
    %v2576 = vsub.f32 1.5, %v2575
    %v2577 = vmul.f32 %v2572, %v2576
    %vm2578 = vweird.f32 %v2570
    %vm2579 = vweird.f32 %v2572
    %vm2580 = vmor %vm2578, %vm2579
    %v2581 = vsel %vm2580, %v2572, %v2577
    %v2582 = vrsqrt.pop %v2571
    %v2583 = vmul.f32 %v2582, %v2571
    %v2584 = vmul.f32 %v2583, %v2582
    %v2585 = vmul.f32 0.5, %v2584
    %v2586 = vsub.f32 1.5, %v2585
    %v2587 = vmul.f32 %v2582, %v2586
    %vm2588 = vweird.f32 %v2571
    %vm2589 = vweird.f32 %v2582
    %vm2590 = vmor %vm2588, %vm2589
    %v2591 = vsel %vm2590, %v2582, %v2587
    %v2592 = vmul.f32 %v2558, %v2581
    %v2593 = vmul.f32 %v2559, %v2591
    %v2594 = vperm.slane %v2549, 0
    %2596 = vrot.lane.b32.xlu0 %v2594, 64
    %v2597 = vpop.permute.xlu0 %2596
    %v2599 = vmul.f32 %v2592, %v2597
    %v2600 = vmul.f32 %v2593, %v2597
    %2601 = vrot.lane.b32.xlu0 %v2594, 32
    %v2602 = vpop.permute.xlu0 %2601
    %v2604 = vadd.f32 %v2599, %v2602
    %v2605 = vadd.f32 %v2600, %v2602
    %v2606 = vld [vmem:[%s1398 + $0x40] sm:$0xff]
    %v2607 = vld [vmem:[%s1398 + $0x48] sm:$0xff]
    %v2608 = vld [vmem:[%s1398 + $0x50] sm:$0xff]
    %v2609 = vld [vmem:[%s1398 + $0x58] sm:$0xff]
    %v2610 = vld [vmem:[%s1398 + $0xa2] sm:$0x1]
    %v2611 = vperm.slane %v2610, 0
    %v2613 = vsel %vm46, %v2604, 0
    %v2616 = vsel %vm46, %v2605, 0
    %2618 = vmatpush.msra.mxu0 0.0
    %2619 = vmatpush.msra.mxu0 0.0
    %2620 = vmatpush.msra.mxu0 0.0
    %2621 = vmatpush.msra.mxu0 0.0
    %2622 = vmatpush.msra.mxu0 0.0
    %2623 = vmatpush.msra.mxu0 0.0
    %2624 = vmatpush.msra.mxu0 0.0
    %2625 = vmatpush.msra.mxu0 0.0
    %2626 = vmatpush.msra.mxu0 0.0
    %2627 = vmatpush.msra.mxu0 0.0
    %2628 = vmatpush.msra.mxu0 0.0
    %2629 = vmatpush.msra.mxu0 0.0
    %2630 = vmatpush.msra.mxu0 %v2609
    %2631 = vmatpush.msra.mxu0 %v2608
    %2632 = vmatpush.msra.mxu0 %v2607
    %2633 = vmatpush.msra.mxu0 %v2606
    %2634 = vmatmul.f32.gmra.mxu0 %v2613
    %v2635 = vpop.f32.mrf.mxu0
    %v2636 = vadd.f32 %v2611, %v2635
    %2637 = vmatmul.f32.gmra.mxu0 %v2616
    %v2638 = vpop.f32.mrf.mxu0
    %v2639 = vadd.f32 %v2611, %v2638
    %2640 = vdwg.mxu0
    %v2641 = vmax.f32 %v2636, 0.0
    %v2642 = vmax.f32 %v2639, 0.0
    %v2643 = vld [vmem:[%s1398 + $0x60] sm:$0xff]
    %v2644 = vld [vmem:[%s1398 + $0x68] sm:$0xff]
    %v2645 = vld [vmem:[%s1398 + $0x70] sm:$0xff]
    %v2646 = vld [vmem:[%s1398 + $0x78] sm:$0xff]
    %v2647 = vld [vmem:[%s1398 + $0x80] sm:$0xff]
    %v2648 = vld [vmem:[%s1398 + $0x88] sm:$0xff]
    %v2649 = vld [vmem:[%s1398 + $0x90] sm:$0xff]
    %v2650 = vld [vmem:[%s1398 + $0x98] sm:$0xff]
    %2652 = vrot.lane.b32.xlu0 %v2611, 64
    %v2653 = vpop.permute.xlu0 %2652
    %v2656 = vsel %vm1312, %v2641, 0
    %v2659 = vsel %vm1312, %v2642, 0
    %2661 = vmatpush.msra.mxu0 0.0
    %2662 = vmatpush.msra.mxu0 0.0
    %2663 = vmatpush.msra.mxu0 0.0
    %2664 = vmatpush.msra.mxu0 0.0
    %2665 = vmatpush.msra.mxu0 0.0
    %2666 = vmatpush.msra.mxu0 0.0
    %2667 = vmatpush.msra.mxu0 0.0
    %2668 = vmatpush.msra.mxu0 0.0
    %2669 = vmatpush.msra.mxu0 %v2650
    %2670 = vmatpush.msra.mxu0 %v2649
    %2671 = vmatpush.msra.mxu0 %v2648
    %2672 = vmatpush.msra.mxu0 %v2647
    %2673 = vmatpush.msra.mxu0 %v2646
    %2674 = vmatpush.msra.mxu0 %v2645
    %2675 = vmatpush.msra.mxu0 %v2644
    %2676 = vmatpush.msra.mxu0 %v2643
    %2677 = vmatmul.f32.gmra.mxu0 %v2656
    %v2678 = vpop.f32.mrf.mxu0
    %v2679 = vadd.f32 %v2653, %v2678
    %2680 = vmatmul.f32.gmra.mxu0 %v2659
    %v2681 = vpop.f32.mrf.mxu0
    %v2682 = vadd.f32 %v2653, %v2681
    %2683 = vdwg.mxu0
    %v2684 = vadd.f32 %v2679, %v2604
    %v2685 = vadd.f32 %v2682, %v2605
    %v2686 = vld [vmem:[%s1398 + $0xa4] sm:$0x1]
    %v2687 = vsel %vm46, %v2684, 0.0
    %2688 = vadd.xlane.f32.xlu0 %v2687
    %v2689 = vpop.xlane.xlu0 %2688
    %v2690 = vsel %vm46, %v2685, 0.0
    %2691 = vadd.xlane.f32.xlu0 %v2690
    %v2692 = vpop.xlane.xlu0 %2691
    %v2693 = vmul.f32 %v2689, %v604
    %v2694 = vmul.f32 %v2692, %v604
    %v2695 = vsub.f32 %v2684, %v2693
    %v2696 = vsub.f32 %v2685, %v2694
    %v2697 = vmul.f32 %v2695, %v2695
    %v2698 = vmul.f32 %v2696, %v2696
    %v2699 = vsel %vm46, %v2697, 0.0
    %2700 = vadd.xlane.f32.xlu0 %v2699
    %v2701 = vpop.xlane.xlu0 %2700
    %v2702 = vsel %vm46, %v2698, 0.0
    %2703 = vadd.xlane.f32.xlu0 %v2702
    %v2704 = vpop.xlane.xlu0 %2703
    %v2705 = vmul.f32 %v2701, %v604
    %v2706 = vmul.f32 %v2704, %v604
    %v2707 = vadd.f32 %v2705, 1e-05
    %v2708 = vadd.f32 %v2706, 1e-05
    %v2709 = vrsqrt.pop %v2707
    %v2710 = vmul.f32 %v2709, %v2707
    %v2711 = vmul.f32 %v2710, %v2709
    %v2712 = vmul.f32 0.5, %v2711
    %v2713 = vsub.f32 1.5, %v2712
    %v2714 = vmul.f32 %v2709, %v2713
    %vm2715 = vweird.f32 %v2707
    %vm2716 = vweird.f32 %v2709
    %vm2717 = vmor %vm2715, %vm2716
    %v2718 = vsel %vm2717, %v2709, %v2714
    %v2719 = vrsqrt.pop %v2708
    %v2720 = vmul.f32 %v2719, %v2708
    %v2721 = vmul.f32 %v2720, %v2719
    %v2722 = vmul.f32 0.5, %v2721
    %v2723 = vsub.f32 1.5, %v2722
    %v2724 = vmul.f32 %v2719, %v2723
    %vm2725 = vweird.f32 %v2708
    %vm2726 = vweird.f32 %v2719
    %vm2727 = vmor %vm2725, %vm2726
    %v2728 = vsel %vm2727, %v2719, %v2724
    %v2729 = vmul.f32 %v2695, %v2718
    %v2730 = vmul.f32 %v2696, %v2728
    %v2731 = vperm.slane %v2686, 0
    %v2732 = vmul.f32 %v2729, %v2731
    %v2733 = vmul.f32 %v2730, %v2731
    %2735 = vrot.lane.b32.xlu0 %v2731, 96
    %v2736 = vpop.permute.xlu0 %2735
    %v2738 = vadd.f32 %v2732, %v2736
    %v2739 = vadd.f32 %v2733, %v2736
    %2740 = vst.msk [vmem:[#allocation5] sm:$0xff] %vm46, %v2738
    %2741 = vst.msk [vmem:[#allocation5 + $0x8] sm:$0xff] %vm46, %v2739
    // Predicated region
    $region18: #{transformer_decoder_forward.1} parent=1 // pred_check
      _
    $region19: #{transformer_decoder_forward.1} parent=1 // pred_check_branch
      %2743 = sbr.rel (0) target = $region21
    $region20: #{transformer_decoder_forward.1} parent=1 // pred_region
      %2745 = vsyncadd [#allocation4], 0
      %s2746 = sshll.u32 [#allocation5], 4
      %s2747 = int_to_ptr.vmem [resolvable:$true] %s2746
      %s2748 = sshll.u32 %s3, 4
      %s2749 = int_to_ptr.hbm [resolvable:$true] %s2748
      %2754 = dma.vmem_to_hbm [thread:$0]  %s2747, 256, %s2749, [#allocation4], 128, 128, 8
    $region21: #{transformer_decoder_forward.1} parent=1 // pred_fallthru
      _
    // Predicated region
    $region22: #{transformer_decoder_forward.1} parent=1 // pred_check
      _
    $region23: #{transformer_decoder_forward.1} parent=1 // pred_check_branch
      %2756 = sbr.rel (0) target = $region25
    $region24: #{transformer_decoder_forward.1} parent=1 // pred_region
      %2758 = dma.done [#allocation4], 256
    $region25: #{transformer_decoder_forward.1} parent=1 // pred_fallthru
      _
    %2759 = vsyncpa [#allocation3], 1
    %2760 = vsyncpa [#allocation4], 1

</llo_original>
